<compile_context>
chip_gen: v7x
topology: tpu7x:2x2x1
jax: 0.10.0
libtpu: 0.0.40
codegen_flags: <defaults>
</compile_context>

<pallas_src>
import functools

import jax
import jax.numpy as jnp
from jax.experimental import pallas as pl
from jax.experimental.pallas import tpu as pltpu


def _round_up(x, m):
    return -(-x // m) * m


def _tpu_config():
    """Generation-aware tiling / VMEM parameters."""
    try:
        kind = jax.devices()[0].device_kind.lower()
    except Exception:
        kind = ""
    if "7x" in kind or "v7" in kind:      # v7x: 64 MiB VMEM/TC, 2 TCs/chip
        return dict(vmem_limit=48 * 1024 * 1024, cout_tiles=(256, 128),
                    col_budget=12 * 1024 * 1024, prefer_two_batch_tiles=True)
    if "v6" in kind:                      # v6e: 128 MiB VMEM, 2x256^2 MXU
        return dict(vmem_limit=100 * 1024 * 1024, cout_tiles=(512, 256, 128),
                    col_budget=24 * 1024 * 1024, prefer_two_batch_tiles=False)
    if "v5" in kind:                      # v5e: 128 MiB VMEM, 4x128^2 MXU, ~0.8 TB/s HBM
        return dict(vmem_limit=96 * 1024 * 1024, cout_tiles=(256, 128),
                    col_budget=16 * 1024 * 1024, prefer_two_batch_tiles=False)
    return dict(vmem_limit=64 * 1024 * 1024, cout_tiles=(256, 128),
                col_budget=16 * 1024 * 1024, prefer_two_batch_tiles=False)


def _conv_kernel(x_ref, w_ref, ss_ref, o_ref, col_ref, *pad_scratch,
                 KH, KW, Ho, Wo, PH, PW, B_TILE, M_PAD):
    """One (batch tile, Cout tile) grid step of im2col conv + fused per-channel affine.

    x_ref:   (B_TILE, Hin, Win, Cin)        input feature maps (f32 or bf16)
    w_ref:   (K, TCout)             bf16    K = KH*KW*Cin, rows ordered (kh, kw, cin)
    ss_ref:  (2, TCout)             f32     row 0 = scale, row 1 = shift (bias/BN folded)
    o_ref:   (B_TILE, Ho*Wo, TCout)         lane-dense flat output slab
    col_ref: (B_TILE*M_PAD, K)      bf16    VMEM im2col scratch (built once per batch tile)
    pad_scratch: optionally one (B_TILE, Hp, Wp, Cin) f32 zero-padded copy of x
    """
    ct = pl.program_id(1)
    HoWo = Ho * Wo
    Hin, Win, Cin = x_ref.shape[1], x_ref.shape[2], x_ref.shape[3]
    pad_rows = M_PAD - HoWo

    # NOTE: the im2col scratch is reused across the Cout-tile grid axis.  This is only
    # correct because that axis is the innermost, sequentially executed ("arbitrary") axis;
    # do not reorder the grid or mark it "parallel" without reworking this gate.
    @pl.when(ct == 0)
    def _build_im2col():
        if PH > 0 or PW > 0:
            # Zero-pad inside VMEM: one zero fill + one interior store (no concat relayouts).
            pad_ref = pad_scratch[0]
            pad_ref[...] = jnp.zeros_like(pad_ref)
            pad_ref[:, PH:PH + Hin, PW:PW + Win, :] = x_ref[...].astype(pad_ref.dtype)
            src = pad_ref
        else:
            src = x_ref
        if pad_rows:
            zpad = jnp.zeros((pad_rows, Cin), col_ref.dtype)   # hoisted out of the tap loop
        for bi in range(B_TILE):                   # static unrolled: per batch element
            r0 = bi * M_PAD                        # 8-aligned row slot per element
            for kh in range(KH):                   # static unrolled tap loop
                for kw in range(KW):
                    c0 = (kh * KW + kw) * Cin
                    rows = src[bi, kh:kh + Ho, kw:kw + Wo, :].reshape(HoWo, Cin)
                    rows = rows.astype(col_ref.dtype)
                    if pad_rows:                   # pad to whole 8-row groups so every store
                        rows = jnp.concatenate([rows, zpad], axis=0)   # covers full words
                    col_ref[r0:r0 + M_PAD, c0:c0 + Cin] = rows

    # One long-M, long-K matmul on the MXU; f32 accumulation; fused bias + BN(eval) affine.
    acc = jnp.dot(col_ref[...], w_ref[...], preferred_element_type=jnp.float32)
    out = acc * ss_ref[0:1, :] + ss_ref[1:2, :]
    for bi in range(B_TILE):
        o_ref[bi] = out[bi * M_PAD:bi * M_PAD + HoWo, :].astype(o_ref.dtype)


def conv2d_affine(x_nhwc, w2, ss, *, KH, KW, pad_h=0, pad_w=0, out_dtype=jnp.bfloat16):
    """Stride-1 (optionally zero-padded) conv + per-channel affine via a Pallas kernel.

    x_nhwc: (N, Hin, Win, Cin);  w2: (KH*KW*Cin, Cout) bf16;  ss: (2, Cout) f32.
    """
    cfg = _tpu_config()
    N, Hin, Win, Cin = x_nhwc.shape
    K, Cout = w2.shape
    assert K == KH * KW * Cin
    Ho = Hin + 2 * pad_h - KH + 1
    Wo = Win + 2 * pad_w - KW + 1
    HoWo = Ho * Wo
    M_PAD = _round_up(HoWo, 8)

    # Cout tiling: prefer MXU-width multiples that divide Cout, else the full (small) Cout.
    cout_tile = Cout
    for t in cfg["cout_tiles"]:
        if Cout % t == 0:
            cout_tile = t
            break
    ct_steps = Cout // cout_tile

    # Batch packing: raise the matmul M dimension towards >=256 rows while keeping the
    # im2col scratch within budget; on multi-TC chips keep >=2 batch tiles when possible.
    b_tile = min(N, max(1, -(-256 // HoWo)))
    while b_tile > 1 and b_tile * M_PAD * K * 2 > cfg["col_budget"]:
        b_tile -= 1
    if cfg["prefer_two_batch_tiles"] and N >= 2:
        b_tile = min(b_tile, max(1, N // 2))
    while N % b_tile:
        b_tile -= 1

    kernel = functools.partial(_conv_kernel, KH=KH, KW=KW, Ho=Ho, Wo=Wo,
                               PH=pad_h, PW=pad_w, B_TILE=b_tile, M_PAD=M_PAD)

    scratch = [pltpu.VMEM((b_tile * M_PAD, K), jnp.bfloat16)]
    if pad_h > 0 or pad_w > 0:
        scratch.append(pltpu.VMEM((b_tile, Hin + 2 * pad_h, Win + 2 * pad_w, Cin),
                                  jnp.float32))

    out_flat = pl.pallas_call(
        kernel,
        out_shape=jax.ShapeDtypeStruct((N, HoWo, Cout), out_dtype),
        grid_spec=pltpu.PrefetchScalarGridSpec(
            num_scalar_prefetch=0,
            # Cout tiles innermost ("arbitrary"): required by the im2col-reuse gate; the
            # weight/x block indices only change when their grid coordinate changes, so the
            # x block is fetched once per batch tile and weights once per (batch tile, c).
            grid=(N // b_tile, ct_steps),
            in_specs=[
                pl.BlockSpec((b_tile, Hin, Win, Cin), lambda n, c: (n, 0, 0, 0)),
                pl.BlockSpec((K, cout_tile), lambda n, c: (0, c)),
                pl.BlockSpec((2, cout_tile), lambda n, c: (0, c)),
            ],
            out_specs=pl.BlockSpec((b_tile, HoWo, cout_tile), lambda n, c: (n, 0, c)),
            scratch_shapes=scratch,
        ),
        compiler_params=pltpu.CompilerParams(
            dimension_semantics=("parallel", "arbitrary"),
            vmem_limit_bytes=cfg["vmem_limit"],
        ),
    )(x_nhwc, w2, ss)
    return out_flat.reshape(N, Ho, Wo, Cout)


def prepare_tfblock_params(params, eps=1e-5):
    """One-time weight reshape/cast to bf16 + BN/bias folding (out of the per-call path)."""
    def conv_w(w_oihw):                                    # Conv2d weight (Cout,Cin,KH,KW)
        kh, kw = w_oihw.shape[2], w_oihw.shape[3]
        w = jnp.transpose(w_oihw, (2, 3, 1, 0))            # -> (KH,KW,Cin,Cout)
        return w.reshape(kh * kw * w.shape[2], w.shape[3]).astype(jnp.bfloat16)

    def convT_w(w_iohw):                                   # ConvTranspose2d (Cin,Cout,KH,KW)
        kh, kw = w_iohw.shape[2], w_iohw.shape[3]
        # stride-1, pad-0 ConvTranspose == full-padded conv with spatially flipped kernel.
        w = jnp.transpose(jnp.flip(w_iohw, axis=(2, 3)), (2, 3, 0, 1))   # (KH,KW,Cin,Cout)
        return w.reshape(kh * kw * w.shape[2], w.shape[3]).astype(jnp.bfloat16)

    inv_std = 1.0 / jnp.sqrt(params["bn_var"] + eps)
    scale = params["bn_gamma"] * inv_std
    # BN(conv + b) = conv*scale + ((b - mean)*scale + beta)  -> bias folded into the shift.
    shift = params["bn_beta"] + (params["enc_b"] - params["bn_mean"]) * scale
    ones = lambda c: jnp.ones((c,), jnp.float32)
    return dict(
        enc_w=conv_w(params["enc_w"]),
        enc_ss=jnp.stack([scale, shift]).astype(jnp.float32),
        enc_khkw=(params["enc_w"].shape[2], params["enc_w"].shape[3]),
        dec_w=convT_w(params["dec_w"]),
        dec_ss=jnp.stack([ones(params["dec_b"].shape[0]),
                          params["dec_b"].astype(jnp.float32)]),
        dec_khkw=(params["dec_w"].shape[2], params["dec_w"].shape[3]),
        dec1_w=convT_w(params["dec1_w"]),
        dec1_ss=jnp.stack([ones(params["dec1_b"].shape[0]),
                           params["dec1_b"].astype(jnp.float32)]),
        dec1_khkw=(params["dec1_w"].shape[2], params["dec1_w"].shape[3]),
    )


def tfblock_v4_forward(x_nchw, prepared):
    """encoder Conv2d + BN(eval) -> decoder ConvTranspose2d -> decoder1 ConvTranspose2d."""
    # TODO(synk): the three convs could be fused into one pallas_call with VMEM-resident
    # intermediates to remove two HBM round trips; kept as three calls for robustness.
    x = jnp.transpose(x_nchw, (0, 2, 3, 1)).astype(jnp.float32)        # NCHW -> NHWC
    kh, kw = prepared["enc_khkw"]
    x = conv2d_affine(x, prepared["enc_w"], prepared["enc_ss"], KH=kh, KW=kw,
                      out_dtype=jnp.bfloat16)                          # conv + fused BN/bias
    kh, kw = prepared["dec_khkw"]
    x = conv2d_affine(x, prepared["dec_w"], prepared["dec_ss"], KH=kh, KW=kw,
                      pad_h=kh - 1, pad_w=kw - 1, out_dtype=jnp.bfloat16)
    kh, kw = prepared["dec1_khkw"]
    x = conv2d_affine(x, prepared["dec1_w"], prepared["dec1_ss"], KH=kh, KW=kw,
                      pad_h=kh - 1, pad_w=kw - 1, out_dtype=jnp.float32)
    return jnp.transpose(x, (0, 3, 1, 2))                              # NHWC -> NCHW


def _ref_forward(x_nchw, params, eps=1e-5):
    """Pure-JAX f32 reference (XLA convs) for correctness checking."""
    dn = ("NHWC", "HWIO", "NHWC")
    x = jnp.transpose(x_nchw, (0, 2, 3, 1))
    we = jnp.transpose(params["enc_w"], (2, 3, 1, 0))
    x = jax.lax.conv_general_dilated(x, we, (1, 1), "VALID",
                                     dimension_numbers=dn) + params["enc_b"]
    inv_std = 1.0 / jnp.sqrt(params["bn_var"] + eps)
    x = (x - params["bn_mean"]) * inv_std * params["bn_gamma"] + params["bn_beta"]
    for wt, b in ((params["dec_w"], params["dec_b"]), (params["dec1_w"], params["dec1_b"])):
        KH, KW = wt.shape[2], wt.shape[3]
        w = jnp.transpose(jnp.flip(wt, axis=(2, 3)), (2, 3, 0, 1))
        x = jax.lax.conv_general_dilated(
            x, w, (1, 1), [(KH - 1, KH - 1), (KW - 1, KW - 1)],
            dimension_numbers=dn) + b
    return jnp.transpose(x, (0, 3, 1, 2))


if __name__ == "__main__":
    # Small shapes consistent with the module (dim_in=8, dim_inter=16 instead of 512/1024).
    dim_in, dim_inter = 8, 16
    dim_mid = (dim_in + dim_inter) // 2
    N, H, W = 2, 8, 6

    ks = jax.random.split(jax.random.PRNGKey(0), 11)
    params = dict(
        enc_w=0.05 * jax.random.normal(ks[0], (dim_inter, dim_in, 4, 2), jnp.float32),
        enc_b=0.05 * jax.random.normal(ks[1], (dim_inter,), jnp.float32),
        bn_gamma=1.0 + 0.1 * jax.random.normal(ks[2], (dim_inter,), jnp.float32),
        bn_beta=0.05 * jax.random.normal(ks[3], (dim_inter,), jnp.float32),
        bn_mean=0.05 * jax.random.normal(ks[4], (dim_inter,), jnp.float32),
        bn_var=1.0 + 0.5 * jax.random.uniform(ks[5], (dim_inter,), jnp.float32),
        dec_w=0.05 * jax.random.normal(ks[6], (dim_inter, dim_mid, 3, 3), jnp.float32),
        dec_b=0.05 * jax.random.normal(ks[7], (dim_mid,), jnp.float32),
        dec1_w=0.05 * jax.random.normal(ks[8], (dim_mid, dim_in, 5, 5), jnp.float32),
        dec1_b=0.05 * jax.random.normal(ks[9], (dim_in,), jnp.float32),
    )
    x = jax.random.normal(ks[10], (N, dim_in, H, W), jnp.float32)      # NCHW, like PyTorch

    prepared = prepare_tfblock_params(params)
    out = jax.block_until_ready(tfblock_v4_forward(x, prepared))
    ref = jax.block_until_ready(_ref_forward(x, params))

    # encoder: (H-3, W-1) = (5,5); decoder: +2 -> (7,7); decoder1: +4 -> (11,11)
    assert out.shape == (N, dim_in, 11, 11), out.shape
    # bf16 weights / im2col / intermediates (f32 accumulation) vs a pure-f32 reference.
    max_err = float(jnp.max(jnp.abs(out - ref)))
    assert max_err < 2e-2, max_err
    print("KERNEL_OK")
</pallas_src>

<mosaic_0001>
module attributes {stable_mosaic.version = 11 : i64} {
  func.func @_conv_kernel(%arg0: i32, %arg1: i32, %arg2: memref<2x8x6x8xf32, #tpu.memory_space<vmem>>, %arg3: memref<64x16xbf16, #tpu.memory_space<vmem>>, %arg4: memref<2x16xf32, #tpu.memory_space<vmem>>, %arg5: memref<2x25x16xbf16, #tpu.memory_space<vmem>>, %arg6: memref<64x64xbf16, #tpu.memory_space<vmem>>) attributes {dimension_semantics = [#tpu.dimension_semantics<parallel>, #tpu.dimension_semantics<arbitrary>], iteration_bounds = array<i64: 1, 1>, scalar_prefetch = 0 : i64, scratch_operands = 1 : i64, tpu.core_type = #tpu.core_type<tc>, window_params = [{transform_indices = @transform_0, window_bounds = array<i64: 2, 8, 6, 8>}, {transform_indices = @transform_1, window_bounds = array<i64: 64, 16>}, {transform_indices = @transform_2, window_bounds = array<i64: 2, 16>}, {transform_indices = @transform_3, window_bounds = array<i64: 2, 25, 16>}]} {
    %c0_i32 = arith.constant 0 : i32
    %0 = arith.cmpi eq, %arg1, %c0_i32 : i32
    %1 = arith.extui %0 : i1 to i32
    %c0_i32_0 = arith.constant 0 : i32
    %2 = arith.cmpi ne, %1, %c0_i32_0 : i32
    scf.if %2 {
      %cst_13 = arith.constant 0.000000e+00 : bf16
      %22 = vector.broadcast %cst_13 : bf16 to vector<7x8xbf16>
      %c0_14 = arith.constant 0 : index
      %c0_15 = arith.constant 0 : index
      %c0_16 = arith.constant 0 : index
      %c0_17 = arith.constant 0 : index
      %23 = vector.load %arg2[%c0_14, %c0_15, %c0_16, %c0_17] : memref<2x8x6x8xf32, #tpu.memory_space<vmem>>, vector<1x5x5x8xf32>
      %24 = vector.shape_cast %23 : vector<1x5x5x8xf32> to vector<5x5x8xf32>
      %25 = vector.shape_cast %24 : vector<5x5x8xf32> to vector<25x8xf32>
      %26 = arith.truncf %25 : vector<25x8xf32> to vector<25x8xbf16>
      %27 = tpu.concatenate %26, %22 in 0 : vector<25x8xbf16>, vector<7x8xbf16> -> vector<32x8xbf16>
      %c0_18 = arith.constant 0 : index
      %c0_19 = arith.constant 0 : index
      %28 = vector.load %arg6[%c0_18, %c0_19] : memref<64x64xbf16, #tpu.memory_space<vmem>>, vector<32x8xbf16>
      tpu.vector_store %arg6[%c0_18, %c0_19], %27 {strides = array<i32>} : memref<64x64xbf16, #tpu.memory_space<vmem>>, vector<32x8xbf16>,
      %c0_20 = arith.constant 0 : index
      %c0_21 = arith.constant 0 : index
      %c1_22 = arith.constant 1 : index
      %c0_23 = arith.constant 0 : index
      %29 = vector.load %arg2[%c0_20, %c0_21, %c1_22, %c0_23] : memref<2x8x6x8xf32, #tpu.memory_space<vmem>>, vector<1x5x5x8xf32>
      %30 = vector.shape_cast %29 : vector<1x5x5x8xf32> to vector<5x5x8xf32>
      %31 = vector.shape_cast %30 : vector<5x5x8xf32> to vector<25x8xf32>
      %32 = arith.truncf %31 : vector<25x8xf32> to vector<25x8xbf16>
      %33 = tpu.concatenate %32, %22 in 0 : vector<25x8xbf16>, vector<7x8xbf16> -> vector<32x8xbf16>
      %c0_24 = arith.constant 0 : index
      %c8 = arith.constant 8 : index
      %34 = vector.load %arg6[%c0_24, %c8] : memref<64x64xbf16, #tpu.memory_space<vmem>>, vector<32x8xbf16>
      tpu.vector_store %arg6[%c0_24, %c8], %33 {strides = array<i32>} : memref<64x64xbf16, #tpu.memory_space<vmem>>, vector<32x8xbf16>,
      %c0_25 = arith.constant 0 : index
      %c1_26 = arith.constant 1 : index
      %c0_27 = arith.constant 0 : index
      %c0_28 = arith.constant 0 : index
      %35 = vector.load %arg2[%c0_25, %c1_26, %c0_27, %c0_28] : memref<2x8x6x8xf32, #tpu.memory_space<vmem>>, vector<1x5x5x8xf32>
      %36 = vector.shape_cast %35 : vector<1x5x5x8xf32> to vector<5x5x8xf32>
      %37 = vector.shape_cast %36 : vector<5x5x8xf32> to vector<25x8xf32>
      %38 = arith.truncf %37 : vector<25x8xf32> to vector<25x8xbf16>
      %39 = tpu.concatenate %38, %22 in 0 : vector<25x8xbf16>, vector<7x8xbf16> -> vector<32x8xbf16>
      %c0_29 = arith.constant 0 : index
      %c16 = arith.constant 16 : index
      %40 = vector.load %arg6[%c0_29, %c16] : memref<64x64xbf16, #tpu.memory_space<vmem>>, vector<32x8xbf16>
      tpu.vector_store %arg6[%c0_29, %c16], %39 {strides = array<i32>} : memref<64x64xbf16, #tpu.memory_space<vmem>>, vector<32x8xbf16>,
      %c0_30 = arith.constant 0 : index
      %c1_31 = arith.constant 1 : index
      %c1_32 = arith.constant 1 : index
      %c0_33 = arith.constant 0 : index
      %41 = vector.load %arg2[%c0_30, %c1_31, %c1_32, %c0_33] : memref<2x8x6x8xf32, #tpu.memory_space<vmem>>, vector<1x5x5x8xf32>
      %42 = vector.shape_cast %41 : vector<1x5x5x8xf32> to vector<5x5x8xf32>
      %43 = vector.shape_cast %42 : vector<5x5x8xf32> to vector<25x8xf32>
      %44 = arith.truncf %43 : vector<25x8xf32> to vector<25x8xbf16>
      %45 = tpu.concatenate %44, %22 in 0 : vector<25x8xbf16>, vector<7x8xbf16> -> vector<32x8xbf16>
      %c0_34 = arith.constant 0 : index
      %c24 = arith.constant 24 : index
      %46 = vector.load %arg6[%c0_34, %c24] : memref<64x64xbf16, #tpu.memory_space<vmem>>, vector<32x8xbf16>
      tpu.vector_store %arg6[%c0_34, %c24], %45 {strides = array<i32>} : memref<64x64xbf16, #tpu.memory_space<vmem>>, vector<32x8xbf16>,
      %c0_35 = arith.constant 0 : index
      %c2 = arith.constant 2 : index
      %c0_36 = arith.constant 0 : index
      %c0_37 = arith.constant 0 : index
      %47 = vector.load %arg2[%c0_35, %c2, %c0_36, %c0_37] : memref<2x8x6x8xf32, #tpu.memory_space<vmem>>, vector<1x5x5x8xf32>
      %48 = vector.shape_cast %47 : vector<1x5x5x8xf32> to vector<5x5x8xf32>
      %49 = vector.shape_cast %48 : vector<5x5x8xf32> to vector<25x8xf32>
      %50 = arith.truncf %49 : vector<25x8xf32> to vector<25x8xbf16>
      %51 = tpu.concatenate %50, %22 in 0 : vector<25x8xbf16>, vector<7x8xbf16> -> vector<32x8xbf16>
      %c0_38 = arith.constant 0 : index
      %c32 = arith.constant 32 : index
      %52 = vector.load %arg6[%c0_38, %c32] : memref<64x64xbf16, #tpu.memory_space<vmem>>, vector<32x8xbf16>
      tpu.vector_store %arg6[%c0_38, %c32], %51 {strides = array<i32>} : memref<64x64xbf16, #tpu.memory_space<vmem>>, vector<32x8xbf16>,
      %c0_39 = arith.constant 0 : index
      %c2_40 = arith.constant 2 : index
      %c1_41 = arith.constant 1 : index
      %c0_42 = arith.constant 0 : index
      %53 = vector.load %arg2[%c0_39, %c2_40, %c1_41, %c0_42] : memref<2x8x6x8xf32, #tpu.memory_space<vmem>>, vector<1x5x5x8xf32>
      %54 = vector.shape_cast %53 : vector<1x5x5x8xf32> to vector<5x5x8xf32>
      %55 = vector.shape_cast %54 : vector<5x5x8xf32> to vector<25x8xf32>
      %56 = arith.truncf %55 : vector<25x8xf32> to vector<25x8xbf16>
      %57 = tpu.concatenate %56, %22 in 0 : vector<25x8xbf16>, vector<7x8xbf16> -> vector<32x8xbf16>
      %c0_43 = arith.constant 0 : index
      %c40 = arith.constant 40 : index
      %58 = vector.load %arg6[%c0_43, %c40] : memref<64x64xbf16, #tpu.memory_space<vmem>>, vector<32x8xbf16>
      tpu.vector_store %arg6[%c0_43, %c40], %57 {strides = array<i32>} : memref<64x64xbf16, #tpu.memory_space<vmem>>, vector<32x8xbf16>,
      %c0_44 = arith.constant 0 : index
      %c3 = arith.constant 3 : index
      %c0_45 = arith.constant 0 : index
      %c0_46 = arith.constant 0 : index
      %59 = vector.load %arg2[%c0_44, %c3, %c0_45, %c0_46] : memref<2x8x6x8xf32, #tpu.memory_space<vmem>>, vector<1x5x5x8xf32>
      %60 = vector.shape_cast %59 : vector<1x5x5x8xf32> to vector<5x5x8xf32>
      %61 = vector.shape_cast %60 : vector<5x5x8xf32> to vector<25x8xf32>
      %62 = arith.truncf %61 : vector<25x8xf32> to vector<25x8xbf16>
      %63 = tpu.concatenate %62, %22 in 0 : vector<25x8xbf16>, vector<7x8xbf16> -> vector<32x8xbf16>
      %c0_47 = arith.constant 0 : index
      %c48 = arith.constant 48 : index
      %64 = vector.load %arg6[%c0_47, %c48] : memref<64x64xbf16, #tpu.memory_space<vmem>>, vector<32x8xbf16>
      tpu.vector_store %arg6[%c0_47, %c48], %63 {strides = array<i32>} : memref<64x64xbf16, #tpu.memory_space<vmem>>, vector<32x8xbf16>,
      %c0_48 = arith.constant 0 : index
      %c3_49 = arith.constant 3 : index
      %c1_50 = arith.constant 1 : index
      %c0_51 = arith.constant 0 : index
      %65 = vector.load %arg2[%c0_48, %c3_49, %c1_50, %c0_51] : memref<2x8x6x8xf32, #tpu.memory_space<vmem>>, vector<1x5x5x8xf32>
      %66 = vector.shape_cast %65 : vector<1x5x5x8xf32> to vector<5x5x8xf32>
      %67 = vector.shape_cast %66 : vector<5x5x8xf32> to vector<25x8xf32>
      %68 = arith.truncf %67 : vector<25x8xf32> to vector<25x8xbf16>
      %69 = tpu.concatenate %68, %22 in 0 : vector<25x8xbf16>, vector<7x8xbf16> -> vector<32x8xbf16>
      %c0_52 = arith.constant 0 : index
      %c56 = arith.constant 56 : index
      %70 = vector.load %arg6[%c0_52, %c56] : memref<64x64xbf16, #tpu.memory_space<vmem>>, vector<32x8xbf16>
      tpu.vector_store %arg6[%c0_52, %c56], %69 {strides = array<i32>} : memref<64x64xbf16, #tpu.memory_space<vmem>>, vector<32x8xbf16>,
      %c1_53 = arith.constant 1 : index
      %c0_54 = arith.constant 0 : index
      %c0_55 = arith.constant 0 : index
      %c0_56 = arith.constant 0 : index
      %71 = vector.load %arg2[%c1_53, %c0_54, %c0_55, %c0_56] : memref<2x8x6x8xf32, #tpu.memory_space<vmem>>, vector<1x5x5x8xf32>
      %72 = vector.shape_cast %71 : vector<1x5x5x8xf32> to vector<5x5x8xf32>
      %73 = vector.shape_cast %72 : vector<5x5x8xf32> to vector<25x8xf32>
      %74 = arith.truncf %73 : vector<25x8xf32> to vector<25x8xbf16>
      %75 = tpu.concatenate %74, %22 in 0 : vector<25x8xbf16>, vector<7x8xbf16> -> vector<32x8xbf16>
      %c32_57 = arith.constant 32 : index
      %c0_58 = arith.constant 0 : index
      %76 = vector.load %arg6[%c32_57, %c0_58] : memref<64x64xbf16, #tpu.memory_space<vmem>>, vector<32x8xbf16>
      tpu.vector_store %arg6[%c32_57, %c0_58], %75 {strides = array<i32>} : memref<64x64xbf16, #tpu.memory_space<vmem>>, vector<32x8xbf16>,
      %c1_59 = arith.constant 1 : index
      %c0_60 = arith.constant 0 : index
      %c1_61 = arith.constant 1 : index
      %c0_62 = arith.constant 0 : index
      %77 = vector.load %arg2[%c1_59, %c0_60, %c1_61, %c0_62] : memref<2x8x6x8xf32, #tpu.memory_space<vmem>>, vector<1x5x5x8xf32>
      %78 = vector.shape_cast %77 : vector<1x5x5x8xf32> to vector<5x5x8xf32>
      %79 = vector.shape_cast %78 : vector<5x5x8xf32> to vector<25x8xf32>
      %80 = arith.truncf %79 : vector<25x8xf32> to vector<25x8xbf16>
      %81 = tpu.concatenate %80, %22 in 0 : vector<25x8xbf16>, vector<7x8xbf16> -> vector<32x8xbf16>
      %c32_63 = arith.constant 32 : index
      %c8_64 = arith.constant 8 : index
      %82 = vector.load %arg6[%c32_63, %c8_64] : memref<64x64xbf16, #tpu.memory_space<vmem>>, vector<32x8xbf16>
      tpu.vector_store %arg6[%c32_63, %c8_64], %81 {strides = array<i32>} : memref<64x64xbf16, #tpu.memory_space<vmem>>, vector<32x8xbf16>,
      %c1_65 = arith.constant 1 : index
      %c1_66 = arith.constant 1 : index
      %c0_67 = arith.constant 0 : index
      %c0_68 = arith.constant 0 : index
      %83 = vector.load %arg2[%c1_65, %c1_66, %c0_67, %c0_68] : memref<2x8x6x8xf32, #tpu.memory_space<vmem>>, vector<1x5x5x8xf32>
      %84 = vector.shape_cast %83 : vector<1x5x5x8xf32> to vector<5x5x8xf32>
      %85 = vector.shape_cast %84 : vector<5x5x8xf32> to vector<25x8xf32>
      %86 = arith.truncf %85 : vector<25x8xf32> to vector<25x8xbf16>
      %87 = tpu.concatenate %86, %22 in 0 : vector<25x8xbf16>, vector<7x8xbf16> -> vector<32x8xbf16>
      %c32_69 = arith.constant 32 : index
      %c16_70 = arith.constant 16 : index
      %88 = vector.load %arg6[%c32_69, %c16_70] : memref<64x64xbf16, #tpu.memory_space<vmem>>, vector<32x8xbf16>
      tpu.vector_store %arg6[%c32_69, %c16_70], %87 {strides = array<i32>} : memref<64x64xbf16, #tpu.memory_space<vmem>>, vector<32x8xbf16>,
      %c1_71 = arith.constant 1 : index
      %c1_72 = arith.constant 1 : index
      %c1_73 = arith.constant 1 : index
      %c0_74 = arith.constant 0 : index
      %89 = vector.load %arg2[%c1_71, %c1_72, %c1_73, %c0_74] : memref<2x8x6x8xf32, #tpu.memory_space<vmem>>, vector<1x5x5x8xf32>
      %90 = vector.shape_cast %89 : vector<1x5x5x8xf32> to vector<5x5x8xf32>
      %91 = vector.shape_cast %90 : vector<5x5x8xf32> to vector<25x8xf32>
      %92 = arith.truncf %91 : vector<25x8xf32> to vector<25x8xbf16>
      %93 = tpu.concatenate %92, %22 in 0 : vector<25x8xbf16>, vector<7x8xbf16> -> vector<32x8xbf16>
      %c32_75 = arith.constant 32 : index
      %c24_76 = arith.constant 24 : index
      %94 = vector.load %arg6[%c32_75, %c24_76] : memref<64x64xbf16, #tpu.memory_space<vmem>>, vector<32x8xbf16>
      tpu.vector_store %arg6[%c32_75, %c24_76], %93 {strides = array<i32>} : memref<64x64xbf16, #tpu.memory_space<vmem>>, vector<32x8xbf16>,
      %c1_77 = arith.constant 1 : index
      %c2_78 = arith.constant 2 : index
      %c0_79 = arith.constant 0 : index
      %c0_80 = arith.constant 0 : index
      %95 = vector.load %arg2[%c1_77, %c2_78, %c0_79, %c0_80] : memref<2x8x6x8xf32, #tpu.memory_space<vmem>>, vector<1x5x5x8xf32>
      %96 = vector.shape_cast %95 : vector<1x5x5x8xf32> to vector<5x5x8xf32>
      %97 = vector.shape_cast %96 : vector<5x5x8xf32> to vector<25x8xf32>
      %98 = arith.truncf %97 : vector<25x8xf32> to vector<25x8xbf16>
      %99 = tpu.concatenate %98, %22 in 0 : vector<25x8xbf16>, vector<7x8xbf16> -> vector<32x8xbf16>
      %c32_81 = arith.constant 32 : index
      %c32_82 = arith.constant 32 : index
      %100 = vector.load %arg6[%c32_81, %c32_82] : memref<64x64xbf16, #tpu.memory_space<vmem>>, vector<32x8xbf16>
      tpu.vector_store %arg6[%c32_81, %c32_82], %99 {strides = array<i32>} : memref<64x64xbf16, #tpu.memory_space<vmem>>, vector<32x8xbf16>,
      %c1_83 = arith.constant 1 : index
      %c2_84 = arith.constant 2 : index
      %c1_85 = arith.constant 1 : index
      %c0_86 = arith.constant 0 : index
      %101 = vector.load %arg2[%c1_83, %c2_84, %c1_85, %c0_86] : memref<2x8x6x8xf32, #tpu.memory_space<vmem>>, vector<1x5x5x8xf32>
      %102 = vector.shape_cast %101 : vector<1x5x5x8xf32> to vector<5x5x8xf32>
      %103 = vector.shape_cast %102 : vector<5x5x8xf32> to vector<25x8xf32>
      %104 = arith.truncf %103 : vector<25x8xf32> to vector<25x8xbf16>
      %105 = tpu.concatenate %104, %22 in 0 : vector<25x8xbf16>, vector<7x8xbf16> -> vector<32x8xbf16>
      %c32_87 = arith.constant 32 : index
      %c40_88 = arith.constant 40 : index
      %106 = vector.load %arg6[%c32_87, %c40_88] : memref<64x64xbf16, #tpu.memory_space<vmem>>, vector<32x8xbf16>
      tpu.vector_store %arg6[%c32_87, %c40_88], %105 {strides = array<i32>} : memref<64x64xbf16, #tpu.memory_space<vmem>>, vector<32x8xbf16>,
      %c1_89 = arith.constant 1 : index
      %c3_90 = arith.constant 3 : index
      %c0_91 = arith.constant 0 : index
      %c0_92 = arith.constant 0 : index
      %107 = vector.load %arg2[%c1_89, %c3_90, %c0_91, %c0_92] : memref<2x8x6x8xf32, #tpu.memory_space<vmem>>, vector<1x5x5x8xf32>
      %108 = vector.shape_cast %107 : vector<1x5x5x8xf32> to vector<5x5x8xf32>
      %109 = vector.shape_cast %108 : vector<5x5x8xf32> to vector<25x8xf32>
      %110 = arith.truncf %109 : vector<25x8xf32> to vector<25x8xbf16>
      %111 = tpu.concatenate %110, %22 in 0 : vector<25x8xbf16>, vector<7x8xbf16> -> vector<32x8xbf16>
      %c32_93 = arith.constant 32 : index
      %c48_94 = arith.constant 48 : index
      %112 = vector.load %arg6[%c32_93, %c48_94] : memref<64x64xbf16, #tpu.memory_space<vmem>>, vector<32x8xbf16>
      tpu.vector_store %arg6[%c32_93, %c48_94], %111 {strides = array<i32>} : memref<64x64xbf16, #tpu.memory_space<vmem>>, vector<32x8xbf16>,
      %c1_95 = arith.constant 1 : index
      %c3_96 = arith.constant 3 : index
      %c1_97 = arith.constant 1 : index
      %c0_98 = arith.constant 0 : index
      %113 = vector.load %arg2[%c1_95, %c3_96, %c1_97, %c0_98] : memref<2x8x6x8xf32, #tpu.memory_space<vmem>>, vector<1x5x5x8xf32>
      %114 = vector.shape_cast %113 : vector<1x5x5x8xf32> to vector<5x5x8xf32>
      %115 = vector.shape_cast %114 : vector<5x5x8xf32> to vector<25x8xf32>
      %116 = arith.truncf %115 : vector<25x8xf32> to vector<25x8xbf16>
      %117 = tpu.concatenate %116, %22 in 0 : vector<25x8xbf16>, vector<7x8xbf16> -> vector<32x8xbf16>
      %c32_99 = arith.constant 32 : index
      %c56_100 = arith.constant 56 : index
      %118 = vector.load %arg6[%c32_99, %c56_100] : memref<64x64xbf16, #tpu.memory_space<vmem>>, vector<32x8xbf16>
      tpu.vector_store %arg6[%c32_99, %c56_100], %117 {strides = array<i32>} : memref<64x64xbf16, #tpu.memory_space<vmem>>, vector<32x8xbf16>,
    } else {
    }
    %c0 = arith.constant 0 : index
    %c0_1 = arith.constant 0 : index
    %3 = vector.load %arg6[%c0, %c0_1] : memref<64x64xbf16, #tpu.memory_space<vmem>>, vector<64x64xbf16>
    %c0_2 = arith.constant 0 : index
    %c0_3 = arith.constant 0 : index
    %4 = vector.load %arg3[%c0_2, %c0_3] : memref<64x16xbf16, #tpu.memory_space<vmem>>, vector<64x16xbf16>
    %cst = arith.constant dense<0.000000e+00> : vector<64x16xf32>
    %5 = tpu.matmul %3, %4, %cst {dimension_numbers = #tpu.dot_dimension_numbers<[1], [0], [0], [1], [0, 0, 1, 1], [], []>} : vector<64x64xbf16>, vector<64x16xbf16>, vector<64x16xf32> -> vector<64x16xf32>
    %c0_4 = arith.constant 0 : index
    %c0_5 = arith.constant 0 : index
    %6 = vector.load %arg4[%c0_4, %c0_5] : memref<2x16xf32, #tpu.memory_space<vmem>>, vector<1x16xf32>
    %7 = vector.broadcast %6 : vector<1x16xf32> to vector<64x16xf32>
    %8 = arith.mulf %5, %7 : vector<64x16xf32>
    %c1 = arith.constant 1 : index
    %c0_6 = arith.constant 0 : index
    %9 = vector.load %arg4[%c1, %c0_6] : memref<2x16xf32, #tpu.memory_space<vmem>>, vector<1x16xf32>
    %10 = vector.broadcast %9 : vector<1x16xf32> to vector<64x16xf32>
    %11 = arith.addf %8, %10 : vector<64x16xf32>
    %12 = vector.extract_strided_slice %11 {offsets = [0, 0], sizes = [25, 16], strides = [1, 1]} : vector<64x16xf32> to vector<25x16xf32>
    %13 = arith.truncf %12 : vector<25x16xf32> to vector<25x16xbf16>
    %c0_7 = arith.constant 0 : index
    %c0_8 = arith.constant 0 : index
    %c0_9 = arith.constant 0 : index
    %14 = vector.load %arg5[%c0_7, %c0_8, %c0_9] : memref<2x25x16xbf16, #tpu.memory_space<vmem>>, vector<1x25x16xbf16>
    %15 = vector.shape_cast %14 : vector<1x25x16xbf16> to vector<25x16xbf16>
    %16 = vector.shape_cast %13 : vector<25x16xbf16> to vector<1x25x16xbf16>
    tpu.vector_store %arg5[%c0_7, %c0_8, %c0_9], %16 {strides = array<i32>} : memref<2x25x16xbf16, #tpu.memory_space<vmem>>, vector<1x25x16xbf16>,
    %17 = vector.extract_strided_slice %11 {offsets = [32, 0], sizes = [25, 16], strides = [1, 1]} : vector<64x16xf32> to vector<25x16xf32>
    %18 = arith.truncf %17 : vector<25x16xf32> to vector<25x16xbf16>
    %c1_10 = arith.constant 1 : index
    %c0_11 = arith.constant 0 : index
    %c0_12 = arith.constant 0 : index
    %19 = vector.load %arg5[%c1_10, %c0_11, %c0_12] : memref<2x25x16xbf16, #tpu.memory_space<vmem>>, vector<1x25x16xbf16>
    %20 = vector.shape_cast %19 : vector<1x25x16xbf16> to vector<25x16xbf16>
    %21 = vector.shape_cast %18 : vector<25x16xbf16> to vector<1x25x16xbf16>
    tpu.vector_store %arg5[%c1_10, %c0_11, %c0_12], %21 {strides = array<i32>} : memref<2x25x16xbf16, #tpu.memory_space<vmem>>, vector<1x25x16xbf16>,
    return
  }
  func.func @transform_0(%arg0: i32, %arg1: i32) -> (i32, i32, i32, i32) {
    %c0_i32 = arith.constant 0 : i32
    %c0_i32_0 = arith.constant 0 : i32
    %c0_i32_1 = arith.constant 0 : i32
    %c0_i32_2 = arith.constant 0 : i32
    return %arg0, %c0_i32, %c0_i32_0, %c0_i32_1 : i32, i32, i32, i32
  }
  func.func @transform_1(%arg0: i32, %arg1: i32) -> (i32, i32) {
    %c0_i32 = arith.constant 0 : i32
    %c0_i32_0 = arith.constant 0 : i32
    return %c0_i32, %arg1 : i32, i32
  }
  func.func @transform_2(%arg0: i32, %arg1: i32) -> (i32, i32) {
    %c0_i32 = arith.constant 0 : i32
    %c0_i32_0 = arith.constant 0 : i32
    return %c0_i32, %arg1 : i32, i32
  }
  func.func @transform_3(%arg0: i32, %arg1: i32) -> (i32, i32, i32) {
    %c0_i32 = arith.constant 0 : i32
    %c0_i32_0 = arith.constant 0 : i32
    return %arg0, %c0_i32, %arg1 : i32, i32, i32
  }
}

</mosaic_0001>

<llo_original>
// kernel: tpu_custom_call.1
$region0: #{tpu_custom_call.1}
  #allocation0 [shape = 'u32[]', space=smem, size = 0x4, offset = 0x4, fixed_abs, tag = 'smem constant byte address 0x4 - core index']
  #allocation1 [shape = 'u32[144,128]{1,0:T(1,128)}', space=vmem, size = 0x12000, scoped, tag = 'internal scratch']
  #allocation2 [shape = 'bf16[64,64]{1,0:T(16,128)(2,1)}', space=vmem, size = 0x4000, scoped, tag = 'scratch operand']
  %s0 = inlined_call_operand.hbm [shape: f32[2,8,6,8], index: 0, kind: input, shape index: {}]
  %s1 = inlined_call_operand.hbm [shape: bf16[64,16], index: 1, kind: input, shape index: {}]
  %s2 = inlined_call_operand.hbm [shape: f32[2,16], index: 2, kind: input, shape index: {}]
  %s3 = inlined_call_operand.hbm [shape: bf16[2,25,16], index: 3, kind: output, shape index: {}]
  %s4 = sld [smem:[#allocation0]]
  $region38: #{tpu_custom_call.1} parent=0
    _
  %s6 = ssub.s32 1, %s4
  %s7 = scalar_select 0, %s6, %s4
  $region1: #{tpu_custom_call.1} parent=0
    #allocation3 [shape = 'u8[65536]{0}', space=vmem, size = 0x10000, scoped, tag = 'input window, operand 0, single buffered']
    #allocation4 [shape = 's32[1]{0}', space=sflag, size = 0x4, scoped, tag = 'scoped memory for tpu_custom_call.1']
    #allocation5 [shape = 's32[1]{0}', space=sflag, size = 0x4, scoped, tag = 'scoped memory for tpu_custom_call.1']
    #allocation6 [shape = 'u8[16384]{0}', space=vmem, size = 0x4000, scoped, tag = 'input window, operand 1, single buffered']
    #allocation7 [shape = 's32[1]{0}', space=sflag, size = 0x4, scoped, tag = 'scoped memory for tpu_custom_call.1']
    #allocation8 [shape = 'u8[1024]{0}', space=vmem, size = 0x400, scoped, tag = 'input window, operand 2, single buffered']
    #allocation9 [shape = 'u8[16384]{0}', space=vmem, size = 0x4000, scoped, tag = 'output window, operand 0, single buffered']
    %8 = vsyncpa [#allocation4], 0
    %9 = vsyncpa [#allocation7], 0
    %10 = vsyncpa [#allocation5], 0
    // Predicated region
    $region2: #{tpu_custom_call.1} parent=1 // pred_check
      _
    $region3: #{tpu_custom_call.1} parent=1 // pred_check_branch
      %12 = sbr.rel (0) target = $region5
    $region4: #{tpu_custom_call.1} parent=1 // pred_region
      %s14 = ssub.s32 2048, 2048
      %15 = vsyncadd [#allocation4], %s14
      %s16 = sshll.u32 [#allocation3], 4
      %s17 = int_to_ptr.vmem [resolvable:$true] %s16
      %22 = dma.hbm_to_vmem [thread:$0]  %s0, 2048, %s17, [#allocation4], 128, 128, 8
    $region5: #{tpu_custom_call.1} parent=1 // pred_fallthru
      _
    // Predicated region
    $region6: #{tpu_custom_call.1} parent=1 // pred_check
      _
    $region7: #{tpu_custom_call.1} parent=1 // pred_check_branch
      %24 = sbr.rel (0) target = $region9
    $region8: #{tpu_custom_call.1} parent=1 // pred_region
      %s26 = ssub.s32 512, 512
      %27 = vsyncadd [#allocation7], %s26
      %s28 = sshll.u32 [#allocation6], 4
      %s29 = int_to_ptr.vmem [resolvable:$true] %s28
      %34 = dma.hbm_to_vmem [thread:$0]  %s1, 512, %s29, [#allocation7], 64, 64, 4
    $region9: #{tpu_custom_call.1} parent=1 // pred_fallthru
      _
    // Predicated region
    $region10: #{tpu_custom_call.1} parent=1 // pred_check
      _
    $region11: #{tpu_custom_call.1} parent=1 // pred_check_branch
      %36 = sbr.rel (0) target = $region13
    $region12: #{tpu_custom_call.1} parent=1 // pred_region
      %s38 = ssub.s32 32, 32
      %39 = vsyncadd [#allocation7], %s38
      %s41 = sshll.u32 [#allocation8], 4
      %s42 = int_to_ptr.vmem [resolvable:$true] %s41
      %44 = dma.hbm_to_vmem [thread:$0]  %s2, 32, %s42, [#allocation7]
    $region13: #{tpu_custom_call.1} parent=1 // pred_fallthru
      _
    // Predicated region
    $region14: #{tpu_custom_call.1} parent=1 // pred_check
      _
    $region15: #{tpu_custom_call.1} parent=1 // pred_check_branch
      %46 = sbr.rel (0) target = $region17
    $region16: #{tpu_custom_call.1} parent=1 // pred_region
      %47 = dma.done [#allocation4], 2048
    $region17: #{tpu_custom_call.1} parent=1 // pred_fallthru
      _
    // Predicated region
    $region18: #{tpu_custom_call.1} parent=1 // pred_check
      _
    $region19: #{tpu_custom_call.1} parent=1 // pred_check_branch
      %49 = sbr.rel (0) target = $region21
    $region20: #{tpu_custom_call.1} parent=1 // pred_region
      %50 = dma.done [#allocation7], 512
    $region21: #{tpu_custom_call.1} parent=1 // pred_fallthru
      _
    // Predicated region
    $region22: #{tpu_custom_call.1} parent=1 // pred_check
      _
    $region23: #{tpu_custom_call.1} parent=1 // pred_check_branch
      %52 = sbr.rel (0) target = $region25
    $region24: #{tpu_custom_call.1} parent=1 // pred_region
      %53 = dma.done [#allocation7], 32
    $region25: #{tpu_custom_call.1} parent=1 // pred_fallthru
      _
    %p55 = scmp.eq.s32.totalorder 0, 0
    // Predicated region
    $region26: #{tpu_custom_call.1} parent=1 // pred_check
      %p56 = pneg %p55
    $region27: #{tpu_custom_call.1} parent=1 // pred_check_branch
      %58 = sbr.rel (%p56) target = $region29
    $region28: #{tpu_custom_call.1} parent=1 // pred_region
      %v59 = vld [vmem:[#allocation3] sm:$0x1f]
      %v60 = vld [vmem:[#allocation3 + $0x8] sm:$0x1f]
      %v61 = vld [vmem:[#allocation3 + $0x10] sm:$0x1f]
      %v62 = vld [vmem:[#allocation3 + $0x18] sm:$0x1f]
      %v63 = vld [vmem:[#allocation3 + $0x20] sm:$0x1f]
      %v69 = vcombine.high %v59, %v59
      %v71 = vunpack.c.l.s4 1966171168
      %v72 = vunpack.c.0.s8 %v71
      %v73 = vlaneseq
      %v74 = vshrl.u32 %v73, 7
      %v75 = vsub.s32 %v72, %v74
      %v76 = vrot.slane %v59, %v75
      %v78 = vunpack.c.l.s4 1966171168
      %v79 = vunpack.c.0.s8 %v78
      %v80 = vlaneseq
      %v81 = vshrl.u32 %v80, 7
      %v82 = vsub.s32 %v79, %v81
      %v83 = vrot.slane %v69, %v82
      %v84 = vcombine.high %v76, %v76
      %v86 = vunpack.c.l.s4 1966171168
      %v87 = vunpack.c.0.s8 %v86
      %v88 = vlaneseq
      %v89 = vshrl.u32 %v88, 7
      %v90 = vsub.s32 %v87, %v89
      %v91 = vrot.slane %v76, %v90
      %v93 = vunpack.c.l.s4 1966171168
      %v94 = vunpack.c.0.s8 %v93
      %v95 = vlaneseq
      %v96 = vshrl.u32 %v95, 7
      %v97 = vsub.s32 %v94, %v96
      %v98 = vrot.slane %v83, %v97
      %v100 = vunpack.c.l.s4 1966171168
      %v101 = vunpack.c.0.s8 %v100
      %v102 = vlaneseq
      %v103 = vshrl.u32 %v102, 7
      %v104 = vsub.s32 %v101, %v103
      %v105 = vrot.slane %v84, %v104
      %v106 = vcombine.high %v91, %v91
      %v107 = vcombine.high %v105, %v105
      %v108 = vcombine.high %v60, %v60
      %v110 = vunpack.c.l.s4 1966171168
      %v111 = vunpack.c.0.s8 %v110
      %v112 = vlaneseq
      %v113 = vshrl.u32 %v112, 7
      %v114 = vsub.s32 %v111, %v113
      %v115 = vrot.slane %v60, %v114
      %v117 = vunpack.c.l.s4 1966171168
      %v118 = vunpack.c.0.s8 %v117
      %v119 = vlaneseq
      %v120 = vshrl.u32 %v119, 7
      %v121 = vsub.s32 %v118, %v120
      %v122 = vrot.slane %v108, %v121
      %v123 = vcombine.high %v115, %v115
      %v125 = vunpack.c.l.s4 1966171168
      %v126 = vunpack.c.0.s8 %v125
      %v127 = vlaneseq
      %v128 = vshrl.u32 %v127, 7
      %v129 = vsub.s32 %v126, %v128
      %v130 = vrot.slane %v115, %v129
      %v132 = vunpack.c.l.s4 1966171168
      %v133 = vunpack.c.0.s8 %v132
      %v134 = vlaneseq
      %v135 = vshrl.u32 %v134, 7
      %v136 = vsub.s32 %v133, %v135
      %v137 = vrot.slane %v122, %v136
      %v139 = vunpack.c.l.s4 1966171168
      %v140 = vunpack.c.0.s8 %v139
      %v141 = vlaneseq
      %v142 = vshrl.u32 %v141, 7
      %v143 = vsub.s32 %v140, %v142
      %v144 = vrot.slane %v123, %v143
      %v145 = vcombine.high %v130, %v130
      %v146 = vcombine.high %v144, %v144
      %v147 = vcombine.high %v61, %v61
      %v149 = vunpack.c.l.s4 1966171168
      %v150 = vunpack.c.0.s8 %v149
      %v151 = vlaneseq
      %v152 = vshrl.u32 %v151, 7
      %v153 = vsub.s32 %v150, %v152
      %v154 = vrot.slane %v61, %v153
      %v156 = vunpack.c.l.s4 1966171168
      %v157 = vunpack.c.0.s8 %v156
      %v158 = vlaneseq
      %v159 = vshrl.u32 %v158, 7
      %v160 = vsub.s32 %v157, %v159
      %v161 = vrot.slane %v147, %v160
      %v162 = vcombine.high %v154, %v154
      %v164 = vunpack.c.l.s4 1966171168
      %v165 = vunpack.c.0.s8 %v164
      %v166 = vlaneseq
      %v167 = vshrl.u32 %v166, 7
      %v168 = vsub.s32 %v165, %v167
      %v169 = vrot.slane %v154, %v168
      %v171 = vunpack.c.l.s4 1966171168
      %v172 = vunpack.c.0.s8 %v171
      %v173 = vlaneseq
      %v174 = vshrl.u32 %v173, 7
      %v175 = vsub.s32 %v172, %v174
      %v176 = vrot.slane %v161, %v175
      %v178 = vunpack.c.l.s4 1966171168
      %v179 = vunpack.c.0.s8 %v178
      %v180 = vlaneseq
      %v181 = vshrl.u32 %v180, 7
      %v182 = vsub.s32 %v179, %v181
      %v183 = vrot.slane %v162, %v182
      %v184 = vcombine.high %v169, %v169
      %v185 = vcombine.high %v183, %v183
      %v186 = vcombine.high %v62, %v62
      %v188 = vunpack.c.l.s4 1966171168
      %v189 = vunpack.c.0.s8 %v188
      %v190 = vlaneseq
      %v191 = vshrl.u32 %v190, 7
      %v192 = vsub.s32 %v189, %v191
      %v193 = vrot.slane %v62, %v192
      %v195 = vunpack.c.l.s4 1966171168
      %v196 = vunpack.c.0.s8 %v195
      %v197 = vlaneseq
      %v198 = vshrl.u32 %v197, 7
      %v199 = vsub.s32 %v196, %v198
      %v200 = vrot.slane %v186, %v199
      %v201 = vcombine.high %v193, %v193
      %v203 = vunpack.c.l.s4 1966171168
      %v204 = vunpack.c.0.s8 %v203
      %v205 = vlaneseq
      %v206 = vshrl.u32 %v205, 7
      %v207 = vsub.s32 %v204, %v206
      %v208 = vrot.slane %v193, %v207
      %v210 = vunpack.c.l.s4 1966171168
      %v211 = vunpack.c.0.s8 %v210
      %v212 = vlaneseq
      %v213 = vshrl.u32 %v212, 7
      %v214 = vsub.s32 %v211, %v213
      %v215 = vrot.slane %v200, %v214
      %v217 = vunpack.c.l.s4 1966171168
      %v218 = vunpack.c.0.s8 %v217
      %v219 = vlaneseq
      %v220 = vshrl.u32 %v219, 7
      %v221 = vsub.s32 %v218, %v220
      %v222 = vrot.slane %v201, %v221
      %v223 = vcombine.high %v208, %v208
      %v224 = vcombine.high %v222, %v222
      %v225 = vcombine.high %v63, %v63
      %v227 = vunpack.c.l.s4 1966171168
      %v228 = vunpack.c.0.s8 %v227
      %v229 = vlaneseq
      %v230 = vshrl.u32 %v229, 7
      %v231 = vsub.s32 %v228, %v230
      %v232 = vrot.slane %v63, %v231
      %v234 = vunpack.c.l.s4 1966171168
      %v235 = vunpack.c.0.s8 %v234
      %v236 = vlaneseq
      %v237 = vshrl.u32 %v236, 7
      %v238 = vsub.s32 %v235, %v237
      %v239 = vrot.slane %v225, %v238
      %v240 = vcombine.high %v232, %v232
      %v242 = vunpack.c.l.s4 1966171168
      %v243 = vunpack.c.0.s8 %v242
      %v244 = vlaneseq
      %v245 = vshrl.u32 %v244, 7
      %v246 = vsub.s32 %v243, %v245
      %v247 = vrot.slane %v232, %v246
      %v249 = vunpack.c.l.s4 1966171168
      %v250 = vunpack.c.0.s8 %v249
      %v251 = vlaneseq
      %v252 = vshrl.u32 %v251, 7
      %v253 = vsub.s32 %v250, %v252
      %v254 = vrot.slane %v239, %v253
      %v256 = vunpack.c.l.s4 1966171168
      %v257 = vunpack.c.0.s8 %v256
      %v258 = vlaneseq
      %v259 = vshrl.u32 %v258, 7
      %v260 = vsub.s32 %v257, %v259
      %v261 = vrot.slane %v240, %v260
      %v262 = vcombine.high %v247, %v247
      %v263 = vcombine.high %v261, %v261
      %v264 = vcombine.low %v91, %v105
      %v265 = vcombine.low %v106, %v107
      %v266 = vcombine.low %v98, %v130
      %v267 = vcombine.low %v144, %v145
      %v269 = vunpack.c.l.s4 1966171168
      %v270 = vunpack.c.0.s8 %v269
      %v271 = vlaneseq
      %v272 = vshrl.u32 %v271, 7
      %v273 = vsub.s32 %v270, %v272
      %v274 = vrot.slane %v264, %v273
      %v276 = vunpack.c.l.s4 1966171168
      %v277 = vunpack.c.0.s8 %v276
      %v278 = vlaneseq
      %v279 = vshrl.u32 %v278, 7
      %v280 = vsub.s32 %v277, %v279
      %v281 = vrot.slane %v265, %v280
      %v283 = vunpack.c.l.s4 1966171168
      %v284 = vunpack.c.0.s8 %v283
      %v285 = vlaneseq
      %v286 = vshrl.u32 %v285, 7
      %v287 = vsub.s32 %v284, %v286
      %v288 = vrot.slane %v266, %v287
      %v290 = vunpack.c.l.s4 1966171168
      %v291 = vunpack.c.0.s8 %v290
      %v292 = vlaneseq
      %v293 = vshrl.u32 %v292, 7
      %v294 = vsub.s32 %v291, %v293
      %v295 = vrot.slane %v267, %v294
      %v296 = vcombine.low %v274, %v281
      %v297 = vcombine.low %v288, %v295
      %v299 = vunpack.c.l.s4 1966171168
      %v300 = vunpack.c.0.s8 %v299
      %v301 = vlaneseq
      %v302 = vshrl.u32 %v301, 7
      %v303 = vsub.s32 %v300, %v302
      %v304 = vrot.slane %v296, %v303
      %v306 = vunpack.c.l.s4 1966171168
      %v307 = vunpack.c.0.s8 %v306
      %v308 = vlaneseq
      %v309 = vshrl.u32 %v308, 7
      %v310 = vsub.s32 %v307, %v309
      %v311 = vrot.slane %v297, %v310
      %v312 = vcombine.low %v304, %v311
      %v313 = vcombine.low %v146, %v137
      %v314 = vcombine.low %v169, %v183
      %v315 = vcombine.low %v184, %v185
      %v316 = vcombine.low %v176, %v208
      %v318 = vunpack.c.l.s4 1966171168
      %v319 = vunpack.c.0.s8 %v318
      %v320 = vlaneseq
      %v321 = vshrl.u32 %v320, 7
      %v322 = vsub.s32 %v319, %v321
      %v323 = vrot.slane %v313, %v322
      %v325 = vunpack.c.l.s4 1966171168
      %v326 = vunpack.c.0.s8 %v325
      %v327 = vlaneseq
      %v328 = vshrl.u32 %v327, 7
      %v329 = vsub.s32 %v326, %v328
      %v330 = vrot.slane %v314, %v329
      %v332 = vunpack.c.l.s4 1966171168
      %v333 = vunpack.c.0.s8 %v332
      %v334 = vlaneseq
      %v335 = vshrl.u32 %v334, 7
      %v336 = vsub.s32 %v333, %v335
      %v337 = vrot.slane %v315, %v336
      %v339 = vunpack.c.l.s4 1966171168
      %v340 = vunpack.c.0.s8 %v339
      %v341 = vlaneseq
      %v342 = vshrl.u32 %v341, 7
      %v343 = vsub.s32 %v340, %v342
      %v344 = vrot.slane %v316, %v343
      %v345 = vcombine.low %v323, %v330
      %v346 = vcombine.low %v337, %v344
      %v348 = vunpack.c.l.s4 1966171168
      %v349 = vunpack.c.0.s8 %v348
      %v350 = vlaneseq
      %v351 = vshrl.u32 %v350, 7
      %v352 = vsub.s32 %v349, %v351
      %v353 = vrot.slane %v345, %v352
      %v355 = vunpack.c.l.s4 1966171168
      %v356 = vunpack.c.0.s8 %v355
      %v357 = vlaneseq
      %v358 = vshrl.u32 %v357, 7
      %v359 = vsub.s32 %v356, %v358
      %v360 = vrot.slane %v346, %v359
      %v361 = vcombine.low %v353, %v360
      %v362 = vcombine.low %v222, %v223
      %v363 = vcombine.low %v224, %v215
      %v364 = vcombine.low %v247, %v261
      %v365 = vcombine.low %v262, %v263
      %v367 = vunpack.c.l.s4 1966171168
      %v368 = vunpack.c.0.s8 %v367
      %v369 = vlaneseq
      %v370 = vshrl.u32 %v369, 7
      %v371 = vsub.s32 %v368, %v370
      %v372 = vrot.slane %v362, %v371
      %v374 = vunpack.c.l.s4 1966171168
      %v375 = vunpack.c.0.s8 %v374
      %v376 = vlaneseq
      %v377 = vshrl.u32 %v376, 7
      %v378 = vsub.s32 %v375, %v377
      %v379 = vrot.slane %v363, %v378
      %v381 = vunpack.c.l.s4 1966171168
      %v382 = vunpack.c.0.s8 %v381
      %v383 = vlaneseq
      %v384 = vshrl.u32 %v383, 7
      %v385 = vsub.s32 %v382, %v384
      %v386 = vrot.slane %v364, %v385
      %v388 = vunpack.c.l.s4 1966171168
      %v389 = vunpack.c.0.s8 %v388
      %v390 = vlaneseq
      %v391 = vshrl.u32 %v390, 7
      %v392 = vsub.s32 %v389, %v391
      %v393 = vrot.slane %v365, %v392
      %v394 = vcombine.low %v372, %v379
      %v395 = vcombine.low %v386, %v393
      %v397 = vunpack.c.l.s4 1966171168
      %v398 = vunpack.c.0.s8 %v397
      %v399 = vlaneseq
      %v400 = vshrl.u32 %v399, 7
      %v401 = vsub.s32 %v398, %v400
      %v402 = vrot.slane %v394, %v401
      %v404 = vunpack.c.l.s4 1966171168
      %v405 = vunpack.c.0.s8 %v404
      %v406 = vlaneseq
      %v407 = vshrl.u32 %v406, 7
      %v408 = vsub.s32 %v405, %v407
      %v409 = vrot.slane %v395, %v408
      %v410 = vcombine.low %v402, %v409
      %v412 = vunpack.c.l.s4 1966171168
      %v413 = vunpack.c.0.s8 %v412
      %v414 = vlaneseq
      %v415 = vshrl.u32 %v414, 7
      %v416 = vsub.s32 %v413, %v415
      %v417 = vrot.slane %v254, %v416
      %v419 = vunpack.c.l.s4 1966171168
      %v420 = vunpack.c.0.s8 %v419
      %v421 = vlaneseq
      %v422 = vshrl.u32 %v421, 7
      %v423 = vsub.s32 %v420, %v422
      %v424 = vrot.slane %v417, %v423
      %v429 = vpack.c.bf16 %v361, %v312
      %v430 = vpack.c.bf16 %v424, %v410
      %vm431 = vcmask 1044480
      %vm432 = vsmask.f32 4352
      %vm433 = vmand %vm431, %vm432
      %v434 = vsel %vm433, %v430, 0
      %vm435 = vcmask 64512
      %436 = vst.msk [vmem:[#allocation2] sm:$0xff] %vm435, %v429
      %437 = vst.msk [vmem:[#allocation2 + $0x8] sm:$0xff] %vm435, %v434
      %v438 = vld [vmem:[#allocation3 + $0x1] sm:$0x1f]
      %v439 = vld [vmem:[#allocation3 + $0x9] sm:$0x1f]
      %v440 = vld [vmem:[#allocation3 + $0x11] sm:$0x1f]
      %v441 = vld [vmem:[#allocation3 + $0x19] sm:$0x1f]
      %v442 = vld [vmem:[#allocation3 + $0x21] sm:$0x1f]
      %v448 = vcombine.high %v438, %v438
      %v450 = vunpack.c.l.s4 1966171168
      %v451 = vunpack.c.0.s8 %v450
      %v452 = vlaneseq
      %v453 = vshrl.u32 %v452, 7
      %v454 = vsub.s32 %v451, %v453
      %v455 = vrot.slane %v438, %v454
      %v457 = vunpack.c.l.s4 1966171168
      %v458 = vunpack.c.0.s8 %v457
      %v459 = vlaneseq
      %v460 = vshrl.u32 %v459, 7
      %v461 = vsub.s32 %v458, %v460
      %v462 = vrot.slane %v448, %v461
      %v463 = vcombine.high %v455, %v455
      %v465 = vunpack.c.l.s4 1966171168
      %v466 = vunpack.c.0.s8 %v465
      %v467 = vlaneseq
      %v468 = vshrl.u32 %v467, 7
      %v469 = vsub.s32 %v466, %v468
      %v470 = vrot.slane %v455, %v469
      %v472 = vunpack.c.l.s4 1966171168
      %v473 = vunpack.c.0.s8 %v472
      %v474 = vlaneseq
      %v475 = vshrl.u32 %v474, 7
      %v476 = vsub.s32 %v473, %v475
      %v477 = vrot.slane %v462, %v476
      %v479 = vunpack.c.l.s4 1966171168
      %v480 = vunpack.c.0.s8 %v479
      %v481 = vlaneseq
      %v482 = vshrl.u32 %v481, 7
      %v483 = vsub.s32 %v480, %v482
      %v484 = vrot.slane %v463, %v483
      %v485 = vcombine.high %v470, %v470
      %v486 = vcombine.high %v484, %v484
      %v487 = vcombine.high %v439, %v439
      %v489 = vunpack.c.l.s4 1966171168
      %v490 = vunpack.c.0.s8 %v489
      %v491 = vlaneseq
      %v492 = vshrl.u32 %v491, 7
      %v493 = vsub.s32 %v490, %v492
      %v494 = vrot.slane %v439, %v493
      %v496 = vunpack.c.l.s4 1966171168
      %v497 = vunpack.c.0.s8 %v496
      %v498 = vlaneseq
      %v499 = vshrl.u32 %v498, 7
      %v500 = vsub.s32 %v497, %v499
      %v501 = vrot.slane %v487, %v500
      %v502 = vcombine.high %v494, %v494
      %v504 = vunpack.c.l.s4 1966171168
      %v505 = vunpack.c.0.s8 %v504
      %v506 = vlaneseq
      %v507 = vshrl.u32 %v506, 7
      %v508 = vsub.s32 %v505, %v507
      %v509 = vrot.slane %v494, %v508
      %v511 = vunpack.c.l.s4 1966171168
      %v512 = vunpack.c.0.s8 %v511
      %v513 = vlaneseq
      %v514 = vshrl.u32 %v513, 7
      %v515 = vsub.s32 %v512, %v514
      %v516 = vrot.slane %v501, %v515
      %v518 = vunpack.c.l.s4 1966171168
      %v519 = vunpack.c.0.s8 %v518
      %v520 = vlaneseq
      %v521 = vshrl.u32 %v520, 7
      %v522 = vsub.s32 %v519, %v521
      %v523 = vrot.slane %v502, %v522
      %v524 = vcombine.high %v509, %v509
      %v525 = vcombine.high %v523, %v523
      %v526 = vcombine.high %v440, %v440
      %v528 = vunpack.c.l.s4 1966171168
      %v529 = vunpack.c.0.s8 %v528
      %v530 = vlaneseq
      %v531 = vshrl.u32 %v530, 7
      %v532 = vsub.s32 %v529, %v531
      %v533 = vrot.slane %v440, %v532
      %v535 = vunpack.c.l.s4 1966171168
      %v536 = vunpack.c.0.s8 %v535
      %v537 = vlaneseq
      %v538 = vshrl.u32 %v537, 7
      %v539 = vsub.s32 %v536, %v538
      %v540 = vrot.slane %v526, %v539
      %v541 = vcombine.high %v533, %v533
      %v543 = vunpack.c.l.s4 1966171168
      %v544 = vunpack.c.0.s8 %v543
      %v545 = vlaneseq
      %v546 = vshrl.u32 %v545, 7
      %v547 = vsub.s32 %v544, %v546
      %v548 = vrot.slane %v533, %v547
      %v550 = vunpack.c.l.s4 1966171168
      %v551 = vunpack.c.0.s8 %v550
      %v552 = vlaneseq
      %v553 = vshrl.u32 %v552, 7
      %v554 = vsub.s32 %v551, %v553
      %v555 = vrot.slane %v540, %v554
      %v557 = vunpack.c.l.s4 1966171168
      %v558 = vunpack.c.0.s8 %v557
      %v559 = vlaneseq
      %v560 = vshrl.u32 %v559, 7
      %v561 = vsub.s32 %v558, %v560
      %v562 = vrot.slane %v541, %v561
      %v563 = vcombine.high %v548, %v548
      %v564 = vcombine.high %v562, %v562
      %v565 = vcombine.high %v441, %v441
      %v567 = vunpack.c.l.s4 1966171168
      %v568 = vunpack.c.0.s8 %v567
      %v569 = vlaneseq
      %v570 = vshrl.u32 %v569, 7
      %v571 = vsub.s32 %v568, %v570
      %v572 = vrot.slane %v441, %v571
      %v574 = vunpack.c.l.s4 1966171168
      %v575 = vunpack.c.0.s8 %v574
      %v576 = vlaneseq
      %v577 = vshrl.u32 %v576, 7
      %v578 = vsub.s32 %v575, %v577
      %v579 = vrot.slane %v565, %v578
      %v580 = vcombine.high %v572, %v572
      %v582 = vunpack.c.l.s4 1966171168
      %v583 = vunpack.c.0.s8 %v582
      %v584 = vlaneseq
      %v585 = vshrl.u32 %v584, 7
      %v586 = vsub.s32 %v583, %v585
      %v587 = vrot.slane %v572, %v586
      %v589 = vunpack.c.l.s4 1966171168
      %v590 = vunpack.c.0.s8 %v589
      %v591 = vlaneseq
      %v592 = vshrl.u32 %v591, 7
      %v593 = vsub.s32 %v590, %v592
      %v594 = vrot.slane %v579, %v593
      %v596 = vunpack.c.l.s4 1966171168
      %v597 = vunpack.c.0.s8 %v596
      %v598 = vlaneseq
      %v599 = vshrl.u32 %v598, 7
      %v600 = vsub.s32 %v597, %v599
      %v601 = vrot.slane %v580, %v600
      %v602 = vcombine.high %v587, %v587
      %v603 = vcombine.high %v601, %v601
      %v604 = vcombine.high %v442, %v442
      %v606 = vunpack.c.l.s4 1966171168
      %v607 = vunpack.c.0.s8 %v606
      %v608 = vlaneseq
      %v609 = vshrl.u32 %v608, 7
      %v610 = vsub.s32 %v607, %v609
      %v611 = vrot.slane %v442, %v610
      %v613 = vunpack.c.l.s4 1966171168
      %v614 = vunpack.c.0.s8 %v613
      %v615 = vlaneseq
      %v616 = vshrl.u32 %v615, 7
      %v617 = vsub.s32 %v614, %v616
      %v618 = vrot.slane %v604, %v617
      %v619 = vcombine.high %v611, %v611
      %v621 = vunpack.c.l.s4 1966171168
      %v622 = vunpack.c.0.s8 %v621
      %v623 = vlaneseq
      %v624 = vshrl.u32 %v623, 7
      %v625 = vsub.s32 %v622, %v624
      %v626 = vrot.slane %v611, %v625
      %v628 = vunpack.c.l.s4 1966171168
      %v629 = vunpack.c.0.s8 %v628
      %v630 = vlaneseq
      %v631 = vshrl.u32 %v630, 7
      %v632 = vsub.s32 %v629, %v631
      %v633 = vrot.slane %v618, %v632
      %v635 = vunpack.c.l.s4 1966171168
      %v636 = vunpack.c.0.s8 %v635
      %v637 = vlaneseq
      %v638 = vshrl.u32 %v637, 7
      %v639 = vsub.s32 %v636, %v638
      %v640 = vrot.slane %v619, %v639
      %v641 = vcombine.high %v626, %v626
      %v642 = vcombine.high %v640, %v640
      %v643 = vcombine.low %v470, %v484
      %v644 = vcombine.low %v485, %v486
      %v645 = vcombine.low %v477, %v509
      %v646 = vcombine.low %v523, %v524
      %v648 = vunpack.c.l.s4 1966171168
      %v649 = vunpack.c.0.s8 %v648
      %v650 = vlaneseq
      %v651 = vshrl.u32 %v650, 7
      %v652 = vsub.s32 %v649, %v651
      %v653 = vrot.slane %v643, %v652
      %v655 = vunpack.c.l.s4 1966171168
      %v656 = vunpack.c.0.s8 %v655
      %v657 = vlaneseq
      %v658 = vshrl.u32 %v657, 7
      %v659 = vsub.s32 %v656, %v658
      %v660 = vrot.slane %v644, %v659
      %v662 = vunpack.c.l.s4 1966171168
      %v663 = vunpack.c.0.s8 %v662
      %v664 = vlaneseq
      %v665 = vshrl.u32 %v664, 7
      %v666 = vsub.s32 %v663, %v665
      %v667 = vrot.slane %v645, %v666
      %v669 = vunpack.c.l.s4 1966171168
      %v670 = vunpack.c.0.s8 %v669
      %v671 = vlaneseq
      %v672 = vshrl.u32 %v671, 7
      %v673 = vsub.s32 %v670, %v672
      %v674 = vrot.slane %v646, %v673
      %v675 = vcombine.low %v653, %v660
      %v676 = vcombine.low %v667, %v674
      %v678 = vunpack.c.l.s4 1966171168
      %v679 = vunpack.c.0.s8 %v678
      %v680 = vlaneseq
      %v681 = vshrl.u32 %v680, 7
      %v682 = vsub.s32 %v679, %v681
      %v683 = vrot.slane %v675, %v682
      %v685 = vunpack.c.l.s4 1966171168
      %v686 = vunpack.c.0.s8 %v685
      %v687 = vlaneseq
      %v688 = vshrl.u32 %v687, 7
      %v689 = vsub.s32 %v686, %v688
      %v690 = vrot.slane %v676, %v689
      %v691 = vcombine.low %v683, %v690
      %v692 = vcombine.low %v525, %v516
      %v693 = vcombine.low %v548, %v562
      %v694 = vcombine.low %v563, %v564
      %v695 = vcombine.low %v555, %v587
      %v697 = vunpack.c.l.s4 1966171168
      %v698 = vunpack.c.0.s8 %v697
      %v699 = vlaneseq
      %v700 = vshrl.u32 %v699, 7
      %v701 = vsub.s32 %v698, %v700
      %v702 = vrot.slane %v692, %v701
      %v704 = vunpack.c.l.s4 1966171168
      %v705 = vunpack.c.0.s8 %v704
      %v706 = vlaneseq
      %v707 = vshrl.u32 %v706, 7
      %v708 = vsub.s32 %v705, %v707
      %v709 = vrot.slane %v693, %v708
      %v711 = vunpack.c.l.s4 1966171168
      %v712 = vunpack.c.0.s8 %v711
      %v713 = vlaneseq
      %v714 = vshrl.u32 %v713, 7
      %v715 = vsub.s32 %v712, %v714
      %v716 = vrot.slane %v694, %v715
      %v718 = vunpack.c.l.s4 1966171168
      %v719 = vunpack.c.0.s8 %v718
      %v720 = vlaneseq
      %v721 = vshrl.u32 %v720, 7
      %v722 = vsub.s32 %v719, %v721
      %v723 = vrot.slane %v695, %v722
      %v724 = vcombine.low %v702, %v709
      %v725 = vcombine.low %v716, %v723
      %v727 = vunpack.c.l.s4 1966171168
      %v728 = vunpack.c.0.s8 %v727
      %v729 = vlaneseq
      %v730 = vshrl.u32 %v729, 7
      %v731 = vsub.s32 %v728, %v730
      %v732 = vrot.slane %v724, %v731
      %v734 = vunpack.c.l.s4 1966171168
      %v735 = vunpack.c.0.s8 %v734
      %v736 = vlaneseq
      %v737 = vshrl.u32 %v736, 7
      %v738 = vsub.s32 %v735, %v737
      %v739 = vrot.slane %v725, %v738
      %v740 = vcombine.low %v732, %v739
      %v741 = vcombine.low %v601, %v602
      %v742 = vcombine.low %v603, %v594
      %v743 = vcombine.low %v626, %v640
      %v744 = vcombine.low %v641, %v642
      %v746 = vunpack.c.l.s4 1966171168
      %v747 = vunpack.c.0.s8 %v746
      %v748 = vlaneseq
      %v749 = vshrl.u32 %v748, 7
      %v750 = vsub.s32 %v747, %v749
      %v751 = vrot.slane %v741, %v750
      %v753 = vunpack.c.l.s4 1966171168
      %v754 = vunpack.c.0.s8 %v753
      %v755 = vlaneseq
      %v756 = vshrl.u32 %v755, 7
      %v757 = vsub.s32 %v754, %v756
      %v758 = vrot.slane %v742, %v757
      %v760 = vunpack.c.l.s4 1966171168
      %v761 = vunpack.c.0.s8 %v760
      %v762 = vlaneseq
      %v763 = vshrl.u32 %v762, 7
      %v764 = vsub.s32 %v761, %v763
      %v765 = vrot.slane %v743, %v764
      %v767 = vunpack.c.l.s4 1966171168
      %v768 = vunpack.c.0.s8 %v767
      %v769 = vlaneseq
      %v770 = vshrl.u32 %v769, 7
      %v771 = vsub.s32 %v768, %v770
      %v772 = vrot.slane %v744, %v771
      %v773 = vcombine.low %v751, %v758
      %v774 = vcombine.low %v765, %v772
      %v776 = vunpack.c.l.s4 1966171168
      %v777 = vunpack.c.0.s8 %v776
      %v778 = vlaneseq
      %v779 = vshrl.u32 %v778, 7
      %v780 = vsub.s32 %v777, %v779
      %v781 = vrot.slane %v773, %v780
      %v783 = vunpack.c.l.s4 1966171168
      %v784 = vunpack.c.0.s8 %v783
      %v785 = vlaneseq
      %v786 = vshrl.u32 %v785, 7
      %v787 = vsub.s32 %v784, %v786
      %v788 = vrot.slane %v774, %v787
      %v789 = vcombine.low %v781, %v788
      %v791 = vunpack.c.l.s4 1966171168
      %v792 = vunpack.c.0.s8 %v791
      %v793 = vlaneseq
      %v794 = vshrl.u32 %v793, 7
      %v795 = vsub.s32 %v792, %v794
      %v796 = vrot.slane %v633, %v795
      %v798 = vunpack.c.l.s4 1966171168
      %v799 = vunpack.c.0.s8 %v798
      %v800 = vlaneseq
      %v801 = vshrl.u32 %v800, 7
      %v802 = vsub.s32 %v799, %v801
      %v803 = vrot.slane %v796, %v802
      %v808 = vpack.c.bf16 %v740, %v691
      %v809 = vpack.c.bf16 %v803, %v789
      %v810 = vsel %vm433, %v809, 0
      %813 = vrot.lane.b32.xlu0 %v808, 8
      %v814 = vpop.permute.xlu0 %813
      %815 = vrot.lane.b32.xlu0 %v810, 8
      %v816 = vpop.permute.xlu0 %815
      %vm819 = vcmask 130112
      %820 = vst.msk [vmem:[#allocation2] sm:$0xff] %vm819, %v814
      %821 = vst.msk [vmem:[#allocation2 + $0x8] sm:$0xff] %vm819, %v816
      %s822 = scalar_lea.vmem [#allocation3], 8
      %v823 = vld [vmem:[%s822] sm:$0x1f]
      %v824 = vld [vmem:[%s822 + $0x8] sm:$0x1f]
      %v825 = vld [vmem:[%s822 + $0x10] sm:$0x1f]
      %v826 = vld [vmem:[%s822 + $0x18] sm:$0x1f]
      %v827 = vld [vmem:[%s822 + $0x20] sm:$0x1f]
      %v833 = vcombine.high %v823, %v823
      %v835 = vunpack.c.l.s4 1966171168
      %v836 = vunpack.c.0.s8 %v835
      %v837 = vlaneseq
      %v838 = vshrl.u32 %v837, 7
      %v839 = vsub.s32 %v836, %v838
      %v840 = vrot.slane %v823, %v839
      %v842 = vunpack.c.l.s4 1966171168
      %v843 = vunpack.c.0.s8 %v842
      %v844 = vlaneseq
      %v845 = vshrl.u32 %v844, 7
      %v846 = vsub.s32 %v843, %v845
      %v847 = vrot.slane %v833, %v846
      %v848 = vcombine.high %v840, %v840
      %v850 = vunpack.c.l.s4 1966171168
      %v851 = vunpack.c.0.s8 %v850
      %v852 = vlaneseq
      %v853 = vshrl.u32 %v852, 7
      %v854 = vsub.s32 %v851, %v853
      %v855 = vrot.slane %v840, %v854
      %v857 = vunpack.c.l.s4 1966171168
      %v858 = vunpack.c.0.s8 %v857
      %v859 = vlaneseq
      %v860 = vshrl.u32 %v859, 7
      %v861 = vsub.s32 %v858, %v860
      %v862 = vrot.slane %v847, %v861
      %v864 = vunpack.c.l.s4 1966171168
      %v865 = vunpack.c.0.s8 %v864
      %v866 = vlaneseq
      %v867 = vshrl.u32 %v866, 7
      %v868 = vsub.s32 %v865, %v867
      %v869 = vrot.slane %v848, %v868
      %v870 = vcombine.high %v855, %v855
      %v871 = vcombine.high %v869, %v869
      %v872 = vcombine.high %v824, %v824
      %v874 = vunpack.c.l.s4 1966171168
      %v875 = vunpack.c.0.s8 %v874
      %v876 = vlaneseq
      %v877 = vshrl.u32 %v876, 7
      %v878 = vsub.s32 %v875, %v877
      %v879 = vrot.slane %v824, %v878
      %v881 = vunpack.c.l.s4 1966171168
      %v882 = vunpack.c.0.s8 %v881
      %v883 = vlaneseq
      %v884 = vshrl.u32 %v883, 7
      %v885 = vsub.s32 %v882, %v884
      %v886 = vrot.slane %v872, %v885
      %v887 = vcombine.high %v879, %v879
      %v889 = vunpack.c.l.s4 1966171168
      %v890 = vunpack.c.0.s8 %v889
      %v891 = vlaneseq
      %v892 = vshrl.u32 %v891, 7
      %v893 = vsub.s32 %v890, %v892
      %v894 = vrot.slane %v879, %v893
      %v896 = vunpack.c.l.s4 1966171168
      %v897 = vunpack.c.0.s8 %v896
      %v898 = vlaneseq
      %v899 = vshrl.u32 %v898, 7
      %v900 = vsub.s32 %v897, %v899
      %v901 = vrot.slane %v886, %v900
      %v903 = vunpack.c.l.s4 1966171168
      %v904 = vunpack.c.0.s8 %v903
      %v905 = vlaneseq
      %v906 = vshrl.u32 %v905, 7
      %v907 = vsub.s32 %v904, %v906
      %v908 = vrot.slane %v887, %v907
      %v909 = vcombine.high %v894, %v894
      %v910 = vcombine.high %v908, %v908
      %v911 = vcombine.high %v825, %v825
      %v913 = vunpack.c.l.s4 1966171168
      %v914 = vunpack.c.0.s8 %v913
      %v915 = vlaneseq
      %v916 = vshrl.u32 %v915, 7
      %v917 = vsub.s32 %v914, %v916
      %v918 = vrot.slane %v825, %v917
      %v920 = vunpack.c.l.s4 1966171168
      %v921 = vunpack.c.0.s8 %v920
      %v922 = vlaneseq
      %v923 = vshrl.u32 %v922, 7
      %v924 = vsub.s32 %v921, %v923
      %v925 = vrot.slane %v911, %v924
      %v926 = vcombine.high %v918, %v918
      %v928 = vunpack.c.l.s4 1966171168
      %v929 = vunpack.c.0.s8 %v928
      %v930 = vlaneseq
      %v931 = vshrl.u32 %v930, 7
      %v932 = vsub.s32 %v929, %v931
      %v933 = vrot.slane %v918, %v932
      %v935 = vunpack.c.l.s4 1966171168
      %v936 = vunpack.c.0.s8 %v935
      %v937 = vlaneseq
      %v938 = vshrl.u32 %v937, 7
      %v939 = vsub.s32 %v936, %v938
      %v940 = vrot.slane %v925, %v939
      %v942 = vunpack.c.l.s4 1966171168
      %v943 = vunpack.c.0.s8 %v942
      %v944 = vlaneseq
      %v945 = vshrl.u32 %v944, 7
      %v946 = vsub.s32 %v943, %v945
      %v947 = vrot.slane %v926, %v946
      %v948 = vcombine.high %v933, %v933
      %v949 = vcombine.high %v947, %v947
      %v950 = vcombine.high %v826, %v826
      %v952 = vunpack.c.l.s4 1966171168
      %v953 = vunpack.c.0.s8 %v952
      %v954 = vlaneseq
      %v955 = vshrl.u32 %v954, 7
      %v956 = vsub.s32 %v953, %v955
      %v957 = vrot.slane %v826, %v956
      %v959 = vunpack.c.l.s4 1966171168
      %v960 = vunpack.c.0.s8 %v959
      %v961 = vlaneseq
      %v962 = vshrl.u32 %v961, 7
      %v963 = vsub.s32 %v960, %v962
      %v964 = vrot.slane %v950, %v963
      %v965 = vcombine.high %v957, %v957
      %v967 = vunpack.c.l.s4 1966171168
      %v968 = vunpack.c.0.s8 %v967
      %v969 = vlaneseq
      %v970 = vshrl.u32 %v969, 7
      %v971 = vsub.s32 %v968, %v970
      %v972 = vrot.slane %v957, %v971
      %v974 = vunpack.c.l.s4 1966171168
      %v975 = vunpack.c.0.s8 %v974
      %v976 = vlaneseq
      %v977 = vshrl.u32 %v976, 7
      %v978 = vsub.s32 %v975, %v977
      %v979 = vrot.slane %v964, %v978
      %v981 = vunpack.c.l.s4 1966171168
      %v982 = vunpack.c.0.s8 %v981
      %v983 = vlaneseq
      %v984 = vshrl.u32 %v983, 7
      %v985 = vsub.s32 %v982, %v984
      %v986 = vrot.slane %v965, %v985
      %v987 = vcombine.high %v972, %v972
      %v988 = vcombine.high %v986, %v986
      %v989 = vcombine.high %v827, %v827
      %v991 = vunpack.c.l.s4 1966171168
      %v992 = vunpack.c.0.s8 %v991
      %v993 = vlaneseq
      %v994 = vshrl.u32 %v993, 7
      %v995 = vsub.s32 %v992, %v994
      %v996 = vrot.slane %v827, %v995
      %v998 = vunpack.c.l.s4 1966171168
      %v999 = vunpack.c.0.s8 %v998
      %v1000 = vlaneseq
      %v1001 = vshrl.u32 %v1000, 7
      %v1002 = vsub.s32 %v999, %v1001
      %v1003 = vrot.slane %v989, %v1002
      %v1004 = vcombine.high %v996, %v996
      %v1006 = vunpack.c.l.s4 1966171168
      %v1007 = vunpack.c.0.s8 %v1006
      %v1008 = vlaneseq
      %v1009 = vshrl.u32 %v1008, 7
      %v1010 = vsub.s32 %v1007, %v1009
      %v1011 = vrot.slane %v996, %v1010
      %v1013 = vunpack.c.l.s4 1966171168
      %v1014 = vunpack.c.0.s8 %v1013
      %v1015 = vlaneseq
      %v1016 = vshrl.u32 %v1015, 7
      %v1017 = vsub.s32 %v1014, %v1016
      %v1018 = vrot.slane %v1003, %v1017
      %v1020 = vunpack.c.l.s4 1966171168
      %v1021 = vunpack.c.0.s8 %v1020
      %v1022 = vlaneseq
      %v1023 = vshrl.u32 %v1022, 7
      %v1024 = vsub.s32 %v1021, %v1023
      %v1025 = vrot.slane %v1004, %v1024
      %v1026 = vcombine.high %v1011, %v1011
      %v1027 = vcombine.high %v1025, %v1025
      %v1028 = vcombine.low %v855, %v869
      %v1029 = vcombine.low %v870, %v871
      %v1030 = vcombine.low %v862, %v894
      %v1031 = vcombine.low %v908, %v909
      %v1033 = vunpack.c.l.s4 1966171168
      %v1034 = vunpack.c.0.s8 %v1033
      %v1035 = vlaneseq
      %v1036 = vshrl.u32 %v1035, 7
      %v1037 = vsub.s32 %v1034, %v1036
      %v1038 = vrot.slane %v1028, %v1037
      %v1040 = vunpack.c.l.s4 1966171168
      %v1041 = vunpack.c.0.s8 %v1040
      %v1042 = vlaneseq
      %v1043 = vshrl.u32 %v1042, 7
      %v1044 = vsub.s32 %v1041, %v1043
      %v1045 = vrot.slane %v1029, %v1044
      %v1047 = vunpack.c.l.s4 1966171168
      %v1048 = vunpack.c.0.s8 %v1047
      %v1049 = vlaneseq
      %v1050 = vshrl.u32 %v1049, 7
      %v1051 = vsub.s32 %v1048, %v1050
      %v1052 = vrot.slane %v1030, %v1051
      %v1054 = vunpack.c.l.s4 1966171168
      %v1055 = vunpack.c.0.s8 %v1054
      %v1056 = vlaneseq
      %v1057 = vshrl.u32 %v1056, 7
      %v1058 = vsub.s32 %v1055, %v1057
      %v1059 = vrot.slane %v1031, %v1058
      %v1060 = vcombine.low %v1038, %v1045
      %v1061 = vcombine.low %v1052, %v1059
      %v1063 = vunpack.c.l.s4 1966171168
      %v1064 = vunpack.c.0.s8 %v1063
      %v1065 = vlaneseq
      %v1066 = vshrl.u32 %v1065, 7
      %v1067 = vsub.s32 %v1064, %v1066
      %v1068 = vrot.slane %v1060, %v1067
      %v1070 = vunpack.c.l.s4 1966171168
      %v1071 = vunpack.c.0.s8 %v1070
      %v1072 = vlaneseq
      %v1073 = vshrl.u32 %v1072, 7
      %v1074 = vsub.s32 %v1071, %v1073
      %v1075 = vrot.slane %v1061, %v1074
      %v1076 = vcombine.low %v1068, %v1075
      %v1077 = vcombine.low %v910, %v901
      %v1078 = vcombine.low %v933, %v947
      %v1079 = vcombine.low %v948, %v949
      %v1080 = vcombine.low %v940, %v972
      %v1082 = vunpack.c.l.s4 1966171168
      %v1083 = vunpack.c.0.s8 %v1082
      %v1084 = vlaneseq
      %v1085 = vshrl.u32 %v1084, 7
      %v1086 = vsub.s32 %v1083, %v1085
      %v1087 = vrot.slane %v1077, %v1086
      %v1089 = vunpack.c.l.s4 1966171168
      %v1090 = vunpack.c.0.s8 %v1089
      %v1091 = vlaneseq
      %v1092 = vshrl.u32 %v1091, 7
      %v1093 = vsub.s32 %v1090, %v1092
      %v1094 = vrot.slane %v1078, %v1093
      %v1096 = vunpack.c.l.s4 1966171168
      %v1097 = vunpack.c.0.s8 %v1096
      %v1098 = vlaneseq
      %v1099 = vshrl.u32 %v1098, 7
      %v1100 = vsub.s32 %v1097, %v1099
      %v1101 = vrot.slane %v1079, %v1100
      %v1103 = vunpack.c.l.s4 1966171168
      %v1104 = vunpack.c.0.s8 %v1103
      %v1105 = vlaneseq
      %v1106 = vshrl.u32 %v1105, 7
      %v1107 = vsub.s32 %v1104, %v1106
      %v1108 = vrot.slane %v1080, %v1107
      %v1109 = vcombine.low %v1087, %v1094
      %v1110 = vcombine.low %v1101, %v1108
      %v1112 = vunpack.c.l.s4 1966171168
      %v1113 = vunpack.c.0.s8 %v1112
      %v1114 = vlaneseq
      %v1115 = vshrl.u32 %v1114, 7
      %v1116 = vsub.s32 %v1113, %v1115
      %v1117 = vrot.slane %v1109, %v1116
      %v1119 = vunpack.c.l.s4 1966171168
      %v1120 = vunpack.c.0.s8 %v1119
      %v1121 = vlaneseq
      %v1122 = vshrl.u32 %v1121, 7
      %v1123 = vsub.s32 %v1120, %v1122
      %v1124 = vrot.slane %v1110, %v1123
      %v1125 = vcombine.low %v1117, %v1124
      %v1126 = vcombine.low %v986, %v987
      %v1127 = vcombine.low %v988, %v979
      %v1128 = vcombine.low %v1011, %v1025
      %v1129 = vcombine.low %v1026, %v1027
      %v1131 = vunpack.c.l.s4 1966171168
      %v1132 = vunpack.c.0.s8 %v1131
      %v1133 = vlaneseq
      %v1134 = vshrl.u32 %v1133, 7
      %v1135 = vsub.s32 %v1132, %v1134
      %v1136 = vrot.slane %v1126, %v1135
      %v1138 = vunpack.c.l.s4 1966171168
      %v1139 = vunpack.c.0.s8 %v1138
      %v1140 = vlaneseq
      %v1141 = vshrl.u32 %v1140, 7
      %v1142 = vsub.s32 %v1139, %v1141
      %v1143 = vrot.slane %v1127, %v1142
      %v1145 = vunpack.c.l.s4 1966171168
      %v1146 = vunpack.c.0.s8 %v1145
      %v1147 = vlaneseq
      %v1148 = vshrl.u32 %v1147, 7
      %v1149 = vsub.s32 %v1146, %v1148
      %v1150 = vrot.slane %v1128, %v1149
      %v1152 = vunpack.c.l.s4 1966171168
      %v1153 = vunpack.c.0.s8 %v1152
      %v1154 = vlaneseq
      %v1155 = vshrl.u32 %v1154, 7
      %v1156 = vsub.s32 %v1153, %v1155
      %v1157 = vrot.slane %v1129, %v1156
      %v1158 = vcombine.low %v1136, %v1143
      %v1159 = vcombine.low %v1150, %v1157
      %v1161 = vunpack.c.l.s4 1966171168
      %v1162 = vunpack.c.0.s8 %v1161
      %v1163 = vlaneseq
      %v1164 = vshrl.u32 %v1163, 7
      %v1165 = vsub.s32 %v1162, %v1164
      %v1166 = vrot.slane %v1158, %v1165
      %v1168 = vunpack.c.l.s4 1966171168
      %v1169 = vunpack.c.0.s8 %v1168
      %v1170 = vlaneseq
      %v1171 = vshrl.u32 %v1170, 7
      %v1172 = vsub.s32 %v1169, %v1171
      %v1173 = vrot.slane %v1159, %v1172
      %v1174 = vcombine.low %v1166, %v1173
      %v1176 = vunpack.c.l.s4 1966171168
      %v1177 = vunpack.c.0.s8 %v1176
      %v1178 = vlaneseq
      %v1179 = vshrl.u32 %v1178, 7
      %v1180 = vsub.s32 %v1177, %v1179
      %v1181 = vrot.slane %v1018, %v1180
      %v1183 = vunpack.c.l.s4 1966171168
      %v1184 = vunpack.c.0.s8 %v1183
      %v1185 = vlaneseq
      %v1186 = vshrl.u32 %v1185, 7
      %v1187 = vsub.s32 %v1184, %v1186
      %v1188 = vrot.slane %v1181, %v1187
      %v1193 = vpack.c.bf16 %v1125, %v1076
      %v1194 = vpack.c.bf16 %v1188, %v1174
      %v1195 = vsel %vm433, %v1194, 0
      %1198 = vrot.lane.b32.xlu0 %v1193, 16
      %v1199 = vpop.permute.xlu0 %1198
      %1200 = vrot.lane.b32.xlu0 %v1195, 16
      %v1201 = vpop.permute.xlu0 %1200
      %vm1204 = vcmask 195712
      %1205 = vst.msk [vmem:[#allocation2] sm:$0xff] %vm1204, %v1199
      %1206 = vst.msk [vmem:[#allocation2 + $0x8] sm:$0xff] %vm1204, %v1201
      %v1207 = vld [vmem:[%s822 + $0x1] sm:$0x1f]
      %v1208 = vld [vmem:[%s822 + $0x9] sm:$0x1f]
      %v1209 = vld [vmem:[%s822 + $0x11] sm:$0x1f]
      %v1210 = vld [vmem:[%s822 + $0x19] sm:$0x1f]
      %v1211 = vld [vmem:[%s822 + $0x21] sm:$0x1f]
      %v1217 = vcombine.high %v1207, %v1207
      %v1219 = vunpack.c.l.s4 1966171168
      %v1220 = vunpack.c.0.s8 %v1219
      %v1221 = vlaneseq
      %v1222 = vshrl.u32 %v1221, 7
      %v1223 = vsub.s32 %v1220, %v1222
      %v1224 = vrot.slane %v1207, %v1223
      %v1226 = vunpack.c.l.s4 1966171168
      %v1227 = vunpack.c.0.s8 %v1226
      %v1228 = vlaneseq
      %v1229 = vshrl.u32 %v1228, 7
      %v1230 = vsub.s32 %v1227, %v1229
      %v1231 = vrot.slane %v1217, %v1230
      %v1232 = vcombine.high %v1224, %v1224
      %v1234 = vunpack.c.l.s4 1966171168
      %v1235 = vunpack.c.0.s8 %v1234
      %v1236 = vlaneseq
      %v1237 = vshrl.u32 %v1236, 7
      %v1238 = vsub.s32 %v1235, %v1237
      %v1239 = vrot.slane %v1224, %v1238
      %v1241 = vunpack.c.l.s4 1966171168
      %v1242 = vunpack.c.0.s8 %v1241
      %v1243 = vlaneseq
      %v1244 = vshrl.u32 %v1243, 7
      %v1245 = vsub.s32 %v1242, %v1244
      %v1246 = vrot.slane %v1231, %v1245
      %v1248 = vunpack.c.l.s4 1966171168
      %v1249 = vunpack.c.0.s8 %v1248
      %v1250 = vlaneseq
      %v1251 = vshrl.u32 %v1250, 7
      %v1252 = vsub.s32 %v1249, %v1251
      %v1253 = vrot.slane %v1232, %v1252
      %v1254 = vcombine.high %v1239, %v1239
      %v1255 = vcombine.high %v1253, %v1253
      %v1256 = vcombine.high %v1208, %v1208
      %v1258 = vunpack.c.l.s4 1966171168
      %v1259 = vunpack.c.0.s8 %v1258
      %v1260 = vlaneseq
      %v1261 = vshrl.u32 %v1260, 7
      %v1262 = vsub.s32 %v1259, %v1261
      %v1263 = vrot.slane %v1208, %v1262
      %v1265 = vunpack.c.l.s4 1966171168
      %v1266 = vunpack.c.0.s8 %v1265
      %v1267 = vlaneseq
      %v1268 = vshrl.u32 %v1267, 7
      %v1269 = vsub.s32 %v1266, %v1268
      %v1270 = vrot.slane %v1256, %v1269
      %v1271 = vcombine.high %v1263, %v1263
      %v1273 = vunpack.c.l.s4 1966171168
      %v1274 = vunpack.c.0.s8 %v1273
      %v1275 = vlaneseq
      %v1276 = vshrl.u32 %v1275, 7
      %v1277 = vsub.s32 %v1274, %v1276
      %v1278 = vrot.slane %v1263, %v1277
      %v1280 = vunpack.c.l.s4 1966171168
      %v1281 = vunpack.c.0.s8 %v1280
      %v1282 = vlaneseq
      %v1283 = vshrl.u32 %v1282, 7
      %v1284 = vsub.s32 %v1281, %v1283
      %v1285 = vrot.slane %v1270, %v1284
      %v1287 = vunpack.c.l.s4 1966171168
      %v1288 = vunpack.c.0.s8 %v1287
      %v1289 = vlaneseq
      %v1290 = vshrl.u32 %v1289, 7
      %v1291 = vsub.s32 %v1288, %v1290
      %v1292 = vrot.slane %v1271, %v1291
      %v1293 = vcombine.high %v1278, %v1278
      %v1294 = vcombine.high %v1292, %v1292
      %v1295 = vcombine.high %v1209, %v1209
      %v1297 = vunpack.c.l.s4 1966171168
      %v1298 = vunpack.c.0.s8 %v1297
      %v1299 = vlaneseq
      %v1300 = vshrl.u32 %v1299, 7
      %v1301 = vsub.s32 %v1298, %v1300
      %v1302 = vrot.slane %v1209, %v1301
      %v1304 = vunpack.c.l.s4 1966171168
      %v1305 = vunpack.c.0.s8 %v1304
      %v1306 = vlaneseq
      %v1307 = vshrl.u32 %v1306, 7
      %v1308 = vsub.s32 %v1305, %v1307
      %v1309 = vrot.slane %v1295, %v1308
      %v1310 = vcombine.high %v1302, %v1302
      %v1312 = vunpack.c.l.s4 1966171168
      %v1313 = vunpack.c.0.s8 %v1312
      %v1314 = vlaneseq
      %v1315 = vshrl.u32 %v1314, 7
      %v1316 = vsub.s32 %v1313, %v1315
      %v1317 = vrot.slane %v1302, %v1316
      %v1319 = vunpack.c.l.s4 1966171168
      %v1320 = vunpack.c.0.s8 %v1319
      %v1321 = vlaneseq
      %v1322 = vshrl.u32 %v1321, 7
      %v1323 = vsub.s32 %v1320, %v1322
      %v1324 = vrot.slane %v1309, %v1323
      %v1326 = vunpack.c.l.s4 1966171168
      %v1327 = vunpack.c.0.s8 %v1326
      %v1328 = vlaneseq
      %v1329 = vshrl.u32 %v1328, 7
      %v1330 = vsub.s32 %v1327, %v1329
      %v1331 = vrot.slane %v1310, %v1330
      %v1332 = vcombine.high %v1317, %v1317
      %v1333 = vcombine.high %v1331, %v1331
      %v1334 = vcombine.high %v1210, %v1210
      %v1336 = vunpack.c.l.s4 1966171168
      %v1337 = vunpack.c.0.s8 %v1336
      %v1338 = vlaneseq
      %v1339 = vshrl.u32 %v1338, 7
      %v1340 = vsub.s32 %v1337, %v1339
      %v1341 = vrot.slane %v1210, %v1340
      %v1343 = vunpack.c.l.s4 1966171168
      %v1344 = vunpack.c.0.s8 %v1343
      %v1345 = vlaneseq
      %v1346 = vshrl.u32 %v1345, 7
      %v1347 = vsub.s32 %v1344, %v1346
      %v1348 = vrot.slane %v1334, %v1347
      %v1349 = vcombine.high %v1341, %v1341
      %v1351 = vunpack.c.l.s4 1966171168
      %v1352 = vunpack.c.0.s8 %v1351
      %v1353 = vlaneseq
      %v1354 = vshrl.u32 %v1353, 7
      %v1355 = vsub.s32 %v1352, %v1354
      %v1356 = vrot.slane %v1341, %v1355
      %v1358 = vunpack.c.l.s4 1966171168
      %v1359 = vunpack.c.0.s8 %v1358
      %v1360 = vlaneseq
      %v1361 = vshrl.u32 %v1360, 7
      %v1362 = vsub.s32 %v1359, %v1361
      %v1363 = vrot.slane %v1348, %v1362
      %v1365 = vunpack.c.l.s4 1966171168
      %v1366 = vunpack.c.0.s8 %v1365
      %v1367 = vlaneseq
      %v1368 = vshrl.u32 %v1367, 7
      %v1369 = vsub.s32 %v1366, %v1368
      %v1370 = vrot.slane %v1349, %v1369
      %v1371 = vcombine.high %v1356, %v1356
      %v1372 = vcombine.high %v1370, %v1370
      %v1373 = vcombine.high %v1211, %v1211
      %v1375 = vunpack.c.l.s4 1966171168
      %v1376 = vunpack.c.0.s8 %v1375
      %v1377 = vlaneseq
      %v1378 = vshrl.u32 %v1377, 7
      %v1379 = vsub.s32 %v1376, %v1378
      %v1380 = vrot.slane %v1211, %v1379
      %v1382 = vunpack.c.l.s4 1966171168
      %v1383 = vunpack.c.0.s8 %v1382
      %v1384 = vlaneseq
      %v1385 = vshrl.u32 %v1384, 7
      %v1386 = vsub.s32 %v1383, %v1385
      %v1387 = vrot.slane %v1373, %v1386
      %v1388 = vcombine.high %v1380, %v1380
      %v1390 = vunpack.c.l.s4 1966171168
      %v1391 = vunpack.c.0.s8 %v1390
      %v1392 = vlaneseq
      %v1393 = vshrl.u32 %v1392, 7
      %v1394 = vsub.s32 %v1391, %v1393
      %v1395 = vrot.slane %v1380, %v1394
      %v1397 = vunpack.c.l.s4 1966171168
      %v1398 = vunpack.c.0.s8 %v1397
      %v1399 = vlaneseq
      %v1400 = vshrl.u32 %v1399, 7
      %v1401 = vsub.s32 %v1398, %v1400
      %v1402 = vrot.slane %v1387, %v1401
      %v1404 = vunpack.c.l.s4 1966171168
      %v1405 = vunpack.c.0.s8 %v1404
      %v1406 = vlaneseq
      %v1407 = vshrl.u32 %v1406, 7
      %v1408 = vsub.s32 %v1405, %v1407
      %v1409 = vrot.slane %v1388, %v1408
      %v1410 = vcombine.high %v1395, %v1395
      %v1411 = vcombine.high %v1409, %v1409
      %v1412 = vcombine.low %v1239, %v1253
      %v1413 = vcombine.low %v1254, %v1255
      %v1414 = vcombine.low %v1246, %v1278
      %v1415 = vcombine.low %v1292, %v1293
      %v1417 = vunpack.c.l.s4 1966171168
      %v1418 = vunpack.c.0.s8 %v1417
      %v1419 = vlaneseq
      %v1420 = vshrl.u32 %v1419, 7
      %v1421 = vsub.s32 %v1418, %v1420
      %v1422 = vrot.slane %v1412, %v1421
      %v1424 = vunpack.c.l.s4 1966171168
      %v1425 = vunpack.c.0.s8 %v1424
      %v1426 = vlaneseq
      %v1427 = vshrl.u32 %v1426, 7
      %v1428 = vsub.s32 %v1425, %v1427
      %v1429 = vrot.slane %v1413, %v1428
      %v1431 = vunpack.c.l.s4 1966171168
      %v1432 = vunpack.c.0.s8 %v1431
      %v1433 = vlaneseq
      %v1434 = vshrl.u32 %v1433, 7
      %v1435 = vsub.s32 %v1432, %v1434
      %v1436 = vrot.slane %v1414, %v1435
      %v1438 = vunpack.c.l.s4 1966171168
      %v1439 = vunpack.c.0.s8 %v1438
      %v1440 = vlaneseq
      %v1441 = vshrl.u32 %v1440, 7
      %v1442 = vsub.s32 %v1439, %v1441
      %v1443 = vrot.slane %v1415, %v1442
      %v1444 = vcombine.low %v1422, %v1429
      %v1445 = vcombine.low %v1436, %v1443
      %v1447 = vunpack.c.l.s4 1966171168
      %v1448 = vunpack.c.0.s8 %v1447
      %v1449 = vlaneseq
      %v1450 = vshrl.u32 %v1449, 7
      %v1451 = vsub.s32 %v1448, %v1450
      %v1452 = vrot.slane %v1444, %v1451
      %v1454 = vunpack.c.l.s4 1966171168
      %v1455 = vunpack.c.0.s8 %v1454
      %v1456 = vlaneseq
      %v1457 = vshrl.u32 %v1456, 7
      %v1458 = vsub.s32 %v1455, %v1457
      %v1459 = vrot.slane %v1445, %v1458
      %v1460 = vcombine.low %v1452, %v1459
      %v1461 = vcombine.low %v1294, %v1285
      %v1462 = vcombine.low %v1317, %v1331
      %v1463 = vcombine.low %v1332, %v1333
      %v1464 = vcombine.low %v1324, %v1356
      %v1466 = vunpack.c.l.s4 1966171168
      %v1467 = vunpack.c.0.s8 %v1466
      %v1468 = vlaneseq
      %v1469 = vshrl.u32 %v1468, 7
      %v1470 = vsub.s32 %v1467, %v1469
      %v1471 = vrot.slane %v1461, %v1470
      %v1473 = vunpack.c.l.s4 1966171168
      %v1474 = vunpack.c.0.s8 %v1473
      %v1475 = vlaneseq
      %v1476 = vshrl.u32 %v1475, 7
      %v1477 = vsub.s32 %v1474, %v1476
      %v1478 = vrot.slane %v1462, %v1477
      %v1480 = vunpack.c.l.s4 1966171168
      %v1481 = vunpack.c.0.s8 %v1480
      %v1482 = vlaneseq
      %v1483 = vshrl.u32 %v1482, 7
      %v1484 = vsub.s32 %v1481, %v1483
      %v1485 = vrot.slane %v1463, %v1484
      %v1487 = vunpack.c.l.s4 1966171168
      %v1488 = vunpack.c.0.s8 %v1487
      %v1489 = vlaneseq
      %v1490 = vshrl.u32 %v1489, 7
      %v1491 = vsub.s32 %v1488, %v1490
      %v1492 = vrot.slane %v1464, %v1491
      %v1493 = vcombine.low %v1471, %v1478
      %v1494 = vcombine.low %v1485, %v1492
      %v1496 = vunpack.c.l.s4 1966171168
      %v1497 = vunpack.c.0.s8 %v1496
      %v1498 = vlaneseq
      %v1499 = vshrl.u32 %v1498, 7
      %v1500 = vsub.s32 %v1497, %v1499
      %v1501 = vrot.slane %v1493, %v1500
      %v1503 = vunpack.c.l.s4 1966171168
      %v1504 = vunpack.c.0.s8 %v1503
      %v1505 = vlaneseq
      %v1506 = vshrl.u32 %v1505, 7
      %v1507 = vsub.s32 %v1504, %v1506
      %v1508 = vrot.slane %v1494, %v1507
      %v1509 = vcombine.low %v1501, %v1508
      %v1510 = vcombine.low %v1370, %v1371
      %v1511 = vcombine.low %v1372, %v1363
      %v1512 = vcombine.low %v1395, %v1409
      %v1513 = vcombine.low %v1410, %v1411
      %v1515 = vunpack.c.l.s4 1966171168
      %v1516 = vunpack.c.0.s8 %v1515
      %v1517 = vlaneseq
      %v1518 = vshrl.u32 %v1517, 7
      %v1519 = vsub.s32 %v1516, %v1518
      %v1520 = vrot.slane %v1510, %v1519
      %v1522 = vunpack.c.l.s4 1966171168
      %v1523 = vunpack.c.0.s8 %v1522
      %v1524 = vlaneseq
      %v1525 = vshrl.u32 %v1524, 7
      %v1526 = vsub.s32 %v1523, %v1525
      %v1527 = vrot.slane %v1511, %v1526
      %v1529 = vunpack.c.l.s4 1966171168
      %v1530 = vunpack.c.0.s8 %v1529
      %v1531 = vlaneseq
      %v1532 = vshrl.u32 %v1531, 7
      %v1533 = vsub.s32 %v1530, %v1532
      %v1534 = vrot.slane %v1512, %v1533
      %v1536 = vunpack.c.l.s4 1966171168
      %v1537 = vunpack.c.0.s8 %v1536
      %v1538 = vlaneseq
      %v1539 = vshrl.u32 %v1538, 7
      %v1540 = vsub.s32 %v1537, %v1539
      %v1541 = vrot.slane %v1513, %v1540
      %v1542 = vcombine.low %v1520, %v1527
      %v1543 = vcombine.low %v1534, %v1541
      %v1545 = vunpack.c.l.s4 1966171168
      %v1546 = vunpack.c.0.s8 %v1545
      %v1547 = vlaneseq
      %v1548 = vshrl.u32 %v1547, 7
      %v1549 = vsub.s32 %v1546, %v1548
      %v1550 = vrot.slane %v1542, %v1549
      %v1552 = vunpack.c.l.s4 1966171168
      %v1553 = vunpack.c.0.s8 %v1552
      %v1554 = vlaneseq
      %v1555 = vshrl.u32 %v1554, 7
      %v1556 = vsub.s32 %v1553, %v1555
      %v1557 = vrot.slane %v1543, %v1556
      %v1558 = vcombine.low %v1550, %v1557
      %v1560 = vunpack.c.l.s4 1966171168
      %v1561 = vunpack.c.0.s8 %v1560
      %v1562 = vlaneseq
      %v1563 = vshrl.u32 %v1562, 7
      %v1564 = vsub.s32 %v1561, %v1563
      %v1565 = vrot.slane %v1402, %v1564
      %v1567 = vunpack.c.l.s4 1966171168
      %v1568 = vunpack.c.0.s8 %v1567
      %v1569 = vlaneseq
      %v1570 = vshrl.u32 %v1569, 7
      %v1571 = vsub.s32 %v1568, %v1570
      %v1572 = vrot.slane %v1565, %v1571
      %v1577 = vpack.c.bf16 %v1509, %v1460
      %v1578 = vpack.c.bf16 %v1572, %v1558
      %v1579 = vsel %vm433, %v1578, 0
      %1582 = vrot.lane.b32.xlu0 %v1577, 24
      %v1583 = vpop.permute.xlu0 %1582
      %1584 = vrot.lane.b32.xlu0 %v1579, 24
      %v1585 = vpop.permute.xlu0 %1584
      %vm1588 = vcmask 261312
      %1589 = vst.msk [vmem:[#allocation2] sm:$0xff] %vm1588, %v1583
      %1590 = vst.msk [vmem:[#allocation2 + $0x8] sm:$0xff] %vm1588, %v1585
      %s1591 = scalar_lea.vmem [#allocation3], 16
      %v1592 = vld [vmem:[%s1591] sm:$0x1f]
      %v1593 = vld [vmem:[%s1591 + $0x8] sm:$0x1f]
      %v1594 = vld [vmem:[%s1591 + $0x10] sm:$0x1f]
      %v1595 = vld [vmem:[%s1591 + $0x18] sm:$0x1f]
      %v1596 = vld [vmem:[%s1591 + $0x20] sm:$0x1f]
      %v1602 = vcombine.high %v1592, %v1592
      %v1604 = vunpack.c.l.s4 1966171168
      %v1605 = vunpack.c.0.s8 %v1604
      %v1606 = vlaneseq
      %v1607 = vshrl.u32 %v1606, 7
      %v1608 = vsub.s32 %v1605, %v1607
      %v1609 = vrot.slane %v1592, %v1608
      %v1611 = vunpack.c.l.s4 1966171168
      %v1612 = vunpack.c.0.s8 %v1611
      %v1613 = vlaneseq
      %v1614 = vshrl.u32 %v1613, 7
      %v1615 = vsub.s32 %v1612, %v1614
      %v1616 = vrot.slane %v1602, %v1615
      %v1617 = vcombine.high %v1609, %v1609
      %v1619 = vunpack.c.l.s4 1966171168
      %v1620 = vunpack.c.0.s8 %v1619
      %v1621 = vlaneseq
      %v1622 = vshrl.u32 %v1621, 7
      %v1623 = vsub.s32 %v1620, %v1622
      %v1624 = vrot.slane %v1609, %v1623
      %v1626 = vunpack.c.l.s4 1966171168
      %v1627 = vunpack.c.0.s8 %v1626
      %v1628 = vlaneseq
      %v1629 = vshrl.u32 %v1628, 7
      %v1630 = vsub.s32 %v1627, %v1629
      %v1631 = vrot.slane %v1616, %v1630
      %v1633 = vunpack.c.l.s4 1966171168
      %v1634 = vunpack.c.0.s8 %v1633
      %v1635 = vlaneseq
      %v1636 = vshrl.u32 %v1635, 7
      %v1637 = vsub.s32 %v1634, %v1636
      %v1638 = vrot.slane %v1617, %v1637
      %v1639 = vcombine.high %v1624, %v1624
      %v1640 = vcombine.high %v1638, %v1638
      %v1641 = vcombine.high %v1593, %v1593
      %v1643 = vunpack.c.l.s4 1966171168
      %v1644 = vunpack.c.0.s8 %v1643
      %v1645 = vlaneseq
      %v1646 = vshrl.u32 %v1645, 7
      %v1647 = vsub.s32 %v1644, %v1646
      %v1648 = vrot.slane %v1593, %v1647
      %v1650 = vunpack.c.l.s4 1966171168
      %v1651 = vunpack.c.0.s8 %v1650
      %v1652 = vlaneseq
      %v1653 = vshrl.u32 %v1652, 7
      %v1654 = vsub.s32 %v1651, %v1653
      %v1655 = vrot.slane %v1641, %v1654
      %v1656 = vcombine.high %v1648, %v1648
      %v1658 = vunpack.c.l.s4 1966171168
      %v1659 = vunpack.c.0.s8 %v1658
      %v1660 = vlaneseq
      %v1661 = vshrl.u32 %v1660, 7
      %v1662 = vsub.s32 %v1659, %v1661
      %v1663 = vrot.slane %v1648, %v1662
      %v1665 = vunpack.c.l.s4 1966171168
      %v1666 = vunpack.c.0.s8 %v1665
      %v1667 = vlaneseq
      %v1668 = vshrl.u32 %v1667, 7
      %v1669 = vsub.s32 %v1666, %v1668
      %v1670 = vrot.slane %v1655, %v1669
      %v1672 = vunpack.c.l.s4 1966171168
      %v1673 = vunpack.c.0.s8 %v1672
      %v1674 = vlaneseq
      %v1675 = vshrl.u32 %v1674, 7
      %v1676 = vsub.s32 %v1673, %v1675
      %v1677 = vrot.slane %v1656, %v1676
      %v1678 = vcombine.high %v1663, %v1663
      %v1679 = vcombine.high %v1677, %v1677
      %v1680 = vcombine.high %v1594, %v1594
      %v1682 = vunpack.c.l.s4 1966171168
      %v1683 = vunpack.c.0.s8 %v1682
      %v1684 = vlaneseq
      %v1685 = vshrl.u32 %v1684, 7
      %v1686 = vsub.s32 %v1683, %v1685
      %v1687 = vrot.slane %v1594, %v1686
      %v1689 = vunpack.c.l.s4 1966171168
      %v1690 = vunpack.c.0.s8 %v1689
      %v1691 = vlaneseq
      %v1692 = vshrl.u32 %v1691, 7
      %v1693 = vsub.s32 %v1690, %v1692
      %v1694 = vrot.slane %v1680, %v1693
      %v1695 = vcombine.high %v1687, %v1687
      %v1697 = vunpack.c.l.s4 1966171168
      %v1698 = vunpack.c.0.s8 %v1697
      %v1699 = vlaneseq
      %v1700 = vshrl.u32 %v1699, 7
      %v1701 = vsub.s32 %v1698, %v1700
      %v1702 = vrot.slane %v1687, %v1701
      %v1704 = vunpack.c.l.s4 1966171168
      %v1705 = vunpack.c.0.s8 %v1704
      %v1706 = vlaneseq
      %v1707 = vshrl.u32 %v1706, 7
      %v1708 = vsub.s32 %v1705, %v1707
      %v1709 = vrot.slane %v1694, %v1708
      %v1711 = vunpack.c.l.s4 1966171168
      %v1712 = vunpack.c.0.s8 %v1711
      %v1713 = vlaneseq
      %v1714 = vshrl.u32 %v1713, 7
      %v1715 = vsub.s32 %v1712, %v1714
      %v1716 = vrot.slane %v1695, %v1715
      %v1717 = vcombine.high %v1702, %v1702
      %v1718 = vcombine.high %v1716, %v1716
      %v1719 = vcombine.high %v1595, %v1595
      %v1721 = vunpack.c.l.s4 1966171168
      %v1722 = vunpack.c.0.s8 %v1721
      %v1723 = vlaneseq
      %v1724 = vshrl.u32 %v1723, 7
      %v1725 = vsub.s32 %v1722, %v1724
      %v1726 = vrot.slane %v1595, %v1725
      %v1728 = vunpack.c.l.s4 1966171168
      %v1729 = vunpack.c.0.s8 %v1728
      %v1730 = vlaneseq
      %v1731 = vshrl.u32 %v1730, 7
      %v1732 = vsub.s32 %v1729, %v1731
      %v1733 = vrot.slane %v1719, %v1732
      %v1734 = vcombine.high %v1726, %v1726
      %v1736 = vunpack.c.l.s4 1966171168
      %v1737 = vunpack.c.0.s8 %v1736
      %v1738 = vlaneseq
      %v1739 = vshrl.u32 %v1738, 7
      %v1740 = vsub.s32 %v1737, %v1739
      %v1741 = vrot.slane %v1726, %v1740
      %v1743 = vunpack.c.l.s4 1966171168
      %v1744 = vunpack.c.0.s8 %v1743
      %v1745 = vlaneseq
      %v1746 = vshrl.u32 %v1745, 7
      %v1747 = vsub.s32 %v1744, %v1746
      %v1748 = vrot.slane %v1733, %v1747
      %v1750 = vunpack.c.l.s4 1966171168
      %v1751 = vunpack.c.0.s8 %v1750
      %v1752 = vlaneseq
      %v1753 = vshrl.u32 %v1752, 7
      %v1754 = vsub.s32 %v1751, %v1753
      %v1755 = vrot.slane %v1734, %v1754
      %v1756 = vcombine.high %v1741, %v1741
      %v1757 = vcombine.high %v1755, %v1755
      %v1758 = vcombine.high %v1596, %v1596
      %v1760 = vunpack.c.l.s4 1966171168
      %v1761 = vunpack.c.0.s8 %v1760
      %v1762 = vlaneseq
      %v1763 = vshrl.u32 %v1762, 7
      %v1764 = vsub.s32 %v1761, %v1763
      %v1765 = vrot.slane %v1596, %v1764
      %v1767 = vunpack.c.l.s4 1966171168
      %v1768 = vunpack.c.0.s8 %v1767
      %v1769 = vlaneseq
      %v1770 = vshrl.u32 %v1769, 7
      %v1771 = vsub.s32 %v1768, %v1770
      %v1772 = vrot.slane %v1758, %v1771
      %v1773 = vcombine.high %v1765, %v1765
      %v1775 = vunpack.c.l.s4 1966171168
      %v1776 = vunpack.c.0.s8 %v1775
      %v1777 = vlaneseq
      %v1778 = vshrl.u32 %v1777, 7
      %v1779 = vsub.s32 %v1776, %v1778
      %v1780 = vrot.slane %v1765, %v1779
      %v1782 = vunpack.c.l.s4 1966171168
      %v1783 = vunpack.c.0.s8 %v1782
      %v1784 = vlaneseq
      %v1785 = vshrl.u32 %v1784, 7
      %v1786 = vsub.s32 %v1783, %v1785
      %v1787 = vrot.slane %v1772, %v1786
      %v1789 = vunpack.c.l.s4 1966171168
      %v1790 = vunpack.c.0.s8 %v1789
      %v1791 = vlaneseq
      %v1792 = vshrl.u32 %v1791, 7
      %v1793 = vsub.s32 %v1790, %v1792
      %v1794 = vrot.slane %v1773, %v1793
      %v1795 = vcombine.high %v1780, %v1780
      %v1796 = vcombine.high %v1794, %v1794
      %v1797 = vcombine.low %v1624, %v1638
      %v1798 = vcombine.low %v1639, %v1640
      %v1799 = vcombine.low %v1631, %v1663
      %v1800 = vcombine.low %v1677, %v1678
      %v1802 = vunpack.c.l.s4 1966171168
      %v1803 = vunpack.c.0.s8 %v1802
      %v1804 = vlaneseq
      %v1805 = vshrl.u32 %v1804, 7
      %v1806 = vsub.s32 %v1803, %v1805
      %v1807 = vrot.slane %v1797, %v1806
      %v1809 = vunpack.c.l.s4 1966171168
      %v1810 = vunpack.c.0.s8 %v1809
      %v1811 = vlaneseq
      %v1812 = vshrl.u32 %v1811, 7
      %v1813 = vsub.s32 %v1810, %v1812
      %v1814 = vrot.slane %v1798, %v1813
      %v1816 = vunpack.c.l.s4 1966171168
      %v1817 = vunpack.c.0.s8 %v1816
      %v1818 = vlaneseq
      %v1819 = vshrl.u32 %v1818, 7
      %v1820 = vsub.s32 %v1817, %v1819
      %v1821 = vrot.slane %v1799, %v1820
      %v1823 = vunpack.c.l.s4 1966171168
      %v1824 = vunpack.c.0.s8 %v1823
      %v1825 = vlaneseq
      %v1826 = vshrl.u32 %v1825, 7
      %v1827 = vsub.s32 %v1824, %v1826
      %v1828 = vrot.slane %v1800, %v1827
      %v1829 = vcombine.low %v1807, %v1814
      %v1830 = vcombine.low %v1821, %v1828
      %v1832 = vunpack.c.l.s4 1966171168
      %v1833 = vunpack.c.0.s8 %v1832
      %v1834 = vlaneseq
      %v1835 = vshrl.u32 %v1834, 7
      %v1836 = vsub.s32 %v1833, %v1835
      %v1837 = vrot.slane %v1829, %v1836
      %v1839 = vunpack.c.l.s4 1966171168
      %v1840 = vunpack.c.0.s8 %v1839
      %v1841 = vlaneseq
      %v1842 = vshrl.u32 %v1841, 7
      %v1843 = vsub.s32 %v1840, %v1842
      %v1844 = vrot.slane %v1830, %v1843
      %v1845 = vcombine.low %v1837, %v1844
      %v1846 = vcombine.low %v1679, %v1670
      %v1847 = vcombine.low %v1702, %v1716
      %v1848 = vcombine.low %v1717, %v1718
      %v1849 = vcombine.low %v1709, %v1741
      %v1851 = vunpack.c.l.s4 1966171168
      %v1852 = vunpack.c.0.s8 %v1851
      %v1853 = vlaneseq
      %v1854 = vshrl.u32 %v1853, 7
      %v1855 = vsub.s32 %v1852, %v1854
      %v1856 = vrot.slane %v1846, %v1855
      %v1858 = vunpack.c.l.s4 1966171168
      %v1859 = vunpack.c.0.s8 %v1858
      %v1860 = vlaneseq
      %v1861 = vshrl.u32 %v1860, 7
      %v1862 = vsub.s32 %v1859, %v1861
      %v1863 = vrot.slane %v1847, %v1862
      %v1865 = vunpack.c.l.s4 1966171168
      %v1866 = vunpack.c.0.s8 %v1865
      %v1867 = vlaneseq
      %v1868 = vshrl.u32 %v1867, 7
      %v1869 = vsub.s32 %v1866, %v1868
      %v1870 = vrot.slane %v1848, %v1869
      %v1872 = vunpack.c.l.s4 1966171168
      %v1873 = vunpack.c.0.s8 %v1872
      %v1874 = vlaneseq
      %v1875 = vshrl.u32 %v1874, 7
      %v1876 = vsub.s32 %v1873, %v1875
      %v1877 = vrot.slane %v1849, %v1876
      %v1878 = vcombine.low %v1856, %v1863
      %v1879 = vcombine.low %v1870, %v1877
      %v1881 = vunpack.c.l.s4 1966171168
      %v1882 = vunpack.c.0.s8 %v1881
      %v1883 = vlaneseq
      %v1884 = vshrl.u32 %v1883, 7
      %v1885 = vsub.s32 %v1882, %v1884
      %v1886 = vrot.slane %v1878, %v1885
      %v1888 = vunpack.c.l.s4 1966171168
      %v1889 = vunpack.c.0.s8 %v1888
      %v1890 = vlaneseq
      %v1891 = vshrl.u32 %v1890, 7
      %v1892 = vsub.s32 %v1889, %v1891
      %v1893 = vrot.slane %v1879, %v1892
      %v1894 = vcombine.low %v1886, %v1893
      %v1895 = vcombine.low %v1755, %v1756
      %v1896 = vcombine.low %v1757, %v1748
      %v1897 = vcombine.low %v1780, %v1794
      %v1898 = vcombine.low %v1795, %v1796
      %v1900 = vunpack.c.l.s4 1966171168
      %v1901 = vunpack.c.0.s8 %v1900
      %v1902 = vlaneseq
      %v1903 = vshrl.u32 %v1902, 7
      %v1904 = vsub.s32 %v1901, %v1903
      %v1905 = vrot.slane %v1895, %v1904
      %v1907 = vunpack.c.l.s4 1966171168
      %v1908 = vunpack.c.0.s8 %v1907
      %v1909 = vlaneseq
      %v1910 = vshrl.u32 %v1909, 7
      %v1911 = vsub.s32 %v1908, %v1910
      %v1912 = vrot.slane %v1896, %v1911
      %v1914 = vunpack.c.l.s4 1966171168
      %v1915 = vunpack.c.0.s8 %v1914
      %v1916 = vlaneseq
      %v1917 = vshrl.u32 %v1916, 7
      %v1918 = vsub.s32 %v1915, %v1917
      %v1919 = vrot.slane %v1897, %v1918
      %v1921 = vunpack.c.l.s4 1966171168
      %v1922 = vunpack.c.0.s8 %v1921
      %v1923 = vlaneseq
      %v1924 = vshrl.u32 %v1923, 7
      %v1925 = vsub.s32 %v1922, %v1924
      %v1926 = vrot.slane %v1898, %v1925
      %v1927 = vcombine.low %v1905, %v1912
      %v1928 = vcombine.low %v1919, %v1926
      %v1930 = vunpack.c.l.s4 1966171168
      %v1931 = vunpack.c.0.s8 %v1930
      %v1932 = vlaneseq
      %v1933 = vshrl.u32 %v1932, 7
      %v1934 = vsub.s32 %v1931, %v1933
      %v1935 = vrot.slane %v1927, %v1934
      %v1937 = vunpack.c.l.s4 1966171168
      %v1938 = vunpack.c.0.s8 %v1937
      %v1939 = vlaneseq
      %v1940 = vshrl.u32 %v1939, 7
      %v1941 = vsub.s32 %v1938, %v1940
      %v1942 = vrot.slane %v1928, %v1941
      %v1943 = vcombine.low %v1935, %v1942
      %v1945 = vunpack.c.l.s4 1966171168
      %v1946 = vunpack.c.0.s8 %v1945
      %v1947 = vlaneseq
      %v1948 = vshrl.u32 %v1947, 7
      %v1949 = vsub.s32 %v1946, %v1948
      %v1950 = vrot.slane %v1787, %v1949
      %v1952 = vunpack.c.l.s4 1966171168
      %v1953 = vunpack.c.0.s8 %v1952
      %v1954 = vlaneseq
      %v1955 = vshrl.u32 %v1954, 7
      %v1956 = vsub.s32 %v1953, %v1955
      %v1957 = vrot.slane %v1950, %v1956
      %v1962 = vpack.c.bf16 %v1894, %v1845
      %v1963 = vpack.c.bf16 %v1957, %v1943
      %v1964 = vsel %vm433, %v1963, 0
      %1967 = vrot.lane.b32.xlu0 %v1962, 32
      %v1968 = vpop.permute.xlu0 %1967
      %1969 = vrot.lane.b32.xlu0 %v1964, 32
      %v1970 = vpop.permute.xlu0 %1969
      %vm1973 = vcmask 326912
      %1974 = vst.msk [vmem:[#allocation2] sm:$0xff] %vm1973, %v1968
      %1975 = vst.msk [vmem:[#allocation2 + $0x8] sm:$0xff] %vm1973, %v1970
      %v1976 = vld [vmem:[%s1591 + $0x1] sm:$0x1f]
      %v1977 = vld [vmem:[%s1591 + $0x9] sm:$0x1f]
      %v1978 = vld [vmem:[%s1591 + $0x11] sm:$0x1f]
      %v1979 = vld [vmem:[%s1591 + $0x19] sm:$0x1f]
      %v1980 = vld [vmem:[%s1591 + $0x21] sm:$0x1f]
      %v1986 = vcombine.high %v1976, %v1976
      %v1988 = vunpack.c.l.s4 1966171168
      %v1989 = vunpack.c.0.s8 %v1988
      %v1990 = vlaneseq
      %v1991 = vshrl.u32 %v1990, 7
      %v1992 = vsub.s32 %v1989, %v1991
      %v1993 = vrot.slane %v1976, %v1992
      %v1995 = vunpack.c.l.s4 1966171168
      %v1996 = vunpack.c.0.s8 %v1995
      %v1997 = vlaneseq
      %v1998 = vshrl.u32 %v1997, 7
      %v1999 = vsub.s32 %v1996, %v1998
      %v2000 = vrot.slane %v1986, %v1999
      %v2001 = vcombine.high %v1993, %v1993
      %v2003 = vunpack.c.l.s4 1966171168
      %v2004 = vunpack.c.0.s8 %v2003
      %v2005 = vlaneseq
      %v2006 = vshrl.u32 %v2005, 7
      %v2007 = vsub.s32 %v2004, %v2006
      %v2008 = vrot.slane %v1993, %v2007
      %v2010 = vunpack.c.l.s4 1966171168
      %v2011 = vunpack.c.0.s8 %v2010
      %v2012 = vlaneseq
      %v2013 = vshrl.u32 %v2012, 7
      %v2014 = vsub.s32 %v2011, %v2013
      %v2015 = vrot.slane %v2000, %v2014
      %v2017 = vunpack.c.l.s4 1966171168
      %v2018 = vunpack.c.0.s8 %v2017
      %v2019 = vlaneseq
      %v2020 = vshrl.u32 %v2019, 7
      %v2021 = vsub.s32 %v2018, %v2020
      %v2022 = vrot.slane %v2001, %v2021
      %v2023 = vcombine.high %v2008, %v2008
      %v2024 = vcombine.high %v2022, %v2022
      %v2025 = vcombine.high %v1977, %v1977
      %v2027 = vunpack.c.l.s4 1966171168
      %v2028 = vunpack.c.0.s8 %v2027
      %v2029 = vlaneseq
      %v2030 = vshrl.u32 %v2029, 7
      %v2031 = vsub.s32 %v2028, %v2030
      %v2032 = vrot.slane %v1977, %v2031
      %v2034 = vunpack.c.l.s4 1966171168
      %v2035 = vunpack.c.0.s8 %v2034
      %v2036 = vlaneseq
      %v2037 = vshrl.u32 %v2036, 7
      %v2038 = vsub.s32 %v2035, %v2037
      %v2039 = vrot.slane %v2025, %v2038
      %v2040 = vcombine.high %v2032, %v2032
      %v2042 = vunpack.c.l.s4 1966171168
      %v2043 = vunpack.c.0.s8 %v2042
      %v2044 = vlaneseq
      %v2045 = vshrl.u32 %v2044, 7
      %v2046 = vsub.s32 %v2043, %v2045
      %v2047 = vrot.slane %v2032, %v2046
      %v2049 = vunpack.c.l.s4 1966171168
      %v2050 = vunpack.c.0.s8 %v2049
      %v2051 = vlaneseq
      %v2052 = vshrl.u32 %v2051, 7
      %v2053 = vsub.s32 %v2050, %v2052
      %v2054 = vrot.slane %v2039, %v2053
      %v2056 = vunpack.c.l.s4 1966171168
      %v2057 = vunpack.c.0.s8 %v2056
      %v2058 = vlaneseq
      %v2059 = vshrl.u32 %v2058, 7
      %v2060 = vsub.s32 %v2057, %v2059
      %v2061 = vrot.slane %v2040, %v2060
      %v2062 = vcombine.high %v2047, %v2047
      %v2063 = vcombine.high %v2061, %v2061
      %v2064 = vcombine.high %v1978, %v1978
      %v2066 = vunpack.c.l.s4 1966171168
      %v2067 = vunpack.c.0.s8 %v2066
      %v2068 = vlaneseq
      %v2069 = vshrl.u32 %v2068, 7
      %v2070 = vsub.s32 %v2067, %v2069
      %v2071 = vrot.slane %v1978, %v2070
      %v2073 = vunpack.c.l.s4 1966171168
      %v2074 = vunpack.c.0.s8 %v2073
      %v2075 = vlaneseq
      %v2076 = vshrl.u32 %v2075, 7
      %v2077 = vsub.s32 %v2074, %v2076
      %v2078 = vrot.slane %v2064, %v2077
      %v2079 = vcombine.high %v2071, %v2071
      %v2081 = vunpack.c.l.s4 1966171168
      %v2082 = vunpack.c.0.s8 %v2081
      %v2083 = vlaneseq
      %v2084 = vshrl.u32 %v2083, 7
      %v2085 = vsub.s32 %v2082, %v2084
      %v2086 = vrot.slane %v2071, %v2085
      %v2088 = vunpack.c.l.s4 1966171168
      %v2089 = vunpack.c.0.s8 %v2088
      %v2090 = vlaneseq
      %v2091 = vshrl.u32 %v2090, 7
      %v2092 = vsub.s32 %v2089, %v2091
      %v2093 = vrot.slane %v2078, %v2092
      %v2095 = vunpack.c.l.s4 1966171168
      %v2096 = vunpack.c.0.s8 %v2095
      %v2097 = vlaneseq
      %v2098 = vshrl.u32 %v2097, 7
      %v2099 = vsub.s32 %v2096, %v2098
      %v2100 = vrot.slane %v2079, %v2099
      %v2101 = vcombine.high %v2086, %v2086
      %v2102 = vcombine.high %v2100, %v2100
      %v2103 = vcombine.high %v1979, %v1979
      %v2105 = vunpack.c.l.s4 1966171168
      %v2106 = vunpack.c.0.s8 %v2105
      %v2107 = vlaneseq
      %v2108 = vshrl.u32 %v2107, 7
      %v2109 = vsub.s32 %v2106, %v2108
      %v2110 = vrot.slane %v1979, %v2109
      %v2112 = vunpack.c.l.s4 1966171168
      %v2113 = vunpack.c.0.s8 %v2112
      %v2114 = vlaneseq
      %v2115 = vshrl.u32 %v2114, 7
      %v2116 = vsub.s32 %v2113, %v2115
      %v2117 = vrot.slane %v2103, %v2116
      %v2118 = vcombine.high %v2110, %v2110
      %v2120 = vunpack.c.l.s4 1966171168
      %v2121 = vunpack.c.0.s8 %v2120
      %v2122 = vlaneseq
      %v2123 = vshrl.u32 %v2122, 7
      %v2124 = vsub.s32 %v2121, %v2123
      %v2125 = vrot.slane %v2110, %v2124
      %v2127 = vunpack.c.l.s4 1966171168
      %v2128 = vunpack.c.0.s8 %v2127
      %v2129 = vlaneseq
      %v2130 = vshrl.u32 %v2129, 7
      %v2131 = vsub.s32 %v2128, %v2130
      %v2132 = vrot.slane %v2117, %v2131
      %v2134 = vunpack.c.l.s4 1966171168
      %v2135 = vunpack.c.0.s8 %v2134
      %v2136 = vlaneseq
      %v2137 = vshrl.u32 %v2136, 7
      %v2138 = vsub.s32 %v2135, %v2137
      %v2139 = vrot.slane %v2118, %v2138
      %v2140 = vcombine.high %v2125, %v2125
      %v2141 = vcombine.high %v2139, %v2139
      %v2142 = vcombine.high %v1980, %v1980
      %v2144 = vunpack.c.l.s4 1966171168
      %v2145 = vunpack.c.0.s8 %v2144
      %v2146 = vlaneseq
      %v2147 = vshrl.u32 %v2146, 7
      %v2148 = vsub.s32 %v2145, %v2147
      %v2149 = vrot.slane %v1980, %v2148
      %v2151 = vunpack.c.l.s4 1966171168
      %v2152 = vunpack.c.0.s8 %v2151
      %v2153 = vlaneseq
      %v2154 = vshrl.u32 %v2153, 7
      %v2155 = vsub.s32 %v2152, %v2154
      %v2156 = vrot.slane %v2142, %v2155
      %v2157 = vcombine.high %v2149, %v2149
      %v2159 = vunpack.c.l.s4 1966171168
      %v2160 = vunpack.c.0.s8 %v2159
      %v2161 = vlaneseq
      %v2162 = vshrl.u32 %v2161, 7
      %v2163 = vsub.s32 %v2160, %v2162
      %v2164 = vrot.slane %v2149, %v2163
      %v2166 = vunpack.c.l.s4 1966171168
      %v2167 = vunpack.c.0.s8 %v2166
      %v2168 = vlaneseq
      %v2169 = vshrl.u32 %v2168, 7
      %v2170 = vsub.s32 %v2167, %v2169
      %v2171 = vrot.slane %v2156, %v2170
      %v2173 = vunpack.c.l.s4 1966171168
      %v2174 = vunpack.c.0.s8 %v2173
      %v2175 = vlaneseq
      %v2176 = vshrl.u32 %v2175, 7
      %v2177 = vsub.s32 %v2174, %v2176
      %v2178 = vrot.slane %v2157, %v2177
      %v2179 = vcombine.high %v2164, %v2164
      %v2180 = vcombine.high %v2178, %v2178
      %v2181 = vcombine.low %v2008, %v2022
      %v2182 = vcombine.low %v2023, %v2024
      %v2183 = vcombine.low %v2015, %v2047
      %v2184 = vcombine.low %v2061, %v2062
      %v2186 = vunpack.c.l.s4 1966171168
      %v2187 = vunpack.c.0.s8 %v2186
      %v2188 = vlaneseq
      %v2189 = vshrl.u32 %v2188, 7
      %v2190 = vsub.s32 %v2187, %v2189
      %v2191 = vrot.slane %v2181, %v2190
      %v2193 = vunpack.c.l.s4 1966171168
      %v2194 = vunpack.c.0.s8 %v2193
      %v2195 = vlaneseq
      %v2196 = vshrl.u32 %v2195, 7
      %v2197 = vsub.s32 %v2194, %v2196
      %v2198 = vrot.slane %v2182, %v2197
      %v2200 = vunpack.c.l.s4 1966171168
      %v2201 = vunpack.c.0.s8 %v2200
      %v2202 = vlaneseq
      %v2203 = vshrl.u32 %v2202, 7
      %v2204 = vsub.s32 %v2201, %v2203
      %v2205 = vrot.slane %v2183, %v2204
      %v2207 = vunpack.c.l.s4 1966171168
      %v2208 = vunpack.c.0.s8 %v2207
      %v2209 = vlaneseq
      %v2210 = vshrl.u32 %v2209, 7
      %v2211 = vsub.s32 %v2208, %v2210
      %v2212 = vrot.slane %v2184, %v2211
      %v2213 = vcombine.low %v2191, %v2198
      %v2214 = vcombine.low %v2205, %v2212
      %v2216 = vunpack.c.l.s4 1966171168
      %v2217 = vunpack.c.0.s8 %v2216
      %v2218 = vlaneseq
      %v2219 = vshrl.u32 %v2218, 7
      %v2220 = vsub.s32 %v2217, %v2219
      %v2221 = vrot.slane %v2213, %v2220
      %v2223 = vunpack.c.l.s4 1966171168
      %v2224 = vunpack.c.0.s8 %v2223
      %v2225 = vlaneseq
      %v2226 = vshrl.u32 %v2225, 7
      %v2227 = vsub.s32 %v2224, %v2226
      %v2228 = vrot.slane %v2214, %v2227
      %v2229 = vcombine.low %v2221, %v2228
      %v2230 = vcombine.low %v2063, %v2054
      %v2231 = vcombine.low %v2086, %v2100
      %v2232 = vcombine.low %v2101, %v2102
      %v2233 = vcombine.low %v2093, %v2125
      %v2235 = vunpack.c.l.s4 1966171168
      %v2236 = vunpack.c.0.s8 %v2235
      %v2237 = vlaneseq
      %v2238 = vshrl.u32 %v2237, 7
      %v2239 = vsub.s32 %v2236, %v2238
      %v2240 = vrot.slane %v2230, %v2239
      %v2242 = vunpack.c.l.s4 1966171168
      %v2243 = vunpack.c.0.s8 %v2242
      %v2244 = vlaneseq
      %v2245 = vshrl.u32 %v2244, 7
      %v2246 = vsub.s32 %v2243, %v2245
      %v2247 = vrot.slane %v2231, %v2246
      %v2249 = vunpack.c.l.s4 1966171168
      %v2250 = vunpack.c.0.s8 %v2249
      %v2251 = vlaneseq
      %v2252 = vshrl.u32 %v2251, 7
      %v2253 = vsub.s32 %v2250, %v2252
      %v2254 = vrot.slane %v2232, %v2253
      %v2256 = vunpack.c.l.s4 1966171168
      %v2257 = vunpack.c.0.s8 %v2256
      %v2258 = vlaneseq
      %v2259 = vshrl.u32 %v2258, 7
      %v2260 = vsub.s32 %v2257, %v2259
      %v2261 = vrot.slane %v2233, %v2260
      %v2262 = vcombine.low %v2240, %v2247
      %v2263 = vcombine.low %v2254, %v2261
      %v2265 = vunpack.c.l.s4 1966171168
      %v2266 = vunpack.c.0.s8 %v2265
      %v2267 = vlaneseq
      %v2268 = vshrl.u32 %v2267, 7
      %v2269 = vsub.s32 %v2266, %v2268
      %v2270 = vrot.slane %v2262, %v2269
      %v2272 = vunpack.c.l.s4 1966171168
      %v2273 = vunpack.c.0.s8 %v2272
      %v2274 = vlaneseq
      %v2275 = vshrl.u32 %v2274, 7
      %v2276 = vsub.s32 %v2273, %v2275
      %v2277 = vrot.slane %v2263, %v2276
      %v2278 = vcombine.low %v2270, %v2277
      %v2279 = vcombine.low %v2139, %v2140
      %v2280 = vcombine.low %v2141, %v2132
      %v2281 = vcombine.low %v2164, %v2178
      %v2282 = vcombine.low %v2179, %v2180
      %v2284 = vunpack.c.l.s4 1966171168
      %v2285 = vunpack.c.0.s8 %v2284
      %v2286 = vlaneseq
      %v2287 = vshrl.u32 %v2286, 7
      %v2288 = vsub.s32 %v2285, %v2287
      %v2289 = vrot.slane %v2279, %v2288
      %v2291 = vunpack.c.l.s4 1966171168
      %v2292 = vunpack.c.0.s8 %v2291
      %v2293 = vlaneseq
      %v2294 = vshrl.u32 %v2293, 7
      %v2295 = vsub.s32 %v2292, %v2294
      %v2296 = vrot.slane %v2280, %v2295
      %v2298 = vunpack.c.l.s4 1966171168
      %v2299 = vunpack.c.0.s8 %v2298
      %v2300 = vlaneseq
      %v2301 = vshrl.u32 %v2300, 7
      %v2302 = vsub.s32 %v2299, %v2301
      %v2303 = vrot.slane %v2281, %v2302
      %v2305 = vunpack.c.l.s4 1966171168
      %v2306 = vunpack.c.0.s8 %v2305
      %v2307 = vlaneseq
      %v2308 = vshrl.u32 %v2307, 7
      %v2309 = vsub.s32 %v2306, %v2308
      %v2310 = vrot.slane %v2282, %v2309
      %v2311 = vcombine.low %v2289, %v2296
      %v2312 = vcombine.low %v2303, %v2310
      %v2314 = vunpack.c.l.s4 1966171168
      %v2315 = vunpack.c.0.s8 %v2314
      %v2316 = vlaneseq
      %v2317 = vshrl.u32 %v2316, 7
      %v2318 = vsub.s32 %v2315, %v2317
      %v2319 = vrot.slane %v2311, %v2318
      %v2321 = vunpack.c.l.s4 1966171168
      %v2322 = vunpack.c.0.s8 %v2321
      %v2323 = vlaneseq
      %v2324 = vshrl.u32 %v2323, 7
      %v2325 = vsub.s32 %v2322, %v2324
      %v2326 = vrot.slane %v2312, %v2325
      %v2327 = vcombine.low %v2319, %v2326
      %v2329 = vunpack.c.l.s4 1966171168
      %v2330 = vunpack.c.0.s8 %v2329
      %v2331 = vlaneseq
      %v2332 = vshrl.u32 %v2331, 7
      %v2333 = vsub.s32 %v2330, %v2332
      %v2334 = vrot.slane %v2171, %v2333
      %v2336 = vunpack.c.l.s4 1966171168
      %v2337 = vunpack.c.0.s8 %v2336
      %v2338 = vlaneseq
      %v2339 = vshrl.u32 %v2338, 7
      %v2340 = vsub.s32 %v2337, %v2339
      %v2341 = vrot.slane %v2334, %v2340
      %v2346 = vpack.c.bf16 %v2278, %v2229
      %v2347 = vpack.c.bf16 %v2341, %v2327
      %v2348 = vsel %vm433, %v2347, 0
      %2351 = vrot.lane.b32.xlu0 %v2346, 40
      %v2352 = vpop.permute.xlu0 %2351
      %2353 = vrot.lane.b32.xlu0 %v2348, 40
      %v2354 = vpop.permute.xlu0 %2353
      %vm2357 = vcmask 392512
      %2358 = vst.msk [vmem:[#allocation2] sm:$0xff] %vm2357, %v2352
      %2359 = vst.msk [vmem:[#allocation2 + $0x8] sm:$0xff] %vm2357, %v2354
      %s2360 = scalar_lea.vmem [#allocation3], 24
      %v2361 = vld [vmem:[%s2360] sm:$0x1f]
      %v2362 = vld [vmem:[%s2360 + $0x8] sm:$0x1f]
      %v2363 = vld [vmem:[%s2360 + $0x10] sm:$0x1f]
      %v2364 = vld [vmem:[%s2360 + $0x18] sm:$0x1f]
      %v2365 = vld [vmem:[%s2360 + $0x20] sm:$0x1f]
      %v2371 = vcombine.high %v2361, %v2361
      %v2373 = vunpack.c.l.s4 1966171168
      %v2374 = vunpack.c.0.s8 %v2373
      %v2375 = vlaneseq
      %v2376 = vshrl.u32 %v2375, 7
      %v2377 = vsub.s32 %v2374, %v2376
      %v2378 = vrot.slane %v2361, %v2377
      %v2380 = vunpack.c.l.s4 1966171168
      %v2381 = vunpack.c.0.s8 %v2380
      %v2382 = vlaneseq
      %v2383 = vshrl.u32 %v2382, 7
      %v2384 = vsub.s32 %v2381, %v2383
      %v2385 = vrot.slane %v2371, %v2384
      %v2386 = vcombine.high %v2378, %v2378
      %v2388 = vunpack.c.l.s4 1966171168
      %v2389 = vunpack.c.0.s8 %v2388
      %v2390 = vlaneseq
      %v2391 = vshrl.u32 %v2390, 7
      %v2392 = vsub.s32 %v2389, %v2391
      %v2393 = vrot.slane %v2378, %v2392
      %v2395 = vunpack.c.l.s4 1966171168
      %v2396 = vunpack.c.0.s8 %v2395
      %v2397 = vlaneseq
      %v2398 = vshrl.u32 %v2397, 7
      %v2399 = vsub.s32 %v2396, %v2398
      %v2400 = vrot.slane %v2385, %v2399
      %v2402 = vunpack.c.l.s4 1966171168
      %v2403 = vunpack.c.0.s8 %v2402
      %v2404 = vlaneseq
      %v2405 = vshrl.u32 %v2404, 7
      %v2406 = vsub.s32 %v2403, %v2405
      %v2407 = vrot.slane %v2386, %v2406
      %v2408 = vcombine.high %v2393, %v2393
      %v2409 = vcombine.high %v2407, %v2407
      %v2410 = vcombine.high %v2362, %v2362
      %v2412 = vunpack.c.l.s4 1966171168
      %v2413 = vunpack.c.0.s8 %v2412
      %v2414 = vlaneseq
      %v2415 = vshrl.u32 %v2414, 7
      %v2416 = vsub.s32 %v2413, %v2415
      %v2417 = vrot.slane %v2362, %v2416
      %v2419 = vunpack.c.l.s4 1966171168
      %v2420 = vunpack.c.0.s8 %v2419
      %v2421 = vlaneseq
      %v2422 = vshrl.u32 %v2421, 7
      %v2423 = vsub.s32 %v2420, %v2422
      %v2424 = vrot.slane %v2410, %v2423
      %v2425 = vcombine.high %v2417, %v2417
      %v2427 = vunpack.c.l.s4 1966171168
      %v2428 = vunpack.c.0.s8 %v2427
      %v2429 = vlaneseq
      %v2430 = vshrl.u32 %v2429, 7
      %v2431 = vsub.s32 %v2428, %v2430
      %v2432 = vrot.slane %v2417, %v2431
      %v2434 = vunpack.c.l.s4 1966171168
      %v2435 = vunpack.c.0.s8 %v2434
      %v2436 = vlaneseq
      %v2437 = vshrl.u32 %v2436, 7
      %v2438 = vsub.s32 %v2435, %v2437
      %v2439 = vrot.slane %v2424, %v2438
      %v2441 = vunpack.c.l.s4 1966171168
      %v2442 = vunpack.c.0.s8 %v2441
      %v2443 = vlaneseq
      %v2444 = vshrl.u32 %v2443, 7
      %v2445 = vsub.s32 %v2442, %v2444
      %v2446 = vrot.slane %v2425, %v2445
      %v2447 = vcombine.high %v2432, %v2432
      %v2448 = vcombine.high %v2446, %v2446
      %v2449 = vcombine.high %v2363, %v2363
      %v2451 = vunpack.c.l.s4 1966171168
      %v2452 = vunpack.c.0.s8 %v2451
      %v2453 = vlaneseq
      %v2454 = vshrl.u32 %v2453, 7
      %v2455 = vsub.s32 %v2452, %v2454
      %v2456 = vrot.slane %v2363, %v2455
      %v2458 = vunpack.c.l.s4 1966171168
      %v2459 = vunpack.c.0.s8 %v2458
      %v2460 = vlaneseq
      %v2461 = vshrl.u32 %v2460, 7
      %v2462 = vsub.s32 %v2459, %v2461
      %v2463 = vrot.slane %v2449, %v2462
      %v2464 = vcombine.high %v2456, %v2456
      %v2466 = vunpack.c.l.s4 1966171168
      %v2467 = vunpack.c.0.s8 %v2466
      %v2468 = vlaneseq
      %v2469 = vshrl.u32 %v2468, 7
      %v2470 = vsub.s32 %v2467, %v2469
      %v2471 = vrot.slane %v2456, %v2470
      %v2473 = vunpack.c.l.s4 1966171168
      %v2474 = vunpack.c.0.s8 %v2473
      %v2475 = vlaneseq
      %v2476 = vshrl.u32 %v2475, 7
      %v2477 = vsub.s32 %v2474, %v2476
      %v2478 = vrot.slane %v2463, %v2477
      %v2480 = vunpack.c.l.s4 1966171168
      %v2481 = vunpack.c.0.s8 %v2480
      %v2482 = vlaneseq
      %v2483 = vshrl.u32 %v2482, 7
      %v2484 = vsub.s32 %v2481, %v2483
      %v2485 = vrot.slane %v2464, %v2484
      %v2486 = vcombine.high %v2471, %v2471
      %v2487 = vcombine.high %v2485, %v2485
      %v2488 = vcombine.high %v2364, %v2364
      %v2490 = vunpack.c.l.s4 1966171168
      %v2491 = vunpack.c.0.s8 %v2490
      %v2492 = vlaneseq
      %v2493 = vshrl.u32 %v2492, 7
      %v2494 = vsub.s32 %v2491, %v2493
      %v2495 = vrot.slane %v2364, %v2494
      %v2497 = vunpack.c.l.s4 1966171168
      %v2498 = vunpack.c.0.s8 %v2497
      %v2499 = vlaneseq
      %v2500 = vshrl.u32 %v2499, 7
      %v2501 = vsub.s32 %v2498, %v2500
      %v2502 = vrot.slane %v2488, %v2501
      %v2503 = vcombine.high %v2495, %v2495
      %v2505 = vunpack.c.l.s4 1966171168
      %v2506 = vunpack.c.0.s8 %v2505
      %v2507 = vlaneseq
      %v2508 = vshrl.u32 %v2507, 7
      %v2509 = vsub.s32 %v2506, %v2508
      %v2510 = vrot.slane %v2495, %v2509
      %v2512 = vunpack.c.l.s4 1966171168
      %v2513 = vunpack.c.0.s8 %v2512
      %v2514 = vlaneseq
      %v2515 = vshrl.u32 %v2514, 7
      %v2516 = vsub.s32 %v2513, %v2515
      %v2517 = vrot.slane %v2502, %v2516
      %v2519 = vunpack.c.l.s4 1966171168
      %v2520 = vunpack.c.0.s8 %v2519
      %v2521 = vlaneseq
      %v2522 = vshrl.u32 %v2521, 7
      %v2523 = vsub.s32 %v2520, %v2522
      %v2524 = vrot.slane %v2503, %v2523
      %v2525 = vcombine.high %v2510, %v2510
      %v2526 = vcombine.high %v2524, %v2524
      %v2527 = vcombine.high %v2365, %v2365
      %v2529 = vunpack.c.l.s4 1966171168
      %v2530 = vunpack.c.0.s8 %v2529
      %v2531 = vlaneseq
      %v2532 = vshrl.u32 %v2531, 7
      %v2533 = vsub.s32 %v2530, %v2532
      %v2534 = vrot.slane %v2365, %v2533
      %v2536 = vunpack.c.l.s4 1966171168
      %v2537 = vunpack.c.0.s8 %v2536
      %v2538 = vlaneseq
      %v2539 = vshrl.u32 %v2538, 7
      %v2540 = vsub.s32 %v2537, %v2539
      %v2541 = vrot.slane %v2527, %v2540
      %v2542 = vcombine.high %v2534, %v2534
      %v2544 = vunpack.c.l.s4 1966171168
      %v2545 = vunpack.c.0.s8 %v2544
      %v2546 = vlaneseq
      %v2547 = vshrl.u32 %v2546, 7
      %v2548 = vsub.s32 %v2545, %v2547
      %v2549 = vrot.slane %v2534, %v2548
      %v2551 = vunpack.c.l.s4 1966171168
      %v2552 = vunpack.c.0.s8 %v2551
      %v2553 = vlaneseq
      %v2554 = vshrl.u32 %v2553, 7
      %v2555 = vsub.s32 %v2552, %v2554
      %v2556 = vrot.slane %v2541, %v2555
      %v2558 = vunpack.c.l.s4 1966171168
      %v2559 = vunpack.c.0.s8 %v2558
      %v2560 = vlaneseq
      %v2561 = vshrl.u32 %v2560, 7
      %v2562 = vsub.s32 %v2559, %v2561
      %v2563 = vrot.slane %v2542, %v2562
      %v2564 = vcombine.high %v2549, %v2549
      %v2565 = vcombine.high %v2563, %v2563
      %v2566 = vcombine.low %v2393, %v2407
      %v2567 = vcombine.low %v2408, %v2409
      %v2568 = vcombine.low %v2400, %v2432
      %v2569 = vcombine.low %v2446, %v2447
      %v2571 = vunpack.c.l.s4 1966171168
      %v2572 = vunpack.c.0.s8 %v2571
      %v2573 = vlaneseq
      %v2574 = vshrl.u32 %v2573, 7
      %v2575 = vsub.s32 %v2572, %v2574
      %v2576 = vrot.slane %v2566, %v2575
      %v2578 = vunpack.c.l.s4 1966171168
      %v2579 = vunpack.c.0.s8 %v2578
      %v2580 = vlaneseq
      %v2581 = vshrl.u32 %v2580, 7
      %v2582 = vsub.s32 %v2579, %v2581
      %v2583 = vrot.slane %v2567, %v2582
      %v2585 = vunpack.c.l.s4 1966171168
      %v2586 = vunpack.c.0.s8 %v2585
      %v2587 = vlaneseq
      %v2588 = vshrl.u32 %v2587, 7
      %v2589 = vsub.s32 %v2586, %v2588
      %v2590 = vrot.slane %v2568, %v2589
      %v2592 = vunpack.c.l.s4 1966171168
      %v2593 = vunpack.c.0.s8 %v2592
      %v2594 = vlaneseq
      %v2595 = vshrl.u32 %v2594, 7
      %v2596 = vsub.s32 %v2593, %v2595
      %v2597 = vrot.slane %v2569, %v2596
      %v2598 = vcombine.low %v2576, %v2583
      %v2599 = vcombine.low %v2590, %v2597
      %v2601 = vunpack.c.l.s4 1966171168
      %v2602 = vunpack.c.0.s8 %v2601
      %v2603 = vlaneseq
      %v2604 = vshrl.u32 %v2603, 7
      %v2605 = vsub.s32 %v2602, %v2604
      %v2606 = vrot.slane %v2598, %v2605
      %v2608 = vunpack.c.l.s4 1966171168
      %v2609 = vunpack.c.0.s8 %v2608
      %v2610 = vlaneseq
      %v2611 = vshrl.u32 %v2610, 7
      %v2612 = vsub.s32 %v2609, %v2611
      %v2613 = vrot.slane %v2599, %v2612
      %v2614 = vcombine.low %v2606, %v2613
      %v2615 = vcombine.low %v2448, %v2439
      %v2616 = vcombine.low %v2471, %v2485
      %v2617 = vcombine.low %v2486, %v2487
      %v2618 = vcombine.low %v2478, %v2510
      %v2620 = vunpack.c.l.s4 1966171168
      %v2621 = vunpack.c.0.s8 %v2620
      %v2622 = vlaneseq
      %v2623 = vshrl.u32 %v2622, 7
      %v2624 = vsub.s32 %v2621, %v2623
      %v2625 = vrot.slane %v2615, %v2624
      %v2627 = vunpack.c.l.s4 1966171168
      %v2628 = vunpack.c.0.s8 %v2627
      %v2629 = vlaneseq
      %v2630 = vshrl.u32 %v2629, 7
      %v2631 = vsub.s32 %v2628, %v2630
      %v2632 = vrot.slane %v2616, %v2631
      %v2634 = vunpack.c.l.s4 1966171168
      %v2635 = vunpack.c.0.s8 %v2634
      %v2636 = vlaneseq
      %v2637 = vshrl.u32 %v2636, 7
      %v2638 = vsub.s32 %v2635, %v2637
      %v2639 = vrot.slane %v2617, %v2638
      %v2641 = vunpack.c.l.s4 1966171168
      %v2642 = vunpack.c.0.s8 %v2641
      %v2643 = vlaneseq
      %v2644 = vshrl.u32 %v2643, 7
      %v2645 = vsub.s32 %v2642, %v2644
      %v2646 = vrot.slane %v2618, %v2645
      %v2647 = vcombine.low %v2625, %v2632
      %v2648 = vcombine.low %v2639, %v2646
      %v2650 = vunpack.c.l.s4 1966171168
      %v2651 = vunpack.c.0.s8 %v2650
      %v2652 = vlaneseq
      %v2653 = vshrl.u32 %v2652, 7
      %v2654 = vsub.s32 %v2651, %v2653
      %v2655 = vrot.slane %v2647, %v2654
      %v2657 = vunpack.c.l.s4 1966171168
      %v2658 = vunpack.c.0.s8 %v2657
      %v2659 = vlaneseq
      %v2660 = vshrl.u32 %v2659, 7
      %v2661 = vsub.s32 %v2658, %v2660
      %v2662 = vrot.slane %v2648, %v2661
      %v2663 = vcombine.low %v2655, %v2662
      %v2664 = vcombine.low %v2524, %v2525
      %v2665 = vcombine.low %v2526, %v2517
      %v2666 = vcombine.low %v2549, %v2563
      %v2667 = vcombine.low %v2564, %v2565
      %v2669 = vunpack.c.l.s4 1966171168
      %v2670 = vunpack.c.0.s8 %v2669
      %v2671 = vlaneseq
      %v2672 = vshrl.u32 %v2671, 7
      %v2673 = vsub.s32 %v2670, %v2672
      %v2674 = vrot.slane %v2664, %v2673
      %v2676 = vunpack.c.l.s4 1966171168
      %v2677 = vunpack.c.0.s8 %v2676
      %v2678 = vlaneseq
      %v2679 = vshrl.u32 %v2678, 7
      %v2680 = vsub.s32 %v2677, %v2679
      %v2681 = vrot.slane %v2665, %v2680
      %v2683 = vunpack.c.l.s4 1966171168
      %v2684 = vunpack.c.0.s8 %v2683
      %v2685 = vlaneseq
      %v2686 = vshrl.u32 %v2685, 7
      %v2687 = vsub.s32 %v2684, %v2686
      %v2688 = vrot.slane %v2666, %v2687
      %v2690 = vunpack.c.l.s4 1966171168
      %v2691 = vunpack.c.0.s8 %v2690
      %v2692 = vlaneseq
      %v2693 = vshrl.u32 %v2692, 7
      %v2694 = vsub.s32 %v2691, %v2693
      %v2695 = vrot.slane %v2667, %v2694
      %v2696 = vcombine.low %v2674, %v2681
      %v2697 = vcombine.low %v2688, %v2695
      %v2699 = vunpack.c.l.s4 1966171168
      %v2700 = vunpack.c.0.s8 %v2699
      %v2701 = vlaneseq
      %v2702 = vshrl.u32 %v2701, 7
      %v2703 = vsub.s32 %v2700, %v2702
      %v2704 = vrot.slane %v2696, %v2703
      %v2706 = vunpack.c.l.s4 1966171168
      %v2707 = vunpack.c.0.s8 %v2706
      %v2708 = vlaneseq
      %v2709 = vshrl.u32 %v2708, 7
      %v2710 = vsub.s32 %v2707, %v2709
      %v2711 = vrot.slane %v2697, %v2710
      %v2712 = vcombine.low %v2704, %v2711
      %v2714 = vunpack.c.l.s4 1966171168
      %v2715 = vunpack.c.0.s8 %v2714
      %v2716 = vlaneseq
      %v2717 = vshrl.u32 %v2716, 7
      %v2718 = vsub.s32 %v2715, %v2717
      %v2719 = vrot.slane %v2556, %v2718
      %v2721 = vunpack.c.l.s4 1966171168
      %v2722 = vunpack.c.0.s8 %v2721
      %v2723 = vlaneseq
      %v2724 = vshrl.u32 %v2723, 7
      %v2725 = vsub.s32 %v2722, %v2724
      %v2726 = vrot.slane %v2719, %v2725
      %v2731 = vpack.c.bf16 %v2663, %v2614
      %v2732 = vpack.c.bf16 %v2726, %v2712
      %v2733 = vsel %vm433, %v2732, 0
      %2736 = vrot.lane.b32.xlu0 %v2731, 48
      %v2737 = vpop.permute.xlu0 %2736
      %2738 = vrot.lane.b32.xlu0 %v2733, 48
      %v2739 = vpop.permute.xlu0 %2738
      %vm2742 = vcmask 458112
      %2743 = vst.msk [vmem:[#allocation2] sm:$0xff] %vm2742, %v2737
      %2744 = vst.msk [vmem:[#allocation2 + $0x8] sm:$0xff] %vm2742, %v2739
      %v2745 = vld [vmem:[%s2360 + $0x1] sm:$0x1f]
      %v2746 = vld [vmem:[%s2360 + $0x9] sm:$0x1f]
      %v2747 = vld [vmem:[%s2360 + $0x11] sm:$0x1f]
      %v2748 = vld [vmem:[%s2360 + $0x19] sm:$0x1f]
      %v2749 = vld [vmem:[%s2360 + $0x21] sm:$0x1f]
      %v2755 = vcombine.high %v2745, %v2745
      %v2757 = vunpack.c.l.s4 1966171168
      %v2758 = vunpack.c.0.s8 %v2757
      %v2759 = vlaneseq
      %v2760 = vshrl.u32 %v2759, 7
      %v2761 = vsub.s32 %v2758, %v2760
      %v2762 = vrot.slane %v2745, %v2761
      %v2764 = vunpack.c.l.s4 1966171168
      %v2765 = vunpack.c.0.s8 %v2764
      %v2766 = vlaneseq
      %v2767 = vshrl.u32 %v2766, 7
      %v2768 = vsub.s32 %v2765, %v2767
      %v2769 = vrot.slane %v2755, %v2768
      %v2770 = vcombine.high %v2762, %v2762
      %v2772 = vunpack.c.l.s4 1966171168
      %v2773 = vunpack.c.0.s8 %v2772
      %v2774 = vlaneseq
      %v2775 = vshrl.u32 %v2774, 7
      %v2776 = vsub.s32 %v2773, %v2775
      %v2777 = vrot.slane %v2762, %v2776
      %v2779 = vunpack.c.l.s4 1966171168
      %v2780 = vunpack.c.0.s8 %v2779
      %v2781 = vlaneseq
      %v2782 = vshrl.u32 %v2781, 7
      %v2783 = vsub.s32 %v2780, %v2782
      %v2784 = vrot.slane %v2769, %v2783
      %v2786 = vunpack.c.l.s4 1966171168
      %v2787 = vunpack.c.0.s8 %v2786
      %v2788 = vlaneseq
      %v2789 = vshrl.u32 %v2788, 7
      %v2790 = vsub.s32 %v2787, %v2789
      %v2791 = vrot.slane %v2770, %v2790
      %v2792 = vcombine.high %v2777, %v2777
      %v2793 = vcombine.high %v2791, %v2791
      %v2794 = vcombine.high %v2746, %v2746
      %v2796 = vunpack.c.l.s4 1966171168
      %v2797 = vunpack.c.0.s8 %v2796
      %v2798 = vlaneseq
      %v2799 = vshrl.u32 %v2798, 7
      %v2800 = vsub.s32 %v2797, %v2799
      %v2801 = vrot.slane %v2746, %v2800
      %v2803 = vunpack.c.l.s4 1966171168
      %v2804 = vunpack.c.0.s8 %v2803
      %v2805 = vlaneseq
      %v2806 = vshrl.u32 %v2805, 7
      %v2807 = vsub.s32 %v2804, %v2806
      %v2808 = vrot.slane %v2794, %v2807
      %v2809 = vcombine.high %v2801, %v2801
      %v2811 = vunpack.c.l.s4 1966171168
      %v2812 = vunpack.c.0.s8 %v2811
      %v2813 = vlaneseq
      %v2814 = vshrl.u32 %v2813, 7
      %v2815 = vsub.s32 %v2812, %v2814
      %v2816 = vrot.slane %v2801, %v2815
      %v2818 = vunpack.c.l.s4 1966171168
      %v2819 = vunpack.c.0.s8 %v2818
      %v2820 = vlaneseq
      %v2821 = vshrl.u32 %v2820, 7
      %v2822 = vsub.s32 %v2819, %v2821
      %v2823 = vrot.slane %v2808, %v2822
      %v2825 = vunpack.c.l.s4 1966171168
      %v2826 = vunpack.c.0.s8 %v2825
      %v2827 = vlaneseq
      %v2828 = vshrl.u32 %v2827, 7
      %v2829 = vsub.s32 %v2826, %v2828
      %v2830 = vrot.slane %v2809, %v2829
      %v2831 = vcombine.high %v2816, %v2816
      %v2832 = vcombine.high %v2830, %v2830
      %v2833 = vcombine.high %v2747, %v2747
      %v2835 = vunpack.c.l.s4 1966171168
      %v2836 = vunpack.c.0.s8 %v2835
      %v2837 = vlaneseq
      %v2838 = vshrl.u32 %v2837, 7
      %v2839 = vsub.s32 %v2836, %v2838
      %v2840 = vrot.slane %v2747, %v2839
      %v2842 = vunpack.c.l.s4 1966171168
      %v2843 = vunpack.c.0.s8 %v2842
      %v2844 = vlaneseq
      %v2845 = vshrl.u32 %v2844, 7
      %v2846 = vsub.s32 %v2843, %v2845
      %v2847 = vrot.slane %v2833, %v2846
      %v2848 = vcombine.high %v2840, %v2840
      %v2850 = vunpack.c.l.s4 1966171168
      %v2851 = vunpack.c.0.s8 %v2850
      %v2852 = vlaneseq
      %v2853 = vshrl.u32 %v2852, 7
      %v2854 = vsub.s32 %v2851, %v2853
      %v2855 = vrot.slane %v2840, %v2854
      %v2857 = vunpack.c.l.s4 1966171168
      %v2858 = vunpack.c.0.s8 %v2857
      %v2859 = vlaneseq
      %v2860 = vshrl.u32 %v2859, 7
      %v2861 = vsub.s32 %v2858, %v2860
      %v2862 = vrot.slane %v2847, %v2861
      %v2864 = vunpack.c.l.s4 1966171168
      %v2865 = vunpack.c.0.s8 %v2864
      %v2866 = vlaneseq
      %v2867 = vshrl.u32 %v2866, 7
      %v2868 = vsub.s32 %v2865, %v2867
      %v2869 = vrot.slane %v2848, %v2868
      %v2870 = vcombine.high %v2855, %v2855
      %v2871 = vcombine.high %v2869, %v2869
      %v2872 = vcombine.high %v2748, %v2748
      %v2874 = vunpack.c.l.s4 1966171168
      %v2875 = vunpack.c.0.s8 %v2874
      %v2876 = vlaneseq
      %v2877 = vshrl.u32 %v2876, 7
      %v2878 = vsub.s32 %v2875, %v2877
      %v2879 = vrot.slane %v2748, %v2878
      %v2881 = vunpack.c.l.s4 1966171168
      %v2882 = vunpack.c.0.s8 %v2881
      %v2883 = vlaneseq
      %v2884 = vshrl.u32 %v2883, 7
      %v2885 = vsub.s32 %v2882, %v2884
      %v2886 = vrot.slane %v2872, %v2885
      %v2887 = vcombine.high %v2879, %v2879
      %v2889 = vunpack.c.l.s4 1966171168
      %v2890 = vunpack.c.0.s8 %v2889
      %v2891 = vlaneseq
      %v2892 = vshrl.u32 %v2891, 7
      %v2893 = vsub.s32 %v2890, %v2892
      %v2894 = vrot.slane %v2879, %v2893
      %v2896 = vunpack.c.l.s4 1966171168
      %v2897 = vunpack.c.0.s8 %v2896
      %v2898 = vlaneseq
      %v2899 = vshrl.u32 %v2898, 7
      %v2900 = vsub.s32 %v2897, %v2899
      %v2901 = vrot.slane %v2886, %v2900
      %v2903 = vunpack.c.l.s4 1966171168
      %v2904 = vunpack.c.0.s8 %v2903
      %v2905 = vlaneseq
      %v2906 = vshrl.u32 %v2905, 7
      %v2907 = vsub.s32 %v2904, %v2906
      %v2908 = vrot.slane %v2887, %v2907
      %v2909 = vcombine.high %v2894, %v2894
      %v2910 = vcombine.high %v2908, %v2908
      %v2911 = vcombine.high %v2749, %v2749
      %v2913 = vunpack.c.l.s4 1966171168
      %v2914 = vunpack.c.0.s8 %v2913
      %v2915 = vlaneseq
      %v2916 = vshrl.u32 %v2915, 7
      %v2917 = vsub.s32 %v2914, %v2916
      %v2918 = vrot.slane %v2749, %v2917
      %v2920 = vunpack.c.l.s4 1966171168
      %v2921 = vunpack.c.0.s8 %v2920
      %v2922 = vlaneseq
      %v2923 = vshrl.u32 %v2922, 7
      %v2924 = vsub.s32 %v2921, %v2923
      %v2925 = vrot.slane %v2911, %v2924
      %v2926 = vcombine.high %v2918, %v2918
      %v2928 = vunpack.c.l.s4 1966171168
      %v2929 = vunpack.c.0.s8 %v2928
      %v2930 = vlaneseq
      %v2931 = vshrl.u32 %v2930, 7
      %v2932 = vsub.s32 %v2929, %v2931
      %v2933 = vrot.slane %v2918, %v2932
      %v2935 = vunpack.c.l.s4 1966171168
      %v2936 = vunpack.c.0.s8 %v2935
      %v2937 = vlaneseq
      %v2938 = vshrl.u32 %v2937, 7
      %v2939 = vsub.s32 %v2936, %v2938
      %v2940 = vrot.slane %v2925, %v2939
      %v2942 = vunpack.c.l.s4 1966171168
      %v2943 = vunpack.c.0.s8 %v2942
      %v2944 = vlaneseq
      %v2945 = vshrl.u32 %v2944, 7
      %v2946 = vsub.s32 %v2943, %v2945
      %v2947 = vrot.slane %v2926, %v2946
      %v2948 = vcombine.high %v2933, %v2933
      %v2949 = vcombine.high %v2947, %v2947
      %v2950 = vcombine.low %v2777, %v2791
      %v2951 = vcombine.low %v2792, %v2793
      %v2952 = vcombine.low %v2784, %v2816
      %v2953 = vcombine.low %v2830, %v2831
      %v2955 = vunpack.c.l.s4 1966171168
      %v2956 = vunpack.c.0.s8 %v2955
      %v2957 = vlaneseq
      %v2958 = vshrl.u32 %v2957, 7
      %v2959 = vsub.s32 %v2956, %v2958
      %v2960 = vrot.slane %v2950, %v2959
      %v2962 = vunpack.c.l.s4 1966171168
      %v2963 = vunpack.c.0.s8 %v2962
      %v2964 = vlaneseq
      %v2965 = vshrl.u32 %v2964, 7
      %v2966 = vsub.s32 %v2963, %v2965
      %v2967 = vrot.slane %v2951, %v2966
      %v2969 = vunpack.c.l.s4 1966171168
      %v2970 = vunpack.c.0.s8 %v2969
      %v2971 = vlaneseq
      %v2972 = vshrl.u32 %v2971, 7
      %v2973 = vsub.s32 %v2970, %v2972
      %v2974 = vrot.slane %v2952, %v2973
      %v2976 = vunpack.c.l.s4 1966171168
      %v2977 = vunpack.c.0.s8 %v2976
      %v2978 = vlaneseq
      %v2979 = vshrl.u32 %v2978, 7
      %v2980 = vsub.s32 %v2977, %v2979
      %v2981 = vrot.slane %v2953, %v2980
      %v2982 = vcombine.low %v2960, %v2967
      %v2983 = vcombine.low %v2974, %v2981
      %v2985 = vunpack.c.l.s4 1966171168
      %v2986 = vunpack.c.0.s8 %v2985
      %v2987 = vlaneseq
      %v2988 = vshrl.u32 %v2987, 7
      %v2989 = vsub.s32 %v2986, %v2988
      %v2990 = vrot.slane %v2982, %v2989
      %v2992 = vunpack.c.l.s4 1966171168
      %v2993 = vunpack.c.0.s8 %v2992
      %v2994 = vlaneseq
      %v2995 = vshrl.u32 %v2994, 7
      %v2996 = vsub.s32 %v2993, %v2995
      %v2997 = vrot.slane %v2983, %v2996
      %v2998 = vcombine.low %v2990, %v2997
      %v2999 = vcombine.low %v2832, %v2823
      %v3000 = vcombine.low %v2855, %v2869
      %v3001 = vcombine.low %v2870, %v2871
      %v3002 = vcombine.low %v2862, %v2894
      %v3004 = vunpack.c.l.s4 1966171168
      %v3005 = vunpack.c.0.s8 %v3004
      %v3006 = vlaneseq
      %v3007 = vshrl.u32 %v3006, 7
      %v3008 = vsub.s32 %v3005, %v3007
      %v3009 = vrot.slane %v2999, %v3008
      %v3011 = vunpack.c.l.s4 1966171168
      %v3012 = vunpack.c.0.s8 %v3011
      %v3013 = vlaneseq
      %v3014 = vshrl.u32 %v3013, 7
      %v3015 = vsub.s32 %v3012, %v3014
      %v3016 = vrot.slane %v3000, %v3015
      %v3018 = vunpack.c.l.s4 1966171168
      %v3019 = vunpack.c.0.s8 %v3018
      %v3020 = vlaneseq
      %v3021 = vshrl.u32 %v3020, 7
      %v3022 = vsub.s32 %v3019, %v3021
      %v3023 = vrot.slane %v3001, %v3022
      %v3025 = vunpack.c.l.s4 1966171168
      %v3026 = vunpack.c.0.s8 %v3025
      %v3027 = vlaneseq
      %v3028 = vshrl.u32 %v3027, 7
      %v3029 = vsub.s32 %v3026, %v3028
      %v3030 = vrot.slane %v3002, %v3029
      %v3031 = vcombine.low %v3009, %v3016
      %v3032 = vcombine.low %v3023, %v3030
      %v3034 = vunpack.c.l.s4 1966171168
      %v3035 = vunpack.c.0.s8 %v3034
      %v3036 = vlaneseq
      %v3037 = vshrl.u32 %v3036, 7
      %v3038 = vsub.s32 %v3035, %v3037
      %v3039 = vrot.slane %v3031, %v3038
      %v3041 = vunpack.c.l.s4 1966171168
      %v3042 = vunpack.c.0.s8 %v3041
      %v3043 = vlaneseq
      %v3044 = vshrl.u32 %v3043, 7
      %v3045 = vsub.s32 %v3042, %v3044
      %v3046 = vrot.slane %v3032, %v3045
      %v3047 = vcombine.low %v3039, %v3046
      %v3048 = vcombine.low %v2908, %v2909
      %v3049 = vcombine.low %v2910, %v2901
      %v3050 = vcombine.low %v2933, %v2947
      %v3051 = vcombine.low %v2948, %v2949
      %v3053 = vunpack.c.l.s4 1966171168
      %v3054 = vunpack.c.0.s8 %v3053
      %v3055 = vlaneseq
      %v3056 = vshrl.u32 %v3055, 7
      %v3057 = vsub.s32 %v3054, %v3056
      %v3058 = vrot.slane %v3048, %v3057
      %v3060 = vunpack.c.l.s4 1966171168
      %v3061 = vunpack.c.0.s8 %v3060
      %v3062 = vlaneseq
      %v3063 = vshrl.u32 %v3062, 7
      %v3064 = vsub.s32 %v3061, %v3063
      %v3065 = vrot.slane %v3049, %v3064
      %v3067 = vunpack.c.l.s4 1966171168
      %v3068 = vunpack.c.0.s8 %v3067
      %v3069 = vlaneseq
      %v3070 = vshrl.u32 %v3069, 7
      %v3071 = vsub.s32 %v3068, %v3070
      %v3072 = vrot.slane %v3050, %v3071
      %v3074 = vunpack.c.l.s4 1966171168
      %v3075 = vunpack.c.0.s8 %v3074
      %v3076 = vlaneseq
      %v3077 = vshrl.u32 %v3076, 7
      %v3078 = vsub.s32 %v3075, %v3077
      %v3079 = vrot.slane %v3051, %v3078
      %v3080 = vcombine.low %v3058, %v3065
      %v3081 = vcombine.low %v3072, %v3079
      %v3083 = vunpack.c.l.s4 1966171168
      %v3084 = vunpack.c.0.s8 %v3083
      %v3085 = vlaneseq
      %v3086 = vshrl.u32 %v3085, 7
      %v3087 = vsub.s32 %v3084, %v3086
      %v3088 = vrot.slane %v3080, %v3087
      %v3090 = vunpack.c.l.s4 1966171168
      %v3091 = vunpack.c.0.s8 %v3090
      %v3092 = vlaneseq
      %v3093 = vshrl.u32 %v3092, 7
      %v3094 = vsub.s32 %v3091, %v3093
      %v3095 = vrot.slane %v3081, %v3094
      %v3096 = vcombine.low %v3088, %v3095
      %v3098 = vunpack.c.l.s4 1966171168
      %v3099 = vunpack.c.0.s8 %v3098
      %v3100 = vlaneseq
      %v3101 = vshrl.u32 %v3100, 7
      %v3102 = vsub.s32 %v3099, %v3101
      %v3103 = vrot.slane %v2940, %v3102
      %v3105 = vunpack.c.l.s4 1966171168
      %v3106 = vunpack.c.0.s8 %v3105
      %v3107 = vlaneseq
      %v3108 = vshrl.u32 %v3107, 7
      %v3109 = vsub.s32 %v3106, %v3108
      %v3110 = vrot.slane %v3103, %v3109
      %v3115 = vpack.c.bf16 %v3047, %v2998
      %v3116 = vpack.c.bf16 %v3110, %v3096
      %v3117 = vsel %vm433, %v3116, 0
      %3120 = vrot.lane.b32.xlu0 %v3115, 56
      %v3121 = vpop.permute.xlu0 %3120
      %3122 = vrot.lane.b32.xlu0 %v3117, 56
      %v3123 = vpop.permute.xlu0 %3122
      %vm3126 = vcmask 523712
      %3127 = vst.msk [vmem:[#allocation2] sm:$0xff] %vm3126, %v3121
      %3128 = vst.msk [vmem:[#allocation2 + $0x8] sm:$0xff] %vm3126, %v3123
      %s3129 = scalar_lea.vmem [#allocation3], 64
      %v3130 = vld [vmem:[%s3129] sm:$0x1f]
      %v3131 = vld [vmem:[%s3129 + $0x8] sm:$0x1f]
      %v3132 = vld [vmem:[%s3129 + $0x10] sm:$0x1f]
      %v3133 = vld [vmem:[%s3129 + $0x18] sm:$0x1f]
      %v3134 = vld [vmem:[%s3129 + $0x20] sm:$0x1f]
      %v3140 = vcombine.high %v3130, %v3130
      %v3142 = vunpack.c.l.s4 1966171168
      %v3143 = vunpack.c.0.s8 %v3142
      %v3144 = vlaneseq
      %v3145 = vshrl.u32 %v3144, 7
      %v3146 = vsub.s32 %v3143, %v3145
      %v3147 = vrot.slane %v3130, %v3146
      %v3149 = vunpack.c.l.s4 1966171168
      %v3150 = vunpack.c.0.s8 %v3149
      %v3151 = vlaneseq
      %v3152 = vshrl.u32 %v3151, 7
      %v3153 = vsub.s32 %v3150, %v3152
      %v3154 = vrot.slane %v3140, %v3153
      %v3155 = vcombine.high %v3147, %v3147
      %v3157 = vunpack.c.l.s4 1966171168
      %v3158 = vunpack.c.0.s8 %v3157
      %v3159 = vlaneseq
      %v3160 = vshrl.u32 %v3159, 7
      %v3161 = vsub.s32 %v3158, %v3160
      %v3162 = vrot.slane %v3147, %v3161
      %v3164 = vunpack.c.l.s4 1966171168
      %v3165 = vunpack.c.0.s8 %v3164
      %v3166 = vlaneseq
      %v3167 = vshrl.u32 %v3166, 7
      %v3168 = vsub.s32 %v3165, %v3167
      %v3169 = vrot.slane %v3154, %v3168
      %v3171 = vunpack.c.l.s4 1966171168
      %v3172 = vunpack.c.0.s8 %v3171
      %v3173 = vlaneseq
      %v3174 = vshrl.u32 %v3173, 7
      %v3175 = vsub.s32 %v3172, %v3174
      %v3176 = vrot.slane %v3155, %v3175
      %v3177 = vcombine.high %v3162, %v3162
      %v3178 = vcombine.high %v3176, %v3176
      %v3179 = vcombine.high %v3131, %v3131
      %v3181 = vunpack.c.l.s4 1966171168
      %v3182 = vunpack.c.0.s8 %v3181
      %v3183 = vlaneseq
      %v3184 = vshrl.u32 %v3183, 7
      %v3185 = vsub.s32 %v3182, %v3184
      %v3186 = vrot.slane %v3131, %v3185
      %v3188 = vunpack.c.l.s4 1966171168
      %v3189 = vunpack.c.0.s8 %v3188
      %v3190 = vlaneseq
      %v3191 = vshrl.u32 %v3190, 7
      %v3192 = vsub.s32 %v3189, %v3191
      %v3193 = vrot.slane %v3179, %v3192
      %v3194 = vcombine.high %v3186, %v3186
      %v3196 = vunpack.c.l.s4 1966171168
      %v3197 = vunpack.c.0.s8 %v3196
      %v3198 = vlaneseq
      %v3199 = vshrl.u32 %v3198, 7
      %v3200 = vsub.s32 %v3197, %v3199
      %v3201 = vrot.slane %v3186, %v3200
      %v3203 = vunpack.c.l.s4 1966171168
      %v3204 = vunpack.c.0.s8 %v3203
      %v3205 = vlaneseq
      %v3206 = vshrl.u32 %v3205, 7
      %v3207 = vsub.s32 %v3204, %v3206
      %v3208 = vrot.slane %v3193, %v3207
      %v3210 = vunpack.c.l.s4 1966171168
      %v3211 = vunpack.c.0.s8 %v3210
      %v3212 = vlaneseq
      %v3213 = vshrl.u32 %v3212, 7
      %v3214 = vsub.s32 %v3211, %v3213
      %v3215 = vrot.slane %v3194, %v3214
      %v3216 = vcombine.high %v3201, %v3201
      %v3217 = vcombine.high %v3215, %v3215
      %v3218 = vcombine.high %v3132, %v3132
      %v3220 = vunpack.c.l.s4 1966171168
      %v3221 = vunpack.c.0.s8 %v3220
      %v3222 = vlaneseq
      %v3223 = vshrl.u32 %v3222, 7
      %v3224 = vsub.s32 %v3221, %v3223
      %v3225 = vrot.slane %v3132, %v3224
      %v3227 = vunpack.c.l.s4 1966171168
      %v3228 = vunpack.c.0.s8 %v3227
      %v3229 = vlaneseq
      %v3230 = vshrl.u32 %v3229, 7
      %v3231 = vsub.s32 %v3228, %v3230
      %v3232 = vrot.slane %v3218, %v3231
      %v3233 = vcombine.high %v3225, %v3225
      %v3235 = vunpack.c.l.s4 1966171168
      %v3236 = vunpack.c.0.s8 %v3235
      %v3237 = vlaneseq
      %v3238 = vshrl.u32 %v3237, 7
      %v3239 = vsub.s32 %v3236, %v3238
      %v3240 = vrot.slane %v3225, %v3239
      %v3242 = vunpack.c.l.s4 1966171168
      %v3243 = vunpack.c.0.s8 %v3242
      %v3244 = vlaneseq
      %v3245 = vshrl.u32 %v3244, 7
      %v3246 = vsub.s32 %v3243, %v3245
      %v3247 = vrot.slane %v3232, %v3246
      %v3249 = vunpack.c.l.s4 1966171168
      %v3250 = vunpack.c.0.s8 %v3249
      %v3251 = vlaneseq
      %v3252 = vshrl.u32 %v3251, 7
      %v3253 = vsub.s32 %v3250, %v3252
      %v3254 = vrot.slane %v3233, %v3253
      %v3255 = vcombine.high %v3240, %v3240
      %v3256 = vcombine.high %v3254, %v3254
      %v3257 = vcombine.high %v3133, %v3133
      %v3259 = vunpack.c.l.s4 1966171168
      %v3260 = vunpack.c.0.s8 %v3259
      %v3261 = vlaneseq
      %v3262 = vshrl.u32 %v3261, 7
      %v3263 = vsub.s32 %v3260, %v3262
      %v3264 = vrot.slane %v3133, %v3263
      %v3266 = vunpack.c.l.s4 1966171168
      %v3267 = vunpack.c.0.s8 %v3266
      %v3268 = vlaneseq
      %v3269 = vshrl.u32 %v3268, 7
      %v3270 = vsub.s32 %v3267, %v3269
      %v3271 = vrot.slane %v3257, %v3270
      %v3272 = vcombine.high %v3264, %v3264
      %v3274 = vunpack.c.l.s4 1966171168
      %v3275 = vunpack.c.0.s8 %v3274
      %v3276 = vlaneseq
      %v3277 = vshrl.u32 %v3276, 7
      %v3278 = vsub.s32 %v3275, %v3277
      %v3279 = vrot.slane %v3264, %v3278
      %v3281 = vunpack.c.l.s4 1966171168
      %v3282 = vunpack.c.0.s8 %v3281
      %v3283 = vlaneseq
      %v3284 = vshrl.u32 %v3283, 7
      %v3285 = vsub.s32 %v3282, %v3284
      %v3286 = vrot.slane %v3271, %v3285
      %v3288 = vunpack.c.l.s4 1966171168
      %v3289 = vunpack.c.0.s8 %v3288
      %v3290 = vlaneseq
      %v3291 = vshrl.u32 %v3290, 7
      %v3292 = vsub.s32 %v3289, %v3291
      %v3293 = vrot.slane %v3272, %v3292
      %v3294 = vcombine.high %v3279, %v3279
      %v3295 = vcombine.high %v3293, %v3293
      %v3296 = vcombine.high %v3134, %v3134
      %v3298 = vunpack.c.l.s4 1966171168
      %v3299 = vunpack.c.0.s8 %v3298
      %v3300 = vlaneseq
      %v3301 = vshrl.u32 %v3300, 7
      %v3302 = vsub.s32 %v3299, %v3301
      %v3303 = vrot.slane %v3134, %v3302
      %v3305 = vunpack.c.l.s4 1966171168
      %v3306 = vunpack.c.0.s8 %v3305
      %v3307 = vlaneseq
      %v3308 = vshrl.u32 %v3307, 7
      %v3309 = vsub.s32 %v3306, %v3308
      %v3310 = vrot.slane %v3296, %v3309
      %v3311 = vcombine.high %v3303, %v3303
      %v3313 = vunpack.c.l.s4 1966171168
      %v3314 = vunpack.c.0.s8 %v3313
      %v3315 = vlaneseq
      %v3316 = vshrl.u32 %v3315, 7
      %v3317 = vsub.s32 %v3314, %v3316
      %v3318 = vrot.slane %v3303, %v3317
      %v3320 = vunpack.c.l.s4 1966171168
      %v3321 = vunpack.c.0.s8 %v3320
      %v3322 = vlaneseq
      %v3323 = vshrl.u32 %v3322, 7
      %v3324 = vsub.s32 %v3321, %v3323
      %v3325 = vrot.slane %v3310, %v3324
      %v3327 = vunpack.c.l.s4 1966171168
      %v3328 = vunpack.c.0.s8 %v3327
      %v3329 = vlaneseq
      %v3330 = vshrl.u32 %v3329, 7
      %v3331 = vsub.s32 %v3328, %v3330
      %v3332 = vrot.slane %v3311, %v3331
      %v3333 = vcombine.high %v3318, %v3318
      %v3334 = vcombine.high %v3332, %v3332
      %v3335 = vcombine.low %v3162, %v3176
      %v3336 = vcombine.low %v3177, %v3178
      %v3337 = vcombine.low %v3169, %v3201
      %v3338 = vcombine.low %v3215, %v3216
      %v3340 = vunpack.c.l.s4 1966171168
      %v3341 = vunpack.c.0.s8 %v3340
      %v3342 = vlaneseq
      %v3343 = vshrl.u32 %v3342, 7
      %v3344 = vsub.s32 %v3341, %v3343
      %v3345 = vrot.slane %v3335, %v3344
      %v3347 = vunpack.c.l.s4 1966171168
      %v3348 = vunpack.c.0.s8 %v3347
      %v3349 = vlaneseq
      %v3350 = vshrl.u32 %v3349, 7
      %v3351 = vsub.s32 %v3348, %v3350
      %v3352 = vrot.slane %v3336, %v3351
      %v3354 = vunpack.c.l.s4 1966171168
      %v3355 = vunpack.c.0.s8 %v3354
      %v3356 = vlaneseq
      %v3357 = vshrl.u32 %v3356, 7
      %v3358 = vsub.s32 %v3355, %v3357
      %v3359 = vrot.slane %v3337, %v3358
      %v3361 = vunpack.c.l.s4 1966171168
      %v3362 = vunpack.c.0.s8 %v3361
      %v3363 = vlaneseq
      %v3364 = vshrl.u32 %v3363, 7
      %v3365 = vsub.s32 %v3362, %v3364
      %v3366 = vrot.slane %v3338, %v3365
      %v3367 = vcombine.low %v3345, %v3352
      %v3368 = vcombine.low %v3359, %v3366
      %v3370 = vunpack.c.l.s4 1966171168
      %v3371 = vunpack.c.0.s8 %v3370
      %v3372 = vlaneseq
      %v3373 = vshrl.u32 %v3372, 7
      %v3374 = vsub.s32 %v3371, %v3373
      %v3375 = vrot.slane %v3367, %v3374
      %v3377 = vunpack.c.l.s4 1966171168
      %v3378 = vunpack.c.0.s8 %v3377
      %v3379 = vlaneseq
      %v3380 = vshrl.u32 %v3379, 7
      %v3381 = vsub.s32 %v3378, %v3380
      %v3382 = vrot.slane %v3368, %v3381
      %v3383 = vcombine.low %v3375, %v3382
      %v3384 = vcombine.low %v3217, %v3208
      %v3385 = vcombine.low %v3240, %v3254
      %v3386 = vcombine.low %v3255, %v3256
      %v3387 = vcombine.low %v3247, %v3279
      %v3389 = vunpack.c.l.s4 1966171168
      %v3390 = vunpack.c.0.s8 %v3389
      %v3391 = vlaneseq
      %v3392 = vshrl.u32 %v3391, 7
      %v3393 = vsub.s32 %v3390, %v3392
      %v3394 = vrot.slane %v3384, %v3393
      %v3396 = vunpack.c.l.s4 1966171168
      %v3397 = vunpack.c.0.s8 %v3396
      %v3398 = vlaneseq
      %v3399 = vshrl.u32 %v3398, 7
      %v3400 = vsub.s32 %v3397, %v3399
      %v3401 = vrot.slane %v3385, %v3400
      %v3403 = vunpack.c.l.s4 1966171168
      %v3404 = vunpack.c.0.s8 %v3403
      %v3405 = vlaneseq
      %v3406 = vshrl.u32 %v3405, 7
      %v3407 = vsub.s32 %v3404, %v3406
      %v3408 = vrot.slane %v3386, %v3407
      %v3410 = vunpack.c.l.s4 1966171168
      %v3411 = vunpack.c.0.s8 %v3410
      %v3412 = vlaneseq
      %v3413 = vshrl.u32 %v3412, 7
      %v3414 = vsub.s32 %v3411, %v3413
      %v3415 = vrot.slane %v3387, %v3414
      %v3416 = vcombine.low %v3394, %v3401
      %v3417 = vcombine.low %v3408, %v3415
      %v3419 = vunpack.c.l.s4 1966171168
      %v3420 = vunpack.c.0.s8 %v3419
      %v3421 = vlaneseq
      %v3422 = vshrl.u32 %v3421, 7
      %v3423 = vsub.s32 %v3420, %v3422
      %v3424 = vrot.slane %v3416, %v3423
      %v3426 = vunpack.c.l.s4 1966171168
      %v3427 = vunpack.c.0.s8 %v3426
      %v3428 = vlaneseq
      %v3429 = vshrl.u32 %v3428, 7
      %v3430 = vsub.s32 %v3427, %v3429
      %v3431 = vrot.slane %v3417, %v3430
      %v3432 = vcombine.low %v3424, %v3431
      %v3433 = vcombine.low %v3293, %v3294
      %v3434 = vcombine.low %v3295, %v3286
      %v3435 = vcombine.low %v3318, %v3332
      %v3436 = vcombine.low %v3333, %v3334
      %v3438 = vunpack.c.l.s4 1966171168
      %v3439 = vunpack.c.0.s8 %v3438
      %v3440 = vlaneseq
      %v3441 = vshrl.u32 %v3440, 7
      %v3442 = vsub.s32 %v3439, %v3441
      %v3443 = vrot.slane %v3433, %v3442
      %v3445 = vunpack.c.l.s4 1966171168
      %v3446 = vunpack.c.0.s8 %v3445
      %v3447 = vlaneseq
      %v3448 = vshrl.u32 %v3447, 7
      %v3449 = vsub.s32 %v3446, %v3448
      %v3450 = vrot.slane %v3434, %v3449
      %v3452 = vunpack.c.l.s4 1966171168
      %v3453 = vunpack.c.0.s8 %v3452
      %v3454 = vlaneseq
      %v3455 = vshrl.u32 %v3454, 7
      %v3456 = vsub.s32 %v3453, %v3455
      %v3457 = vrot.slane %v3435, %v3456
      %v3459 = vunpack.c.l.s4 1966171168
      %v3460 = vunpack.c.0.s8 %v3459
      %v3461 = vlaneseq
      %v3462 = vshrl.u32 %v3461, 7
      %v3463 = vsub.s32 %v3460, %v3462
      %v3464 = vrot.slane %v3436, %v3463
      %v3465 = vcombine.low %v3443, %v3450
      %v3466 = vcombine.low %v3457, %v3464
      %v3468 = vunpack.c.l.s4 1966171168
      %v3469 = vunpack.c.0.s8 %v3468
      %v3470 = vlaneseq
      %v3471 = vshrl.u32 %v3470, 7
      %v3472 = vsub.s32 %v3469, %v3471
      %v3473 = vrot.slane %v3465, %v3472
      %v3475 = vunpack.c.l.s4 1966171168
      %v3476 = vunpack.c.0.s8 %v3475
      %v3477 = vlaneseq
      %v3478 = vshrl.u32 %v3477, 7
      %v3479 = vsub.s32 %v3476, %v3478
      %v3480 = vrot.slane %v3466, %v3479
      %v3481 = vcombine.low %v3473, %v3480
      %v3483 = vunpack.c.l.s4 1966171168
      %v3484 = vunpack.c.0.s8 %v3483
      %v3485 = vlaneseq
      %v3486 = vshrl.u32 %v3485, 7
      %v3487 = vsub.s32 %v3484, %v3486
      %v3488 = vrot.slane %v3325, %v3487
      %v3490 = vunpack.c.l.s4 1966171168
      %v3491 = vunpack.c.0.s8 %v3490
      %v3492 = vlaneseq
      %v3493 = vshrl.u32 %v3492, 7
      %v3494 = vsub.s32 %v3491, %v3493
      %v3495 = vrot.slane %v3488, %v3494
      %v3500 = vpack.c.bf16 %v3432, %v3383
      %v3501 = vpack.c.bf16 %v3495, %v3481
      %v3502 = vsel %vm433, %v3501, 0
      %3503 = vst.msk [vmem:[#allocation2 + $0x10] sm:$0xff] %vm435, %v3500
      %3504 = vst.msk [vmem:[#allocation2 + $0x18] sm:$0xff] %vm435, %v3502
      %v3505 = vld [vmem:[%s3129 + $0x1] sm:$0x1f]
      %v3506 = vld [vmem:[%s3129 + $0x9] sm:$0x1f]
      %v3507 = vld [vmem:[%s3129 + $0x11] sm:$0x1f]
      %v3508 = vld [vmem:[%s3129 + $0x19] sm:$0x1f]
      %v3509 = vld [vmem:[%s3129 + $0x21] sm:$0x1f]
      %v3515 = vcombine.high %v3505, %v3505
      %v3517 = vunpack.c.l.s4 1966171168
      %v3518 = vunpack.c.0.s8 %v3517
      %v3519 = vlaneseq
      %v3520 = vshrl.u32 %v3519, 7
      %v3521 = vsub.s32 %v3518, %v3520
      %v3522 = vrot.slane %v3505, %v3521
      %v3524 = vunpack.c.l.s4 1966171168
      %v3525 = vunpack.c.0.s8 %v3524
      %v3526 = vlaneseq
      %v3527 = vshrl.u32 %v3526, 7
      %v3528 = vsub.s32 %v3525, %v3527
      %v3529 = vrot.slane %v3515, %v3528
      %v3530 = vcombine.high %v3522, %v3522
      %v3532 = vunpack.c.l.s4 1966171168
      %v3533 = vunpack.c.0.s8 %v3532
      %v3534 = vlaneseq
      %v3535 = vshrl.u32 %v3534, 7
      %v3536 = vsub.s32 %v3533, %v3535
      %v3537 = vrot.slane %v3522, %v3536
      %v3539 = vunpack.c.l.s4 1966171168
      %v3540 = vunpack.c.0.s8 %v3539
      %v3541 = vlaneseq
      %v3542 = vshrl.u32 %v3541, 7
      %v3543 = vsub.s32 %v3540, %v3542
      %v3544 = vrot.slane %v3529, %v3543
      %v3546 = vunpack.c.l.s4 1966171168
      %v3547 = vunpack.c.0.s8 %v3546
      %v3548 = vlaneseq
      %v3549 = vshrl.u32 %v3548, 7
      %v3550 = vsub.s32 %v3547, %v3549
      %v3551 = vrot.slane %v3530, %v3550
      %v3552 = vcombine.high %v3537, %v3537
      %v3553 = vcombine.high %v3551, %v3551
      %v3554 = vcombine.high %v3506, %v3506
      %v3556 = vunpack.c.l.s4 1966171168
      %v3557 = vunpack.c.0.s8 %v3556
      %v3558 = vlaneseq
      %v3559 = vshrl.u32 %v3558, 7
      %v3560 = vsub.s32 %v3557, %v3559
      %v3561 = vrot.slane %v3506, %v3560
      %v3563 = vunpack.c.l.s4 1966171168
      %v3564 = vunpack.c.0.s8 %v3563
      %v3565 = vlaneseq
      %v3566 = vshrl.u32 %v3565, 7
      %v3567 = vsub.s32 %v3564, %v3566
      %v3568 = vrot.slane %v3554, %v3567
      %v3569 = vcombine.high %v3561, %v3561
      %v3571 = vunpack.c.l.s4 1966171168
      %v3572 = vunpack.c.0.s8 %v3571
      %v3573 = vlaneseq
      %v3574 = vshrl.u32 %v3573, 7
      %v3575 = vsub.s32 %v3572, %v3574
      %v3576 = vrot.slane %v3561, %v3575
      %v3578 = vunpack.c.l.s4 1966171168
      %v3579 = vunpack.c.0.s8 %v3578
      %v3580 = vlaneseq
      %v3581 = vshrl.u32 %v3580, 7
      %v3582 = vsub.s32 %v3579, %v3581
      %v3583 = vrot.slane %v3568, %v3582
      %v3585 = vunpack.c.l.s4 1966171168
      %v3586 = vunpack.c.0.s8 %v3585
      %v3587 = vlaneseq
      %v3588 = vshrl.u32 %v3587, 7
      %v3589 = vsub.s32 %v3586, %v3588
      %v3590 = vrot.slane %v3569, %v3589
      %v3591 = vcombine.high %v3576, %v3576
      %v3592 = vcombine.high %v3590, %v3590
      %v3593 = vcombine.high %v3507, %v3507
      %v3595 = vunpack.c.l.s4 1966171168
      %v3596 = vunpack.c.0.s8 %v3595
      %v3597 = vlaneseq
      %v3598 = vshrl.u32 %v3597, 7
      %v3599 = vsub.s32 %v3596, %v3598
      %v3600 = vrot.slane %v3507, %v3599
      %v3602 = vunpack.c.l.s4 1966171168
      %v3603 = vunpack.c.0.s8 %v3602
      %v3604 = vlaneseq
      %v3605 = vshrl.u32 %v3604, 7
      %v3606 = vsub.s32 %v3603, %v3605
      %v3607 = vrot.slane %v3593, %v3606
      %v3608 = vcombine.high %v3600, %v3600
      %v3610 = vunpack.c.l.s4 1966171168
      %v3611 = vunpack.c.0.s8 %v3610
      %v3612 = vlaneseq
      %v3613 = vshrl.u32 %v3612, 7
      %v3614 = vsub.s32 %v3611, %v3613
      %v3615 = vrot.slane %v3600, %v3614
      %v3617 = vunpack.c.l.s4 1966171168
      %v3618 = vunpack.c.0.s8 %v3617
      %v3619 = vlaneseq
      %v3620 = vshrl.u32 %v3619, 7
      %v3621 = vsub.s32 %v3618, %v3620
      %v3622 = vrot.slane %v3607, %v3621
      %v3624 = vunpack.c.l.s4 1966171168
      %v3625 = vunpack.c.0.s8 %v3624
      %v3626 = vlaneseq
      %v3627 = vshrl.u32 %v3626, 7
      %v3628 = vsub.s32 %v3625, %v3627
      %v3629 = vrot.slane %v3608, %v3628
      %v3630 = vcombine.high %v3615, %v3615
      %v3631 = vcombine.high %v3629, %v3629
      %v3632 = vcombine.high %v3508, %v3508
      %v3634 = vunpack.c.l.s4 1966171168
      %v3635 = vunpack.c.0.s8 %v3634
      %v3636 = vlaneseq
      %v3637 = vshrl.u32 %v3636, 7
      %v3638 = vsub.s32 %v3635, %v3637
      %v3639 = vrot.slane %v3508, %v3638
      %v3641 = vunpack.c.l.s4 1966171168
      %v3642 = vunpack.c.0.s8 %v3641
      %v3643 = vlaneseq
      %v3644 = vshrl.u32 %v3643, 7
      %v3645 = vsub.s32 %v3642, %v3644
      %v3646 = vrot.slane %v3632, %v3645
      %v3647 = vcombine.high %v3639, %v3639
      %v3649 = vunpack.c.l.s4 1966171168
      %v3650 = vunpack.c.0.s8 %v3649
      %v3651 = vlaneseq
      %v3652 = vshrl.u32 %v3651, 7
      %v3653 = vsub.s32 %v3650, %v3652
      %v3654 = vrot.slane %v3639, %v3653
      %v3656 = vunpack.c.l.s4 1966171168
      %v3657 = vunpack.c.0.s8 %v3656
      %v3658 = vlaneseq
      %v3659 = vshrl.u32 %v3658, 7
      %v3660 = vsub.s32 %v3657, %v3659
      %v3661 = vrot.slane %v3646, %v3660
      %v3663 = vunpack.c.l.s4 1966171168
      %v3664 = vunpack.c.0.s8 %v3663
      %v3665 = vlaneseq
      %v3666 = vshrl.u32 %v3665, 7
      %v3667 = vsub.s32 %v3664, %v3666
      %v3668 = vrot.slane %v3647, %v3667
      %v3669 = vcombine.high %v3654, %v3654
      %v3670 = vcombine.high %v3668, %v3668
      %v3671 = vcombine.high %v3509, %v3509
      %v3673 = vunpack.c.l.s4 1966171168
      %v3674 = vunpack.c.0.s8 %v3673
      %v3675 = vlaneseq
      %v3676 = vshrl.u32 %v3675, 7
      %v3677 = vsub.s32 %v3674, %v3676
      %v3678 = vrot.slane %v3509, %v3677
      %v3680 = vunpack.c.l.s4 1966171168
      %v3681 = vunpack.c.0.s8 %v3680
      %v3682 = vlaneseq
      %v3683 = vshrl.u32 %v3682, 7
      %v3684 = vsub.s32 %v3681, %v3683
      %v3685 = vrot.slane %v3671, %v3684
      %v3686 = vcombine.high %v3678, %v3678
      %v3688 = vunpack.c.l.s4 1966171168
      %v3689 = vunpack.c.0.s8 %v3688
      %v3690 = vlaneseq
      %v3691 = vshrl.u32 %v3690, 7
      %v3692 = vsub.s32 %v3689, %v3691
      %v3693 = vrot.slane %v3678, %v3692
      %v3695 = vunpack.c.l.s4 1966171168
      %v3696 = vunpack.c.0.s8 %v3695
      %v3697 = vlaneseq
      %v3698 = vshrl.u32 %v3697, 7
      %v3699 = vsub.s32 %v3696, %v3698
      %v3700 = vrot.slane %v3685, %v3699
      %v3702 = vunpack.c.l.s4 1966171168
      %v3703 = vunpack.c.0.s8 %v3702
      %v3704 = vlaneseq
      %v3705 = vshrl.u32 %v3704, 7
      %v3706 = vsub.s32 %v3703, %v3705
      %v3707 = vrot.slane %v3686, %v3706
      %v3708 = vcombine.high %v3693, %v3693
      %v3709 = vcombine.high %v3707, %v3707
      %v3710 = vcombine.low %v3537, %v3551
      %v3711 = vcombine.low %v3552, %v3553
      %v3712 = vcombine.low %v3544, %v3576
      %v3713 = vcombine.low %v3590, %v3591
      %v3715 = vunpack.c.l.s4 1966171168
      %v3716 = vunpack.c.0.s8 %v3715
      %v3717 = vlaneseq
      %v3718 = vshrl.u32 %v3717, 7
      %v3719 = vsub.s32 %v3716, %v3718
      %v3720 = vrot.slane %v3710, %v3719
      %v3722 = vunpack.c.l.s4 1966171168
      %v3723 = vunpack.c.0.s8 %v3722
      %v3724 = vlaneseq
      %v3725 = vshrl.u32 %v3724, 7
      %v3726 = vsub.s32 %v3723, %v3725
      %v3727 = vrot.slane %v3711, %v3726
      %v3729 = vunpack.c.l.s4 1966171168
      %v3730 = vunpack.c.0.s8 %v3729
      %v3731 = vlaneseq
      %v3732 = vshrl.u32 %v3731, 7
      %v3733 = vsub.s32 %v3730, %v3732
      %v3734 = vrot.slane %v3712, %v3733
      %v3736 = vunpack.c.l.s4 1966171168
      %v3737 = vunpack.c.0.s8 %v3736
      %v3738 = vlaneseq
      %v3739 = vshrl.u32 %v3738, 7
      %v3740 = vsub.s32 %v3737, %v3739
      %v3741 = vrot.slane %v3713, %v3740
      %v3742 = vcombine.low %v3720, %v3727
      %v3743 = vcombine.low %v3734, %v3741
      %v3745 = vunpack.c.l.s4 1966171168
      %v3746 = vunpack.c.0.s8 %v3745
      %v3747 = vlaneseq
      %v3748 = vshrl.u32 %v3747, 7
      %v3749 = vsub.s32 %v3746, %v3748
      %v3750 = vrot.slane %v3742, %v3749
      %v3752 = vunpack.c.l.s4 1966171168
      %v3753 = vunpack.c.0.s8 %v3752
      %v3754 = vlaneseq
      %v3755 = vshrl.u32 %v3754, 7
      %v3756 = vsub.s32 %v3753, %v3755
      %v3757 = vrot.slane %v3743, %v3756
      %v3758 = vcombine.low %v3750, %v3757
      %v3759 = vcombine.low %v3592, %v3583
      %v3760 = vcombine.low %v3615, %v3629
      %v3761 = vcombine.low %v3630, %v3631
      %v3762 = vcombine.low %v3622, %v3654
      %v3764 = vunpack.c.l.s4 1966171168
      %v3765 = vunpack.c.0.s8 %v3764
      %v3766 = vlaneseq
      %v3767 = vshrl.u32 %v3766, 7
      %v3768 = vsub.s32 %v3765, %v3767
      %v3769 = vrot.slane %v3759, %v3768
      %v3771 = vunpack.c.l.s4 1966171168
      %v3772 = vunpack.c.0.s8 %v3771
      %v3773 = vlaneseq
      %v3774 = vshrl.u32 %v3773, 7
      %v3775 = vsub.s32 %v3772, %v3774
      %v3776 = vrot.slane %v3760, %v3775
      %v3778 = vunpack.c.l.s4 1966171168
      %v3779 = vunpack.c.0.s8 %v3778
      %v3780 = vlaneseq
      %v3781 = vshrl.u32 %v3780, 7
      %v3782 = vsub.s32 %v3779, %v3781
      %v3783 = vrot.slane %v3761, %v3782
      %v3785 = vunpack.c.l.s4 1966171168
      %v3786 = vunpack.c.0.s8 %v3785
      %v3787 = vlaneseq
      %v3788 = vshrl.u32 %v3787, 7
      %v3789 = vsub.s32 %v3786, %v3788
      %v3790 = vrot.slane %v3762, %v3789
      %v3791 = vcombine.low %v3769, %v3776
      %v3792 = vcombine.low %v3783, %v3790
      %v3794 = vunpack.c.l.s4 1966171168
      %v3795 = vunpack.c.0.s8 %v3794
      %v3796 = vlaneseq
      %v3797 = vshrl.u32 %v3796, 7
      %v3798 = vsub.s32 %v3795, %v3797
      %v3799 = vrot.slane %v3791, %v3798
      %v3801 = vunpack.c.l.s4 1966171168
      %v3802 = vunpack.c.0.s8 %v3801
      %v3803 = vlaneseq
      %v3804 = vshrl.u32 %v3803, 7
      %v3805 = vsub.s32 %v3802, %v3804
      %v3806 = vrot.slane %v3792, %v3805
      %v3807 = vcombine.low %v3799, %v3806
      %v3808 = vcombine.low %v3668, %v3669
      %v3809 = vcombine.low %v3670, %v3661
      %v3810 = vcombine.low %v3693, %v3707
      %v3811 = vcombine.low %v3708, %v3709
      %v3813 = vunpack.c.l.s4 1966171168
      %v3814 = vunpack.c.0.s8 %v3813
      %v3815 = vlaneseq
      %v3816 = vshrl.u32 %v3815, 7
      %v3817 = vsub.s32 %v3814, %v3816
      %v3818 = vrot.slane %v3808, %v3817
      %v3820 = vunpack.c.l.s4 1966171168
      %v3821 = vunpack.c.0.s8 %v3820
      %v3822 = vlaneseq
      %v3823 = vshrl.u32 %v3822, 7
      %v3824 = vsub.s32 %v3821, %v3823
      %v3825 = vrot.slane %v3809, %v3824
      %v3827 = vunpack.c.l.s4 1966171168
      %v3828 = vunpack.c.0.s8 %v3827
      %v3829 = vlaneseq
      %v3830 = vshrl.u32 %v3829, 7
      %v3831 = vsub.s32 %v3828, %v3830
      %v3832 = vrot.slane %v3810, %v3831
      %v3834 = vunpack.c.l.s4 1966171168
      %v3835 = vunpack.c.0.s8 %v3834
      %v3836 = vlaneseq
      %v3837 = vshrl.u32 %v3836, 7
      %v3838 = vsub.s32 %v3835, %v3837
      %v3839 = vrot.slane %v3811, %v3838
      %v3840 = vcombine.low %v3818, %v3825
      %v3841 = vcombine.low %v3832, %v3839
      %v3843 = vunpack.c.l.s4 1966171168
      %v3844 = vunpack.c.0.s8 %v3843
      %v3845 = vlaneseq
      %v3846 = vshrl.u32 %v3845, 7
      %v3847 = vsub.s32 %v3844, %v3846
      %v3848 = vrot.slane %v3840, %v3847
      %v3850 = vunpack.c.l.s4 1966171168
      %v3851 = vunpack.c.0.s8 %v3850
      %v3852 = vlaneseq
      %v3853 = vshrl.u32 %v3852, 7
      %v3854 = vsub.s32 %v3851, %v3853
      %v3855 = vrot.slane %v3841, %v3854
      %v3856 = vcombine.low %v3848, %v3855
      %v3858 = vunpack.c.l.s4 1966171168
      %v3859 = vunpack.c.0.s8 %v3858
      %v3860 = vlaneseq
      %v3861 = vshrl.u32 %v3860, 7
      %v3862 = vsub.s32 %v3859, %v3861
      %v3863 = vrot.slane %v3700, %v3862
      %v3865 = vunpack.c.l.s4 1966171168
      %v3866 = vunpack.c.0.s8 %v3865
      %v3867 = vlaneseq
      %v3868 = vshrl.u32 %v3867, 7
      %v3869 = vsub.s32 %v3866, %v3868
      %v3870 = vrot.slane %v3863, %v3869
      %v3875 = vpack.c.bf16 %v3807, %v3758
      %v3876 = vpack.c.bf16 %v3870, %v3856
      %v3877 = vsel %vm433, %v3876, 0
      %3880 = vrot.lane.b32.xlu0 %v3875, 8
      %v3881 = vpop.permute.xlu0 %3880
      %3882 = vrot.lane.b32.xlu0 %v3877, 8
      %v3883 = vpop.permute.xlu0 %3882
      %3886 = vst.msk [vmem:[#allocation2 + $0x10] sm:$0xff] %vm819, %v3881
      %3887 = vst.msk [vmem:[#allocation2 + $0x18] sm:$0xff] %vm819, %v3883
      %s3888 = scalar_lea.vmem [#allocation3], 72
      %v3889 = vld [vmem:[%s3888] sm:$0x1f]
      %v3890 = vld [vmem:[%s3888 + $0x8] sm:$0x1f]
      %v3891 = vld [vmem:[%s3888 + $0x10] sm:$0x1f]
      %v3892 = vld [vmem:[%s3888 + $0x18] sm:$0x1f]
      %v3893 = vld [vmem:[%s3888 + $0x20] sm:$0x1f]
      %v3899 = vcombine.high %v3889, %v3889
      %v3901 = vunpack.c.l.s4 1966171168
      %v3902 = vunpack.c.0.s8 %v3901
      %v3903 = vlaneseq
      %v3904 = vshrl.u32 %v3903, 7
      %v3905 = vsub.s32 %v3902, %v3904
      %v3906 = vrot.slane %v3889, %v3905
      %v3908 = vunpack.c.l.s4 1966171168
      %v3909 = vunpack.c.0.s8 %v3908
      %v3910 = vlaneseq
      %v3911 = vshrl.u32 %v3910, 7
      %v3912 = vsub.s32 %v3909, %v3911
      %v3913 = vrot.slane %v3899, %v3912
      %v3914 = vcombine.high %v3906, %v3906
      %v3916 = vunpack.c.l.s4 1966171168
      %v3917 = vunpack.c.0.s8 %v3916
      %v3918 = vlaneseq
      %v3919 = vshrl.u32 %v3918, 7
      %v3920 = vsub.s32 %v3917, %v3919
      %v3921 = vrot.slane %v3906, %v3920
      %v3923 = vunpack.c.l.s4 1966171168
      %v3924 = vunpack.c.0.s8 %v3923
      %v3925 = vlaneseq
      %v3926 = vshrl.u32 %v3925, 7
      %v3927 = vsub.s32 %v3924, %v3926
      %v3928 = vrot.slane %v3913, %v3927
      %v3930 = vunpack.c.l.s4 1966171168
      %v3931 = vunpack.c.0.s8 %v3930
      %v3932 = vlaneseq
      %v3933 = vshrl.u32 %v3932, 7
      %v3934 = vsub.s32 %v3931, %v3933
      %v3935 = vrot.slane %v3914, %v3934
      %v3936 = vcombine.high %v3921, %v3921
      %v3937 = vcombine.high %v3935, %v3935
      %v3938 = vcombine.high %v3890, %v3890
      %v3940 = vunpack.c.l.s4 1966171168
      %v3941 = vunpack.c.0.s8 %v3940
      %v3942 = vlaneseq
      %v3943 = vshrl.u32 %v3942, 7
      %v3944 = vsub.s32 %v3941, %v3943
      %v3945 = vrot.slane %v3890, %v3944
      %v3947 = vunpack.c.l.s4 1966171168
      %v3948 = vunpack.c.0.s8 %v3947
      %v3949 = vlaneseq
      %v3950 = vshrl.u32 %v3949, 7
      %v3951 = vsub.s32 %v3948, %v3950
      %v3952 = vrot.slane %v3938, %v3951
      %v3953 = vcombine.high %v3945, %v3945
      %v3955 = vunpack.c.l.s4 1966171168
      %v3956 = vunpack.c.0.s8 %v3955
      %v3957 = vlaneseq
      %v3958 = vshrl.u32 %v3957, 7
      %v3959 = vsub.s32 %v3956, %v3958
      %v3960 = vrot.slane %v3945, %v3959
      %v3962 = vunpack.c.l.s4 1966171168
      %v3963 = vunpack.c.0.s8 %v3962
      %v3964 = vlaneseq
      %v3965 = vshrl.u32 %v3964, 7
      %v3966 = vsub.s32 %v3963, %v3965
      %v3967 = vrot.slane %v3952, %v3966
      %v3969 = vunpack.c.l.s4 1966171168
      %v3970 = vunpack.c.0.s8 %v3969
      %v3971 = vlaneseq
      %v3972 = vshrl.u32 %v3971, 7
      %v3973 = vsub.s32 %v3970, %v3972
      %v3974 = vrot.slane %v3953, %v3973
      %v3975 = vcombine.high %v3960, %v3960
      %v3976 = vcombine.high %v3974, %v3974
      %v3977 = vcombine.high %v3891, %v3891
      %v3979 = vunpack.c.l.s4 1966171168
      %v3980 = vunpack.c.0.s8 %v3979
      %v3981 = vlaneseq
      %v3982 = vshrl.u32 %v3981, 7
      %v3983 = vsub.s32 %v3980, %v3982
      %v3984 = vrot.slane %v3891, %v3983
      %v3986 = vunpack.c.l.s4 1966171168
      %v3987 = vunpack.c.0.s8 %v3986
      %v3988 = vlaneseq
      %v3989 = vshrl.u32 %v3988, 7
      %v3990 = vsub.s32 %v3987, %v3989
      %v3991 = vrot.slane %v3977, %v3990
      %v3992 = vcombine.high %v3984, %v3984
      %v3994 = vunpack.c.l.s4 1966171168
      %v3995 = vunpack.c.0.s8 %v3994
      %v3996 = vlaneseq
      %v3997 = vshrl.u32 %v3996, 7
      %v3998 = vsub.s32 %v3995, %v3997
      %v3999 = vrot.slane %v3984, %v3998
      %v4001 = vunpack.c.l.s4 1966171168
      %v4002 = vunpack.c.0.s8 %v4001
      %v4003 = vlaneseq
      %v4004 = vshrl.u32 %v4003, 7
      %v4005 = vsub.s32 %v4002, %v4004
      %v4006 = vrot.slane %v3991, %v4005
      %v4008 = vunpack.c.l.s4 1966171168
      %v4009 = vunpack.c.0.s8 %v4008
      %v4010 = vlaneseq
      %v4011 = vshrl.u32 %v4010, 7
      %v4012 = vsub.s32 %v4009, %v4011
      %v4013 = vrot.slane %v3992, %v4012
      %v4014 = vcombine.high %v3999, %v3999
      %v4015 = vcombine.high %v4013, %v4013
      %v4016 = vcombine.high %v3892, %v3892
      %v4018 = vunpack.c.l.s4 1966171168
      %v4019 = vunpack.c.0.s8 %v4018
      %v4020 = vlaneseq
      %v4021 = vshrl.u32 %v4020, 7
      %v4022 = vsub.s32 %v4019, %v4021
      %v4023 = vrot.slane %v3892, %v4022
      %v4025 = vunpack.c.l.s4 1966171168
      %v4026 = vunpack.c.0.s8 %v4025
      %v4027 = vlaneseq
      %v4028 = vshrl.u32 %v4027, 7
      %v4029 = vsub.s32 %v4026, %v4028
      %v4030 = vrot.slane %v4016, %v4029
      %v4031 = vcombine.high %v4023, %v4023
      %v4033 = vunpack.c.l.s4 1966171168
      %v4034 = vunpack.c.0.s8 %v4033
      %v4035 = vlaneseq
      %v4036 = vshrl.u32 %v4035, 7
      %v4037 = vsub.s32 %v4034, %v4036
      %v4038 = vrot.slane %v4023, %v4037
      %v4040 = vunpack.c.l.s4 1966171168
      %v4041 = vunpack.c.0.s8 %v4040
      %v4042 = vlaneseq
      %v4043 = vshrl.u32 %v4042, 7
      %v4044 = vsub.s32 %v4041, %v4043
      %v4045 = vrot.slane %v4030, %v4044
      %v4047 = vunpack.c.l.s4 1966171168
      %v4048 = vunpack.c.0.s8 %v4047
      %v4049 = vlaneseq
      %v4050 = vshrl.u32 %v4049, 7
      %v4051 = vsub.s32 %v4048, %v4050
      %v4052 = vrot.slane %v4031, %v4051
      %v4053 = vcombine.high %v4038, %v4038
      %v4054 = vcombine.high %v4052, %v4052
      %v4055 = vcombine.high %v3893, %v3893
      %v4057 = vunpack.c.l.s4 1966171168
      %v4058 = vunpack.c.0.s8 %v4057
      %v4059 = vlaneseq
      %v4060 = vshrl.u32 %v4059, 7
      %v4061 = vsub.s32 %v4058, %v4060
      %v4062 = vrot.slane %v3893, %v4061
      %v4064 = vunpack.c.l.s4 1966171168
      %v4065 = vunpack.c.0.s8 %v4064
      %v4066 = vlaneseq
      %v4067 = vshrl.u32 %v4066, 7
      %v4068 = vsub.s32 %v4065, %v4067
      %v4069 = vrot.slane %v4055, %v4068
      %v4070 = vcombine.high %v4062, %v4062
      %v4072 = vunpack.c.l.s4 1966171168
      %v4073 = vunpack.c.0.s8 %v4072
      %v4074 = vlaneseq
      %v4075 = vshrl.u32 %v4074, 7
      %v4076 = vsub.s32 %v4073, %v4075
      %v4077 = vrot.slane %v4062, %v4076
      %v4079 = vunpack.c.l.s4 1966171168
      %v4080 = vunpack.c.0.s8 %v4079
      %v4081 = vlaneseq
      %v4082 = vshrl.u32 %v4081, 7
      %v4083 = vsub.s32 %v4080, %v4082
      %v4084 = vrot.slane %v4069, %v4083
      %v4086 = vunpack.c.l.s4 1966171168
      %v4087 = vunpack.c.0.s8 %v4086
      %v4088 = vlaneseq
      %v4089 = vshrl.u32 %v4088, 7
      %v4090 = vsub.s32 %v4087, %v4089
      %v4091 = vrot.slane %v4070, %v4090
      %v4092 = vcombine.high %v4077, %v4077
      %v4093 = vcombine.high %v4091, %v4091
      %v4094 = vcombine.low %v3921, %v3935
      %v4095 = vcombine.low %v3936, %v3937
      %v4096 = vcombine.low %v3928, %v3960
      %v4097 = vcombine.low %v3974, %v3975
      %v4099 = vunpack.c.l.s4 1966171168
      %v4100 = vunpack.c.0.s8 %v4099
      %v4101 = vlaneseq
      %v4102 = vshrl.u32 %v4101, 7
      %v4103 = vsub.s32 %v4100, %v4102
      %v4104 = vrot.slane %v4094, %v4103
      %v4106 = vunpack.c.l.s4 1966171168
      %v4107 = vunpack.c.0.s8 %v4106
      %v4108 = vlaneseq
      %v4109 = vshrl.u32 %v4108, 7
      %v4110 = vsub.s32 %v4107, %v4109
      %v4111 = vrot.slane %v4095, %v4110
      %v4113 = vunpack.c.l.s4 1966171168
      %v4114 = vunpack.c.0.s8 %v4113
      %v4115 = vlaneseq
      %v4116 = vshrl.u32 %v4115, 7
      %v4117 = vsub.s32 %v4114, %v4116
      %v4118 = vrot.slane %v4096, %v4117
      %v4120 = vunpack.c.l.s4 1966171168
      %v4121 = vunpack.c.0.s8 %v4120
      %v4122 = vlaneseq
      %v4123 = vshrl.u32 %v4122, 7
      %v4124 = vsub.s32 %v4121, %v4123
      %v4125 = vrot.slane %v4097, %v4124
      %v4126 = vcombine.low %v4104, %v4111
      %v4127 = vcombine.low %v4118, %v4125
      %v4129 = vunpack.c.l.s4 1966171168
      %v4130 = vunpack.c.0.s8 %v4129
      %v4131 = vlaneseq
      %v4132 = vshrl.u32 %v4131, 7
      %v4133 = vsub.s32 %v4130, %v4132
      %v4134 = vrot.slane %v4126, %v4133
      %v4136 = vunpack.c.l.s4 1966171168
      %v4137 = vunpack.c.0.s8 %v4136
      %v4138 = vlaneseq
      %v4139 = vshrl.u32 %v4138, 7
      %v4140 = vsub.s32 %v4137, %v4139
      %v4141 = vrot.slane %v4127, %v4140
      %v4142 = vcombine.low %v4134, %v4141
      %v4143 = vcombine.low %v3976, %v3967
      %v4144 = vcombine.low %v3999, %v4013
      %v4145 = vcombine.low %v4014, %v4015
      %v4146 = vcombine.low %v4006, %v4038
      %v4148 = vunpack.c.l.s4 1966171168
      %v4149 = vunpack.c.0.s8 %v4148
      %v4150 = vlaneseq
      %v4151 = vshrl.u32 %v4150, 7
      %v4152 = vsub.s32 %v4149, %v4151
      %v4153 = vrot.slane %v4143, %v4152
      %v4155 = vunpack.c.l.s4 1966171168
      %v4156 = vunpack.c.0.s8 %v4155
      %v4157 = vlaneseq
      %v4158 = vshrl.u32 %v4157, 7
      %v4159 = vsub.s32 %v4156, %v4158
      %v4160 = vrot.slane %v4144, %v4159
      %v4162 = vunpack.c.l.s4 1966171168
      %v4163 = vunpack.c.0.s8 %v4162
      %v4164 = vlaneseq
      %v4165 = vshrl.u32 %v4164, 7
      %v4166 = vsub.s32 %v4163, %v4165
      %v4167 = vrot.slane %v4145, %v4166
      %v4169 = vunpack.c.l.s4 1966171168
      %v4170 = vunpack.c.0.s8 %v4169
      %v4171 = vlaneseq
      %v4172 = vshrl.u32 %v4171, 7
      %v4173 = vsub.s32 %v4170, %v4172
      %v4174 = vrot.slane %v4146, %v4173
      %v4175 = vcombine.low %v4153, %v4160
      %v4176 = vcombine.low %v4167, %v4174
      %v4178 = vunpack.c.l.s4 1966171168
      %v4179 = vunpack.c.0.s8 %v4178
      %v4180 = vlaneseq
      %v4181 = vshrl.u32 %v4180, 7
      %v4182 = vsub.s32 %v4179, %v4181
      %v4183 = vrot.slane %v4175, %v4182
      %v4185 = vunpack.c.l.s4 1966171168
      %v4186 = vunpack.c.0.s8 %v4185
      %v4187 = vlaneseq
      %v4188 = vshrl.u32 %v4187, 7
      %v4189 = vsub.s32 %v4186, %v4188
      %v4190 = vrot.slane %v4176, %v4189
      %v4191 = vcombine.low %v4183, %v4190
      %v4192 = vcombine.low %v4052, %v4053
      %v4193 = vcombine.low %v4054, %v4045
      %v4194 = vcombine.low %v4077, %v4091
      %v4195 = vcombine.low %v4092, %v4093
      %v4197 = vunpack.c.l.s4 1966171168
      %v4198 = vunpack.c.0.s8 %v4197
      %v4199 = vlaneseq
      %v4200 = vshrl.u32 %v4199, 7
      %v4201 = vsub.s32 %v4198, %v4200
      %v4202 = vrot.slane %v4192, %v4201
      %v4204 = vunpack.c.l.s4 1966171168
      %v4205 = vunpack.c.0.s8 %v4204
      %v4206 = vlaneseq
      %v4207 = vshrl.u32 %v4206, 7
      %v4208 = vsub.s32 %v4205, %v4207
      %v4209 = vrot.slane %v4193, %v4208
      %v4211 = vunpack.c.l.s4 1966171168
      %v4212 = vunpack.c.0.s8 %v4211
      %v4213 = vlaneseq
      %v4214 = vshrl.u32 %v4213, 7
      %v4215 = vsub.s32 %v4212, %v4214
      %v4216 = vrot.slane %v4194, %v4215
      %v4218 = vunpack.c.l.s4 1966171168
      %v4219 = vunpack.c.0.s8 %v4218
      %v4220 = vlaneseq
      %v4221 = vshrl.u32 %v4220, 7
      %v4222 = vsub.s32 %v4219, %v4221
      %v4223 = vrot.slane %v4195, %v4222
      %v4224 = vcombine.low %v4202, %v4209
      %v4225 = vcombine.low %v4216, %v4223
      %v4227 = vunpack.c.l.s4 1966171168
      %v4228 = vunpack.c.0.s8 %v4227
      %v4229 = vlaneseq
      %v4230 = vshrl.u32 %v4229, 7
      %v4231 = vsub.s32 %v4228, %v4230
      %v4232 = vrot.slane %v4224, %v4231
      %v4234 = vunpack.c.l.s4 1966171168
      %v4235 = vunpack.c.0.s8 %v4234
      %v4236 = vlaneseq
      %v4237 = vshrl.u32 %v4236, 7
      %v4238 = vsub.s32 %v4235, %v4237
      %v4239 = vrot.slane %v4225, %v4238
      %v4240 = vcombine.low %v4232, %v4239
      %v4242 = vunpack.c.l.s4 1966171168
      %v4243 = vunpack.c.0.s8 %v4242
      %v4244 = vlaneseq
      %v4245 = vshrl.u32 %v4244, 7
      %v4246 = vsub.s32 %v4243, %v4245
      %v4247 = vrot.slane %v4084, %v4246
      %v4249 = vunpack.c.l.s4 1966171168
      %v4250 = vunpack.c.0.s8 %v4249
      %v4251 = vlaneseq
      %v4252 = vshrl.u32 %v4251, 7
      %v4253 = vsub.s32 %v4250, %v4252
      %v4254 = vrot.slane %v4247, %v4253
      %v4259 = vpack.c.bf16 %v4191, %v4142
      %v4260 = vpack.c.bf16 %v4254, %v4240
      %v4261 = vsel %vm433, %v4260, 0
      %4264 = vrot.lane.b32.xlu0 %v4259, 16
      %v4265 = vpop.permute.xlu0 %4264
      %4266 = vrot.lane.b32.xlu0 %v4261, 16
      %v4267 = vpop.permute.xlu0 %4266
      %4270 = vst.msk [vmem:[#allocation2 + $0x10] sm:$0xff] %vm1204, %v4265
      %4271 = vst.msk [vmem:[#allocation2 + $0x18] sm:$0xff] %vm1204, %v4267
      %v4272 = vld [vmem:[%s3888 + $0x1] sm:$0x1f]
      %v4273 = vld [vmem:[%s3888 + $0x9] sm:$0x1f]
      %v4274 = vld [vmem:[%s3888 + $0x11] sm:$0x1f]
      %v4275 = vld [vmem:[%s3888 + $0x19] sm:$0x1f]
      %v4276 = vld [vmem:[%s3888 + $0x21] sm:$0x1f]
      %v4282 = vcombine.high %v4272, %v4272
      %v4284 = vunpack.c.l.s4 1966171168
      %v4285 = vunpack.c.0.s8 %v4284
      %v4286 = vlaneseq
      %v4287 = vshrl.u32 %v4286, 7
      %v4288 = vsub.s32 %v4285, %v4287
      %v4289 = vrot.slane %v4272, %v4288
      %v4291 = vunpack.c.l.s4 1966171168
      %v4292 = vunpack.c.0.s8 %v4291
      %v4293 = vlaneseq
      %v4294 = vshrl.u32 %v4293, 7
      %v4295 = vsub.s32 %v4292, %v4294
      %v4296 = vrot.slane %v4282, %v4295
      %v4297 = vcombine.high %v4289, %v4289
      %v4299 = vunpack.c.l.s4 1966171168
      %v4300 = vunpack.c.0.s8 %v4299
      %v4301 = vlaneseq
      %v4302 = vshrl.u32 %v4301, 7
      %v4303 = vsub.s32 %v4300, %v4302
      %v4304 = vrot.slane %v4289, %v4303
      %v4306 = vunpack.c.l.s4 1966171168
      %v4307 = vunpack.c.0.s8 %v4306
      %v4308 = vlaneseq
      %v4309 = vshrl.u32 %v4308, 7
      %v4310 = vsub.s32 %v4307, %v4309
      %v4311 = vrot.slane %v4296, %v4310
      %v4313 = vunpack.c.l.s4 1966171168
      %v4314 = vunpack.c.0.s8 %v4313
      %v4315 = vlaneseq
      %v4316 = vshrl.u32 %v4315, 7
      %v4317 = vsub.s32 %v4314, %v4316
      %v4318 = vrot.slane %v4297, %v4317
      %v4319 = vcombine.high %v4304, %v4304
      %v4320 = vcombine.high %v4318, %v4318
      %v4321 = vcombine.high %v4273, %v4273
      %v4323 = vunpack.c.l.s4 1966171168
      %v4324 = vunpack.c.0.s8 %v4323
      %v4325 = vlaneseq
      %v4326 = vshrl.u32 %v4325, 7
      %v4327 = vsub.s32 %v4324, %v4326
      %v4328 = vrot.slane %v4273, %v4327
      %v4330 = vunpack.c.l.s4 1966171168
      %v4331 = vunpack.c.0.s8 %v4330
      %v4332 = vlaneseq
      %v4333 = vshrl.u32 %v4332, 7
      %v4334 = vsub.s32 %v4331, %v4333
      %v4335 = vrot.slane %v4321, %v4334
      %v4336 = vcombine.high %v4328, %v4328
      %v4338 = vunpack.c.l.s4 1966171168
      %v4339 = vunpack.c.0.s8 %v4338
      %v4340 = vlaneseq
      %v4341 = vshrl.u32 %v4340, 7
      %v4342 = vsub.s32 %v4339, %v4341
      %v4343 = vrot.slane %v4328, %v4342
      %v4345 = vunpack.c.l.s4 1966171168
      %v4346 = vunpack.c.0.s8 %v4345
      %v4347 = vlaneseq
      %v4348 = vshrl.u32 %v4347, 7
      %v4349 = vsub.s32 %v4346, %v4348
      %v4350 = vrot.slane %v4335, %v4349
      %v4352 = vunpack.c.l.s4 1966171168
      %v4353 = vunpack.c.0.s8 %v4352
      %v4354 = vlaneseq
      %v4355 = vshrl.u32 %v4354, 7
      %v4356 = vsub.s32 %v4353, %v4355
      %v4357 = vrot.slane %v4336, %v4356
      %v4358 = vcombine.high %v4343, %v4343
      %v4359 = vcombine.high %v4357, %v4357
      %v4360 = vcombine.high %v4274, %v4274
      %v4362 = vunpack.c.l.s4 1966171168
      %v4363 = vunpack.c.0.s8 %v4362
      %v4364 = vlaneseq
      %v4365 = vshrl.u32 %v4364, 7
      %v4366 = vsub.s32 %v4363, %v4365
      %v4367 = vrot.slane %v4274, %v4366
      %v4369 = vunpack.c.l.s4 1966171168
      %v4370 = vunpack.c.0.s8 %v4369
      %v4371 = vlaneseq
      %v4372 = vshrl.u32 %v4371, 7
      %v4373 = vsub.s32 %v4370, %v4372
      %v4374 = vrot.slane %v4360, %v4373
      %v4375 = vcombine.high %v4367, %v4367
      %v4377 = vunpack.c.l.s4 1966171168
      %v4378 = vunpack.c.0.s8 %v4377
      %v4379 = vlaneseq
      %v4380 = vshrl.u32 %v4379, 7
      %v4381 = vsub.s32 %v4378, %v4380
      %v4382 = vrot.slane %v4367, %v4381
      %v4384 = vunpack.c.l.s4 1966171168
      %v4385 = vunpack.c.0.s8 %v4384
      %v4386 = vlaneseq
      %v4387 = vshrl.u32 %v4386, 7
      %v4388 = vsub.s32 %v4385, %v4387
      %v4389 = vrot.slane %v4374, %v4388
      %v4391 = vunpack.c.l.s4 1966171168
      %v4392 = vunpack.c.0.s8 %v4391
      %v4393 = vlaneseq
      %v4394 = vshrl.u32 %v4393, 7
      %v4395 = vsub.s32 %v4392, %v4394
      %v4396 = vrot.slane %v4375, %v4395
      %v4397 = vcombine.high %v4382, %v4382
      %v4398 = vcombine.high %v4396, %v4396
      %v4399 = vcombine.high %v4275, %v4275
      %v4401 = vunpack.c.l.s4 1966171168
      %v4402 = vunpack.c.0.s8 %v4401
      %v4403 = vlaneseq
      %v4404 = vshrl.u32 %v4403, 7
      %v4405 = vsub.s32 %v4402, %v4404
      %v4406 = vrot.slane %v4275, %v4405
      %v4408 = vunpack.c.l.s4 1966171168
      %v4409 = vunpack.c.0.s8 %v4408
      %v4410 = vlaneseq
      %v4411 = vshrl.u32 %v4410, 7
      %v4412 = vsub.s32 %v4409, %v4411
      %v4413 = vrot.slane %v4399, %v4412
      %v4414 = vcombine.high %v4406, %v4406
      %v4416 = vunpack.c.l.s4 1966171168
      %v4417 = vunpack.c.0.s8 %v4416
      %v4418 = vlaneseq
      %v4419 = vshrl.u32 %v4418, 7
      %v4420 = vsub.s32 %v4417, %v4419
      %v4421 = vrot.slane %v4406, %v4420
      %v4423 = vunpack.c.l.s4 1966171168
      %v4424 = vunpack.c.0.s8 %v4423
      %v4425 = vlaneseq
      %v4426 = vshrl.u32 %v4425, 7
      %v4427 = vsub.s32 %v4424, %v4426
      %v4428 = vrot.slane %v4413, %v4427
      %v4430 = vunpack.c.l.s4 1966171168
      %v4431 = vunpack.c.0.s8 %v4430
      %v4432 = vlaneseq
      %v4433 = vshrl.u32 %v4432, 7
      %v4434 = vsub.s32 %v4431, %v4433
      %v4435 = vrot.slane %v4414, %v4434
      %v4436 = vcombine.high %v4421, %v4421
      %v4437 = vcombine.high %v4435, %v4435
      %v4438 = vcombine.high %v4276, %v4276
      %v4440 = vunpack.c.l.s4 1966171168
      %v4441 = vunpack.c.0.s8 %v4440
      %v4442 = vlaneseq
      %v4443 = vshrl.u32 %v4442, 7
      %v4444 = vsub.s32 %v4441, %v4443
      %v4445 = vrot.slane %v4276, %v4444
      %v4447 = vunpack.c.l.s4 1966171168
      %v4448 = vunpack.c.0.s8 %v4447
      %v4449 = vlaneseq
      %v4450 = vshrl.u32 %v4449, 7
      %v4451 = vsub.s32 %v4448, %v4450
      %v4452 = vrot.slane %v4438, %v4451
      %v4453 = vcombine.high %v4445, %v4445
      %v4455 = vunpack.c.l.s4 1966171168
      %v4456 = vunpack.c.0.s8 %v4455
      %v4457 = vlaneseq
      %v4458 = vshrl.u32 %v4457, 7
      %v4459 = vsub.s32 %v4456, %v4458
      %v4460 = vrot.slane %v4445, %v4459
      %v4462 = vunpack.c.l.s4 1966171168
      %v4463 = vunpack.c.0.s8 %v4462
      %v4464 = vlaneseq
      %v4465 = vshrl.u32 %v4464, 7
      %v4466 = vsub.s32 %v4463, %v4465
      %v4467 = vrot.slane %v4452, %v4466
      %v4469 = vunpack.c.l.s4 1966171168
      %v4470 = vunpack.c.0.s8 %v4469
      %v4471 = vlaneseq
      %v4472 = vshrl.u32 %v4471, 7
      %v4473 = vsub.s32 %v4470, %v4472
      %v4474 = vrot.slane %v4453, %v4473
      %v4475 = vcombine.high %v4460, %v4460
      %v4476 = vcombine.high %v4474, %v4474
      %v4477 = vcombine.low %v4304, %v4318
      %v4478 = vcombine.low %v4319, %v4320
      %v4479 = vcombine.low %v4311, %v4343
      %v4480 = vcombine.low %v4357, %v4358
      %v4482 = vunpack.c.l.s4 1966171168
      %v4483 = vunpack.c.0.s8 %v4482
      %v4484 = vlaneseq
      %v4485 = vshrl.u32 %v4484, 7
      %v4486 = vsub.s32 %v4483, %v4485
      %v4487 = vrot.slane %v4477, %v4486
      %v4489 = vunpack.c.l.s4 1966171168
      %v4490 = vunpack.c.0.s8 %v4489
      %v4491 = vlaneseq
      %v4492 = vshrl.u32 %v4491, 7
      %v4493 = vsub.s32 %v4490, %v4492
      %v4494 = vrot.slane %v4478, %v4493
      %v4496 = vunpack.c.l.s4 1966171168
      %v4497 = vunpack.c.0.s8 %v4496
      %v4498 = vlaneseq
      %v4499 = vshrl.u32 %v4498, 7
      %v4500 = vsub.s32 %v4497, %v4499
      %v4501 = vrot.slane %v4479, %v4500
      %v4503 = vunpack.c.l.s4 1966171168
      %v4504 = vunpack.c.0.s8 %v4503
      %v4505 = vlaneseq
      %v4506 = vshrl.u32 %v4505, 7
      %v4507 = vsub.s32 %v4504, %v4506
      %v4508 = vrot.slane %v4480, %v4507
      %v4509 = vcombine.low %v4487, %v4494
      %v4510 = vcombine.low %v4501, %v4508
      %v4512 = vunpack.c.l.s4 1966171168
      %v4513 = vunpack.c.0.s8 %v4512
      %v4514 = vlaneseq
      %v4515 = vshrl.u32 %v4514, 7
      %v4516 = vsub.s32 %v4513, %v4515
      %v4517 = vrot.slane %v4509, %v4516
      %v4519 = vunpack.c.l.s4 1966171168
      %v4520 = vunpack.c.0.s8 %v4519
      %v4521 = vlaneseq
      %v4522 = vshrl.u32 %v4521, 7
      %v4523 = vsub.s32 %v4520, %v4522
      %v4524 = vrot.slane %v4510, %v4523
      %v4525 = vcombine.low %v4517, %v4524
      %v4526 = vcombine.low %v4359, %v4350
      %v4527 = vcombine.low %v4382, %v4396
      %v4528 = vcombine.low %v4397, %v4398
      %v4529 = vcombine.low %v4389, %v4421
      %v4531 = vunpack.c.l.s4 1966171168
      %v4532 = vunpack.c.0.s8 %v4531
      %v4533 = vlaneseq
      %v4534 = vshrl.u32 %v4533, 7
      %v4535 = vsub.s32 %v4532, %v4534
      %v4536 = vrot.slane %v4526, %v4535
      %v4538 = vunpack.c.l.s4 1966171168
      %v4539 = vunpack.c.0.s8 %v4538
      %v4540 = vlaneseq
      %v4541 = vshrl.u32 %v4540, 7
      %v4542 = vsub.s32 %v4539, %v4541
      %v4543 = vrot.slane %v4527, %v4542
      %v4545 = vunpack.c.l.s4 1966171168
      %v4546 = vunpack.c.0.s8 %v4545
      %v4547 = vlaneseq
      %v4548 = vshrl.u32 %v4547, 7
      %v4549 = vsub.s32 %v4546, %v4548
      %v4550 = vrot.slane %v4528, %v4549
      %v4552 = vunpack.c.l.s4 1966171168
      %v4553 = vunpack.c.0.s8 %v4552
      %v4554 = vlaneseq
      %v4555 = vshrl.u32 %v4554, 7
      %v4556 = vsub.s32 %v4553, %v4555
      %v4557 = vrot.slane %v4529, %v4556
      %v4558 = vcombine.low %v4536, %v4543
      %v4559 = vcombine.low %v4550, %v4557
      %v4561 = vunpack.c.l.s4 1966171168
      %v4562 = vunpack.c.0.s8 %v4561
      %v4563 = vlaneseq
      %v4564 = vshrl.u32 %v4563, 7
      %v4565 = vsub.s32 %v4562, %v4564
      %v4566 = vrot.slane %v4558, %v4565
      %v4568 = vunpack.c.l.s4 1966171168
      %v4569 = vunpack.c.0.s8 %v4568
      %v4570 = vlaneseq
      %v4571 = vshrl.u32 %v4570, 7
      %v4572 = vsub.s32 %v4569, %v4571
      %v4573 = vrot.slane %v4559, %v4572
      %v4574 = vcombine.low %v4566, %v4573
      %v4575 = vcombine.low %v4435, %v4436
      %v4576 = vcombine.low %v4437, %v4428
      %v4577 = vcombine.low %v4460, %v4474
      %v4578 = vcombine.low %v4475, %v4476
      %v4580 = vunpack.c.l.s4 1966171168
      %v4581 = vunpack.c.0.s8 %v4580
      %v4582 = vlaneseq
      %v4583 = vshrl.u32 %v4582, 7
      %v4584 = vsub.s32 %v4581, %v4583
      %v4585 = vrot.slane %v4575, %v4584
      %v4587 = vunpack.c.l.s4 1966171168
      %v4588 = vunpack.c.0.s8 %v4587
      %v4589 = vlaneseq
      %v4590 = vshrl.u32 %v4589, 7
      %v4591 = vsub.s32 %v4588, %v4590
      %v4592 = vrot.slane %v4576, %v4591
      %v4594 = vunpack.c.l.s4 1966171168
      %v4595 = vunpack.c.0.s8 %v4594
      %v4596 = vlaneseq
      %v4597 = vshrl.u32 %v4596, 7
      %v4598 = vsub.s32 %v4595, %v4597
      %v4599 = vrot.slane %v4577, %v4598
      %v4601 = vunpack.c.l.s4 1966171168
      %v4602 = vunpack.c.0.s8 %v4601
      %v4603 = vlaneseq
      %v4604 = vshrl.u32 %v4603, 7
      %v4605 = vsub.s32 %v4602, %v4604
      %v4606 = vrot.slane %v4578, %v4605
      %v4607 = vcombine.low %v4585, %v4592
      %v4608 = vcombine.low %v4599, %v4606
      %v4610 = vunpack.c.l.s4 1966171168
      %v4611 = vunpack.c.0.s8 %v4610
      %v4612 = vlaneseq
      %v4613 = vshrl.u32 %v4612, 7
      %v4614 = vsub.s32 %v4611, %v4613
      %v4615 = vrot.slane %v4607, %v4614
      %v4617 = vunpack.c.l.s4 1966171168
      %v4618 = vunpack.c.0.s8 %v4617
      %v4619 = vlaneseq
      %v4620 = vshrl.u32 %v4619, 7
      %v4621 = vsub.s32 %v4618, %v4620
      %v4622 = vrot.slane %v4608, %v4621
      %v4623 = vcombine.low %v4615, %v4622
      %v4625 = vunpack.c.l.s4 1966171168
      %v4626 = vunpack.c.0.s8 %v4625
      %v4627 = vlaneseq
      %v4628 = vshrl.u32 %v4627, 7
      %v4629 = vsub.s32 %v4626, %v4628
      %v4630 = vrot.slane %v4467, %v4629
      %v4632 = vunpack.c.l.s4 1966171168
      %v4633 = vunpack.c.0.s8 %v4632
      %v4634 = vlaneseq
      %v4635 = vshrl.u32 %v4634, 7
      %v4636 = vsub.s32 %v4633, %v4635
      %v4637 = vrot.slane %v4630, %v4636
      %v4642 = vpack.c.bf16 %v4574, %v4525
      %v4643 = vpack.c.bf16 %v4637, %v4623
      %v4644 = vsel %vm433, %v4643, 0
      %4647 = vrot.lane.b32.xlu0 %v4642, 24
      %v4648 = vpop.permute.xlu0 %4647
      %4649 = vrot.lane.b32.xlu0 %v4644, 24
      %v4650 = vpop.permute.xlu0 %4649
      %4653 = vst.msk [vmem:[#allocation2 + $0x10] sm:$0xff] %vm1588, %v4648
      %4654 = vst.msk [vmem:[#allocation2 + $0x18] sm:$0xff] %vm1588, %v4650
      %s4655 = scalar_lea.vmem [#allocation3], 80
      %v4656 = vld [vmem:[%s4655] sm:$0x1f]
      %v4657 = vld [vmem:[%s4655 + $0x8] sm:$0x1f]
      %v4658 = vld [vmem:[%s4655 + $0x10] sm:$0x1f]
      %v4659 = vld [vmem:[%s4655 + $0x18] sm:$0x1f]
      %v4660 = vld [vmem:[%s4655 + $0x20] sm:$0x1f]
      %v4666 = vcombine.high %v4656, %v4656
      %v4668 = vunpack.c.l.s4 1966171168
      %v4669 = vunpack.c.0.s8 %v4668
      %v4670 = vlaneseq
      %v4671 = vshrl.u32 %v4670, 7
      %v4672 = vsub.s32 %v4669, %v4671
      %v4673 = vrot.slane %v4656, %v4672
      %v4675 = vunpack.c.l.s4 1966171168
      %v4676 = vunpack.c.0.s8 %v4675
      %v4677 = vlaneseq
      %v4678 = vshrl.u32 %v4677, 7
      %v4679 = vsub.s32 %v4676, %v4678
      %v4680 = vrot.slane %v4666, %v4679
      %v4681 = vcombine.high %v4673, %v4673
      %v4683 = vunpack.c.l.s4 1966171168
      %v4684 = vunpack.c.0.s8 %v4683
      %v4685 = vlaneseq
      %v4686 = vshrl.u32 %v4685, 7
      %v4687 = vsub.s32 %v4684, %v4686
      %v4688 = vrot.slane %v4673, %v4687
      %v4690 = vunpack.c.l.s4 1966171168
      %v4691 = vunpack.c.0.s8 %v4690
      %v4692 = vlaneseq
      %v4693 = vshrl.u32 %v4692, 7
      %v4694 = vsub.s32 %v4691, %v4693
      %v4695 = vrot.slane %v4680, %v4694
      %v4697 = vunpack.c.l.s4 1966171168
      %v4698 = vunpack.c.0.s8 %v4697
      %v4699 = vlaneseq
      %v4700 = vshrl.u32 %v4699, 7
      %v4701 = vsub.s32 %v4698, %v4700
      %v4702 = vrot.slane %v4681, %v4701
      %v4703 = vcombine.high %v4688, %v4688
      %v4704 = vcombine.high %v4702, %v4702
      %v4705 = vcombine.high %v4657, %v4657
      %v4707 = vunpack.c.l.s4 1966171168
      %v4708 = vunpack.c.0.s8 %v4707
      %v4709 = vlaneseq
      %v4710 = vshrl.u32 %v4709, 7
      %v4711 = vsub.s32 %v4708, %v4710
      %v4712 = vrot.slane %v4657, %v4711
      %v4714 = vunpack.c.l.s4 1966171168
      %v4715 = vunpack.c.0.s8 %v4714
      %v4716 = vlaneseq
      %v4717 = vshrl.u32 %v4716, 7
      %v4718 = vsub.s32 %v4715, %v4717
      %v4719 = vrot.slane %v4705, %v4718
      %v4720 = vcombine.high %v4712, %v4712
      %v4722 = vunpack.c.l.s4 1966171168
      %v4723 = vunpack.c.0.s8 %v4722
      %v4724 = vlaneseq
      %v4725 = vshrl.u32 %v4724, 7
      %v4726 = vsub.s32 %v4723, %v4725
      %v4727 = vrot.slane %v4712, %v4726
      %v4729 = vunpack.c.l.s4 1966171168
      %v4730 = vunpack.c.0.s8 %v4729
      %v4731 = vlaneseq
      %v4732 = vshrl.u32 %v4731, 7
      %v4733 = vsub.s32 %v4730, %v4732
      %v4734 = vrot.slane %v4719, %v4733
      %v4736 = vunpack.c.l.s4 1966171168
      %v4737 = vunpack.c.0.s8 %v4736
      %v4738 = vlaneseq
      %v4739 = vshrl.u32 %v4738, 7
      %v4740 = vsub.s32 %v4737, %v4739
      %v4741 = vrot.slane %v4720, %v4740
      %v4742 = vcombine.high %v4727, %v4727
      %v4743 = vcombine.high %v4741, %v4741
      %v4744 = vcombine.high %v4658, %v4658
      %v4746 = vunpack.c.l.s4 1966171168
      %v4747 = vunpack.c.0.s8 %v4746
      %v4748 = vlaneseq
      %v4749 = vshrl.u32 %v4748, 7
      %v4750 = vsub.s32 %v4747, %v4749
      %v4751 = vrot.slane %v4658, %v4750
      %v4753 = vunpack.c.l.s4 1966171168
      %v4754 = vunpack.c.0.s8 %v4753
      %v4755 = vlaneseq
      %v4756 = vshrl.u32 %v4755, 7
      %v4757 = vsub.s32 %v4754, %v4756
      %v4758 = vrot.slane %v4744, %v4757
      %v4759 = vcombine.high %v4751, %v4751
      %v4761 = vunpack.c.l.s4 1966171168
      %v4762 = vunpack.c.0.s8 %v4761
      %v4763 = vlaneseq
      %v4764 = vshrl.u32 %v4763, 7
      %v4765 = vsub.s32 %v4762, %v4764
      %v4766 = vrot.slane %v4751, %v4765
      %v4768 = vunpack.c.l.s4 1966171168
      %v4769 = vunpack.c.0.s8 %v4768
      %v4770 = vlaneseq
      %v4771 = vshrl.u32 %v4770, 7
      %v4772 = vsub.s32 %v4769, %v4771
      %v4773 = vrot.slane %v4758, %v4772
      %v4775 = vunpack.c.l.s4 1966171168
      %v4776 = vunpack.c.0.s8 %v4775
      %v4777 = vlaneseq
      %v4778 = vshrl.u32 %v4777, 7
      %v4779 = vsub.s32 %v4776, %v4778
      %v4780 = vrot.slane %v4759, %v4779
      %v4781 = vcombine.high %v4766, %v4766
      %v4782 = vcombine.high %v4780, %v4780
      %v4783 = vcombine.high %v4659, %v4659
      %v4785 = vunpack.c.l.s4 1966171168
      %v4786 = vunpack.c.0.s8 %v4785
      %v4787 = vlaneseq
      %v4788 = vshrl.u32 %v4787, 7
      %v4789 = vsub.s32 %v4786, %v4788
      %v4790 = vrot.slane %v4659, %v4789
      %v4792 = vunpack.c.l.s4 1966171168
      %v4793 = vunpack.c.0.s8 %v4792
      %v4794 = vlaneseq
      %v4795 = vshrl.u32 %v4794, 7
      %v4796 = vsub.s32 %v4793, %v4795
      %v4797 = vrot.slane %v4783, %v4796
      %v4798 = vcombine.high %v4790, %v4790
      %v4800 = vunpack.c.l.s4 1966171168
      %v4801 = vunpack.c.0.s8 %v4800
      %v4802 = vlaneseq
      %v4803 = vshrl.u32 %v4802, 7
      %v4804 = vsub.s32 %v4801, %v4803
      %v4805 = vrot.slane %v4790, %v4804
      %v4807 = vunpack.c.l.s4 1966171168
      %v4808 = vunpack.c.0.s8 %v4807
      %v4809 = vlaneseq
      %v4810 = vshrl.u32 %v4809, 7
      %v4811 = vsub.s32 %v4808, %v4810
      %v4812 = vrot.slane %v4797, %v4811
      %v4814 = vunpack.c.l.s4 1966171168
      %v4815 = vunpack.c.0.s8 %v4814
      %v4816 = vlaneseq
      %v4817 = vshrl.u32 %v4816, 7
      %v4818 = vsub.s32 %v4815, %v4817
      %v4819 = vrot.slane %v4798, %v4818
      %v4820 = vcombine.high %v4805, %v4805
      %v4821 = vcombine.high %v4819, %v4819
      %v4822 = vcombine.high %v4660, %v4660
      %v4824 = vunpack.c.l.s4 1966171168
      %v4825 = vunpack.c.0.s8 %v4824
      %v4826 = vlaneseq
      %v4827 = vshrl.u32 %v4826, 7
      %v4828 = vsub.s32 %v4825, %v4827
      %v4829 = vrot.slane %v4660, %v4828
      %v4831 = vunpack.c.l.s4 1966171168
      %v4832 = vunpack.c.0.s8 %v4831
      %v4833 = vlaneseq
      %v4834 = vshrl.u32 %v4833, 7
      %v4835 = vsub.s32 %v4832, %v4834
      %v4836 = vrot.slane %v4822, %v4835
      %v4837 = vcombine.high %v4829, %v4829
      %v4839 = vunpack.c.l.s4 1966171168
      %v4840 = vunpack.c.0.s8 %v4839
      %v4841 = vlaneseq
      %v4842 = vshrl.u32 %v4841, 7
      %v4843 = vsub.s32 %v4840, %v4842
      %v4844 = vrot.slane %v4829, %v4843
      %v4846 = vunpack.c.l.s4 1966171168
      %v4847 = vunpack.c.0.s8 %v4846
      %v4848 = vlaneseq
      %v4849 = vshrl.u32 %v4848, 7
      %v4850 = vsub.s32 %v4847, %v4849
      %v4851 = vrot.slane %v4836, %v4850
      %v4853 = vunpack.c.l.s4 1966171168
      %v4854 = vunpack.c.0.s8 %v4853
      %v4855 = vlaneseq
      %v4856 = vshrl.u32 %v4855, 7
      %v4857 = vsub.s32 %v4854, %v4856
      %v4858 = vrot.slane %v4837, %v4857
      %v4859 = vcombine.high %v4844, %v4844
      %v4860 = vcombine.high %v4858, %v4858
      %v4861 = vcombine.low %v4688, %v4702
      %v4862 = vcombine.low %v4703, %v4704
      %v4863 = vcombine.low %v4695, %v4727
      %v4864 = vcombine.low %v4741, %v4742
      %v4866 = vunpack.c.l.s4 1966171168
      %v4867 = vunpack.c.0.s8 %v4866
      %v4868 = vlaneseq
      %v4869 = vshrl.u32 %v4868, 7
      %v4870 = vsub.s32 %v4867, %v4869
      %v4871 = vrot.slane %v4861, %v4870
      %v4873 = vunpack.c.l.s4 1966171168
      %v4874 = vunpack.c.0.s8 %v4873
      %v4875 = vlaneseq
      %v4876 = vshrl.u32 %v4875, 7
      %v4877 = vsub.s32 %v4874, %v4876
      %v4878 = vrot.slane %v4862, %v4877
      %v4880 = vunpack.c.l.s4 1966171168
      %v4881 = vunpack.c.0.s8 %v4880
      %v4882 = vlaneseq
      %v4883 = vshrl.u32 %v4882, 7
      %v4884 = vsub.s32 %v4881, %v4883
      %v4885 = vrot.slane %v4863, %v4884
      %v4887 = vunpack.c.l.s4 1966171168
      %v4888 = vunpack.c.0.s8 %v4887
      %v4889 = vlaneseq
      %v4890 = vshrl.u32 %v4889, 7
      %v4891 = vsub.s32 %v4888, %v4890
      %v4892 = vrot.slane %v4864, %v4891
      %v4893 = vcombine.low %v4871, %v4878
      %v4894 = vcombine.low %v4885, %v4892
      %v4896 = vunpack.c.l.s4 1966171168
      %v4897 = vunpack.c.0.s8 %v4896
      %v4898 = vlaneseq
      %v4899 = vshrl.u32 %v4898, 7
      %v4900 = vsub.s32 %v4897, %v4899
      %v4901 = vrot.slane %v4893, %v4900
      %v4903 = vunpack.c.l.s4 1966171168
      %v4904 = vunpack.c.0.s8 %v4903
      %v4905 = vlaneseq
      %v4906 = vshrl.u32 %v4905, 7
      %v4907 = vsub.s32 %v4904, %v4906
      %v4908 = vrot.slane %v4894, %v4907
      %v4909 = vcombine.low %v4901, %v4908
      %v4910 = vcombine.low %v4743, %v4734
      %v4911 = vcombine.low %v4766, %v4780
      %v4912 = vcombine.low %v4781, %v4782
      %v4913 = vcombine.low %v4773, %v4805
      %v4915 = vunpack.c.l.s4 1966171168
      %v4916 = vunpack.c.0.s8 %v4915
      %v4917 = vlaneseq
      %v4918 = vshrl.u32 %v4917, 7
      %v4919 = vsub.s32 %v4916, %v4918
      %v4920 = vrot.slane %v4910, %v4919
      %v4922 = vunpack.c.l.s4 1966171168
      %v4923 = vunpack.c.0.s8 %v4922
      %v4924 = vlaneseq
      %v4925 = vshrl.u32 %v4924, 7
      %v4926 = vsub.s32 %v4923, %v4925
      %v4927 = vrot.slane %v4911, %v4926
      %v4929 = vunpack.c.l.s4 1966171168
      %v4930 = vunpack.c.0.s8 %v4929
      %v4931 = vlaneseq
      %v4932 = vshrl.u32 %v4931, 7
      %v4933 = vsub.s32 %v4930, %v4932
      %v4934 = vrot.slane %v4912, %v4933
      %v4936 = vunpack.c.l.s4 1966171168
      %v4937 = vunpack.c.0.s8 %v4936
      %v4938 = vlaneseq
      %v4939 = vshrl.u32 %v4938, 7
      %v4940 = vsub.s32 %v4937, %v4939
      %v4941 = vrot.slane %v4913, %v4940
      %v4942 = vcombine.low %v4920, %v4927
      %v4943 = vcombine.low %v4934, %v4941
      %v4945 = vunpack.c.l.s4 1966171168
      %v4946 = vunpack.c.0.s8 %v4945
      %v4947 = vlaneseq
      %v4948 = vshrl.u32 %v4947, 7
      %v4949 = vsub.s32 %v4946, %v4948
      %v4950 = vrot.slane %v4942, %v4949
      %v4952 = vunpack.c.l.s4 1966171168
      %v4953 = vunpack.c.0.s8 %v4952
      %v4954 = vlaneseq
      %v4955 = vshrl.u32 %v4954, 7
      %v4956 = vsub.s32 %v4953, %v4955
      %v4957 = vrot.slane %v4943, %v4956
      %v4958 = vcombine.low %v4950, %v4957
      %v4959 = vcombine.low %v4819, %v4820
      %v4960 = vcombine.low %v4821, %v4812
      %v4961 = vcombine.low %v4844, %v4858
      %v4962 = vcombine.low %v4859, %v4860
      %v4964 = vunpack.c.l.s4 1966171168
      %v4965 = vunpack.c.0.s8 %v4964
      %v4966 = vlaneseq
      %v4967 = vshrl.u32 %v4966, 7
      %v4968 = vsub.s32 %v4965, %v4967
      %v4969 = vrot.slane %v4959, %v4968
      %v4971 = vunpack.c.l.s4 1966171168
      %v4972 = vunpack.c.0.s8 %v4971
      %v4973 = vlaneseq
      %v4974 = vshrl.u32 %v4973, 7
      %v4975 = vsub.s32 %v4972, %v4974
      %v4976 = vrot.slane %v4960, %v4975
      %v4978 = vunpack.c.l.s4 1966171168
      %v4979 = vunpack.c.0.s8 %v4978
      %v4980 = vlaneseq
      %v4981 = vshrl.u32 %v4980, 7
      %v4982 = vsub.s32 %v4979, %v4981
      %v4983 = vrot.slane %v4961, %v4982
      %v4985 = vunpack.c.l.s4 1966171168
      %v4986 = vunpack.c.0.s8 %v4985
      %v4987 = vlaneseq
      %v4988 = vshrl.u32 %v4987, 7
      %v4989 = vsub.s32 %v4986, %v4988
      %v4990 = vrot.slane %v4962, %v4989
      %v4991 = vcombine.low %v4969, %v4976
      %v4992 = vcombine.low %v4983, %v4990
      %v4994 = vunpack.c.l.s4 1966171168
      %v4995 = vunpack.c.0.s8 %v4994
      %v4996 = vlaneseq
      %v4997 = vshrl.u32 %v4996, 7
      %v4998 = vsub.s32 %v4995, %v4997
      %v4999 = vrot.slane %v4991, %v4998
      %v5001 = vunpack.c.l.s4 1966171168
      %v5002 = vunpack.c.0.s8 %v5001
      %v5003 = vlaneseq
      %v5004 = vshrl.u32 %v5003, 7
      %v5005 = vsub.s32 %v5002, %v5004
      %v5006 = vrot.slane %v4992, %v5005
      %v5007 = vcombine.low %v4999, %v5006
      %v5009 = vunpack.c.l.s4 1966171168
      %v5010 = vunpack.c.0.s8 %v5009
      %v5011 = vlaneseq
      %v5012 = vshrl.u32 %v5011, 7
      %v5013 = vsub.s32 %v5010, %v5012
      %v5014 = vrot.slane %v4851, %v5013
      %v5016 = vunpack.c.l.s4 1966171168
      %v5017 = vunpack.c.0.s8 %v5016
      %v5018 = vlaneseq
      %v5019 = vshrl.u32 %v5018, 7
      %v5020 = vsub.s32 %v5017, %v5019
      %v5021 = vrot.slane %v5014, %v5020
      %v5026 = vpack.c.bf16 %v4958, %v4909
      %v5027 = vpack.c.bf16 %v5021, %v5007
      %v5028 = vsel %vm433, %v5027, 0
      %5031 = vrot.lane.b32.xlu0 %v5026, 32
      %v5032 = vpop.permute.xlu0 %5031
      %5033 = vrot.lane.b32.xlu0 %v5028, 32
      %v5034 = vpop.permute.xlu0 %5033
      %5037 = vst.msk [vmem:[#allocation2 + $0x10] sm:$0xff] %vm1973, %v5032
      %5038 = vst.msk [vmem:[#allocation2 + $0x18] sm:$0xff] %vm1973, %v5034
      %v5039 = vld [vmem:[%s4655 + $0x1] sm:$0x1f]
      %v5040 = vld [vmem:[%s4655 + $0x9] sm:$0x1f]
      %v5041 = vld [vmem:[%s4655 + $0x11] sm:$0x1f]
      %v5042 = vld [vmem:[%s4655 + $0x19] sm:$0x1f]
      %v5043 = vld [vmem:[%s4655 + $0x21] sm:$0x1f]
      %v5049 = vcombine.high %v5039, %v5039
      %v5051 = vunpack.c.l.s4 1966171168
      %v5052 = vunpack.c.0.s8 %v5051
      %v5053 = vlaneseq
      %v5054 = vshrl.u32 %v5053, 7
      %v5055 = vsub.s32 %v5052, %v5054
      %v5056 = vrot.slane %v5039, %v5055
      %v5058 = vunpack.c.l.s4 1966171168
      %v5059 = vunpack.c.0.s8 %v5058
      %v5060 = vlaneseq
      %v5061 = vshrl.u32 %v5060, 7
      %v5062 = vsub.s32 %v5059, %v5061
      %v5063 = vrot.slane %v5049, %v5062
      %v5064 = vcombine.high %v5056, %v5056
      %v5066 = vunpack.c.l.s4 1966171168
      %v5067 = vunpack.c.0.s8 %v5066
      %v5068 = vlaneseq
      %v5069 = vshrl.u32 %v5068, 7
      %v5070 = vsub.s32 %v5067, %v5069
      %v5071 = vrot.slane %v5056, %v5070
      %v5073 = vunpack.c.l.s4 1966171168
      %v5074 = vunpack.c.0.s8 %v5073
      %v5075 = vlaneseq
      %v5076 = vshrl.u32 %v5075, 7
      %v5077 = vsub.s32 %v5074, %v5076
      %v5078 = vrot.slane %v5063, %v5077
      %v5080 = vunpack.c.l.s4 1966171168
      %v5081 = vunpack.c.0.s8 %v5080
      %v5082 = vlaneseq
      %v5083 = vshrl.u32 %v5082, 7
      %v5084 = vsub.s32 %v5081, %v5083
      %v5085 = vrot.slane %v5064, %v5084
      %v5086 = vcombine.high %v5071, %v5071
      %v5087 = vcombine.high %v5085, %v5085
      %v5088 = vcombine.high %v5040, %v5040
      %v5090 = vunpack.c.l.s4 1966171168
      %v5091 = vunpack.c.0.s8 %v5090
      %v5092 = vlaneseq
      %v5093 = vshrl.u32 %v5092, 7
      %v5094 = vsub.s32 %v5091, %v5093
      %v5095 = vrot.slane %v5040, %v5094
      %v5097 = vunpack.c.l.s4 1966171168
      %v5098 = vunpack.c.0.s8 %v5097
      %v5099 = vlaneseq
      %v5100 = vshrl.u32 %v5099, 7
      %v5101 = vsub.s32 %v5098, %v5100
      %v5102 = vrot.slane %v5088, %v5101
      %v5103 = vcombine.high %v5095, %v5095
      %v5105 = vunpack.c.l.s4 1966171168
      %v5106 = vunpack.c.0.s8 %v5105
      %v5107 = vlaneseq
      %v5108 = vshrl.u32 %v5107, 7
      %v5109 = vsub.s32 %v5106, %v5108
      %v5110 = vrot.slane %v5095, %v5109
      %v5112 = vunpack.c.l.s4 1966171168
      %v5113 = vunpack.c.0.s8 %v5112
      %v5114 = vlaneseq
      %v5115 = vshrl.u32 %v5114, 7
      %v5116 = vsub.s32 %v5113, %v5115
      %v5117 = vrot.slane %v5102, %v5116
      %v5119 = vunpack.c.l.s4 1966171168
      %v5120 = vunpack.c.0.s8 %v5119
      %v5121 = vlaneseq
      %v5122 = vshrl.u32 %v5121, 7
      %v5123 = vsub.s32 %v5120, %v5122
      %v5124 = vrot.slane %v5103, %v5123
      %v5125 = vcombine.high %v5110, %v5110
      %v5126 = vcombine.high %v5124, %v5124
      %v5127 = vcombine.high %v5041, %v5041
      %v5129 = vunpack.c.l.s4 1966171168
      %v5130 = vunpack.c.0.s8 %v5129
      %v5131 = vlaneseq
      %v5132 = vshrl.u32 %v5131, 7
      %v5133 = vsub.s32 %v5130, %v5132
      %v5134 = vrot.slane %v5041, %v5133
      %v5136 = vunpack.c.l.s4 1966171168
      %v5137 = vunpack.c.0.s8 %v5136
      %v5138 = vlaneseq
      %v5139 = vshrl.u32 %v5138, 7
      %v5140 = vsub.s32 %v5137, %v5139
      %v5141 = vrot.slane %v5127, %v5140
      %v5142 = vcombine.high %v5134, %v5134
      %v5144 = vunpack.c.l.s4 1966171168
      %v5145 = vunpack.c.0.s8 %v5144
      %v5146 = vlaneseq
      %v5147 = vshrl.u32 %v5146, 7
      %v5148 = vsub.s32 %v5145, %v5147
      %v5149 = vrot.slane %v5134, %v5148
      %v5151 = vunpack.c.l.s4 1966171168
      %v5152 = vunpack.c.0.s8 %v5151
      %v5153 = vlaneseq
      %v5154 = vshrl.u32 %v5153, 7
      %v5155 = vsub.s32 %v5152, %v5154
      %v5156 = vrot.slane %v5141, %v5155
      %v5158 = vunpack.c.l.s4 1966171168
      %v5159 = vunpack.c.0.s8 %v5158
      %v5160 = vlaneseq
      %v5161 = vshrl.u32 %v5160, 7
      %v5162 = vsub.s32 %v5159, %v5161
      %v5163 = vrot.slane %v5142, %v5162
      %v5164 = vcombine.high %v5149, %v5149
      %v5165 = vcombine.high %v5163, %v5163
      %v5166 = vcombine.high %v5042, %v5042
      %v5168 = vunpack.c.l.s4 1966171168
      %v5169 = vunpack.c.0.s8 %v5168
      %v5170 = vlaneseq
      %v5171 = vshrl.u32 %v5170, 7
      %v5172 = vsub.s32 %v5169, %v5171
      %v5173 = vrot.slane %v5042, %v5172
      %v5175 = vunpack.c.l.s4 1966171168
      %v5176 = vunpack.c.0.s8 %v5175
      %v5177 = vlaneseq
      %v5178 = vshrl.u32 %v5177, 7
      %v5179 = vsub.s32 %v5176, %v5178
      %v5180 = vrot.slane %v5166, %v5179
      %v5181 = vcombine.high %v5173, %v5173
      %v5183 = vunpack.c.l.s4 1966171168
      %v5184 = vunpack.c.0.s8 %v5183
      %v5185 = vlaneseq
      %v5186 = vshrl.u32 %v5185, 7
      %v5187 = vsub.s32 %v5184, %v5186
      %v5188 = vrot.slane %v5173, %v5187
      %v5190 = vunpack.c.l.s4 1966171168
      %v5191 = vunpack.c.0.s8 %v5190
      %v5192 = vlaneseq
      %v5193 = vshrl.u32 %v5192, 7
      %v5194 = vsub.s32 %v5191, %v5193
      %v5195 = vrot.slane %v5180, %v5194
      %v5197 = vunpack.c.l.s4 1966171168
      %v5198 = vunpack.c.0.s8 %v5197
      %v5199 = vlaneseq
      %v5200 = vshrl.u32 %v5199, 7
      %v5201 = vsub.s32 %v5198, %v5200
      %v5202 = vrot.slane %v5181, %v5201
      %v5203 = vcombine.high %v5188, %v5188
      %v5204 = vcombine.high %v5202, %v5202
      %v5205 = vcombine.high %v5043, %v5043
      %v5207 = vunpack.c.l.s4 1966171168
      %v5208 = vunpack.c.0.s8 %v5207
      %v5209 = vlaneseq
      %v5210 = vshrl.u32 %v5209, 7
      %v5211 = vsub.s32 %v5208, %v5210
      %v5212 = vrot.slane %v5043, %v5211
      %v5214 = vunpack.c.l.s4 1966171168
      %v5215 = vunpack.c.0.s8 %v5214
      %v5216 = vlaneseq
      %v5217 = vshrl.u32 %v5216, 7
      %v5218 = vsub.s32 %v5215, %v5217
      %v5219 = vrot.slane %v5205, %v5218
      %v5220 = vcombine.high %v5212, %v5212
      %v5222 = vunpack.c.l.s4 1966171168
      %v5223 = vunpack.c.0.s8 %v5222
      %v5224 = vlaneseq
      %v5225 = vshrl.u32 %v5224, 7
      %v5226 = vsub.s32 %v5223, %v5225
      %v5227 = vrot.slane %v5212, %v5226
      %v5229 = vunpack.c.l.s4 1966171168
      %v5230 = vunpack.c.0.s8 %v5229
      %v5231 = vlaneseq
      %v5232 = vshrl.u32 %v5231, 7
      %v5233 = vsub.s32 %v5230, %v5232
      %v5234 = vrot.slane %v5219, %v5233
      %v5236 = vunpack.c.l.s4 1966171168
      %v5237 = vunpack.c.0.s8 %v5236
      %v5238 = vlaneseq
      %v5239 = vshrl.u32 %v5238, 7
      %v5240 = vsub.s32 %v5237, %v5239
      %v5241 = vrot.slane %v5220, %v5240
      %v5242 = vcombine.high %v5227, %v5227
      %v5243 = vcombine.high %v5241, %v5241
      %v5244 = vcombine.low %v5071, %v5085
      %v5245 = vcombine.low %v5086, %v5087
      %v5246 = vcombine.low %v5078, %v5110
      %v5247 = vcombine.low %v5124, %v5125
      %v5249 = vunpack.c.l.s4 1966171168
      %v5250 = vunpack.c.0.s8 %v5249
      %v5251 = vlaneseq
      %v5252 = vshrl.u32 %v5251, 7
      %v5253 = vsub.s32 %v5250, %v5252
      %v5254 = vrot.slane %v5244, %v5253
      %v5256 = vunpack.c.l.s4 1966171168
      %v5257 = vunpack.c.0.s8 %v5256
      %v5258 = vlaneseq
      %v5259 = vshrl.u32 %v5258, 7
      %v5260 = vsub.s32 %v5257, %v5259
      %v5261 = vrot.slane %v5245, %v5260
      %v5263 = vunpack.c.l.s4 1966171168
      %v5264 = vunpack.c.0.s8 %v5263
      %v5265 = vlaneseq
      %v5266 = vshrl.u32 %v5265, 7
      %v5267 = vsub.s32 %v5264, %v5266
      %v5268 = vrot.slane %v5246, %v5267
      %v5270 = vunpack.c.l.s4 1966171168
      %v5271 = vunpack.c.0.s8 %v5270
      %v5272 = vlaneseq
      %v5273 = vshrl.u32 %v5272, 7
      %v5274 = vsub.s32 %v5271, %v5273
      %v5275 = vrot.slane %v5247, %v5274
      %v5276 = vcombine.low %v5254, %v5261
      %v5277 = vcombine.low %v5268, %v5275
      %v5279 = vunpack.c.l.s4 1966171168
      %v5280 = vunpack.c.0.s8 %v5279
      %v5281 = vlaneseq
      %v5282 = vshrl.u32 %v5281, 7
      %v5283 = vsub.s32 %v5280, %v5282
      %v5284 = vrot.slane %v5276, %v5283
      %v5286 = vunpack.c.l.s4 1966171168
      %v5287 = vunpack.c.0.s8 %v5286
      %v5288 = vlaneseq
      %v5289 = vshrl.u32 %v5288, 7
      %v5290 = vsub.s32 %v5287, %v5289
      %v5291 = vrot.slane %v5277, %v5290
      %v5292 = vcombine.low %v5284, %v5291
      %v5293 = vcombine.low %v5126, %v5117
      %v5294 = vcombine.low %v5149, %v5163
      %v5295 = vcombine.low %v5164, %v5165
      %v5296 = vcombine.low %v5156, %v5188
      %v5298 = vunpack.c.l.s4 1966171168
      %v5299 = vunpack.c.0.s8 %v5298
      %v5300 = vlaneseq
      %v5301 = vshrl.u32 %v5300, 7
      %v5302 = vsub.s32 %v5299, %v5301
      %v5303 = vrot.slane %v5293, %v5302
      %v5305 = vunpack.c.l.s4 1966171168
      %v5306 = vunpack.c.0.s8 %v5305
      %v5307 = vlaneseq
      %v5308 = vshrl.u32 %v5307, 7
      %v5309 = vsub.s32 %v5306, %v5308
      %v5310 = vrot.slane %v5294, %v5309
      %v5312 = vunpack.c.l.s4 1966171168
      %v5313 = vunpack.c.0.s8 %v5312
      %v5314 = vlaneseq
      %v5315 = vshrl.u32 %v5314, 7
      %v5316 = vsub.s32 %v5313, %v5315
      %v5317 = vrot.slane %v5295, %v5316
      %v5319 = vunpack.c.l.s4 1966171168
      %v5320 = vunpack.c.0.s8 %v5319
      %v5321 = vlaneseq
      %v5322 = vshrl.u32 %v5321, 7
      %v5323 = vsub.s32 %v5320, %v5322
      %v5324 = vrot.slane %v5296, %v5323
      %v5325 = vcombine.low %v5303, %v5310
      %v5326 = vcombine.low %v5317, %v5324
      %v5328 = vunpack.c.l.s4 1966171168
      %v5329 = vunpack.c.0.s8 %v5328
      %v5330 = vlaneseq
      %v5331 = vshrl.u32 %v5330, 7
      %v5332 = vsub.s32 %v5329, %v5331
      %v5333 = vrot.slane %v5325, %v5332
      %v5335 = vunpack.c.l.s4 1966171168
      %v5336 = vunpack.c.0.s8 %v5335
      %v5337 = vlaneseq
      %v5338 = vshrl.u32 %v5337, 7
      %v5339 = vsub.s32 %v5336, %v5338
      %v5340 = vrot.slane %v5326, %v5339
      %v5341 = vcombine.low %v5333, %v5340
      %v5342 = vcombine.low %v5202, %v5203
      %v5343 = vcombine.low %v5204, %v5195
      %v5344 = vcombine.low %v5227, %v5241
      %v5345 = vcombine.low %v5242, %v5243
      %v5347 = vunpack.c.l.s4 1966171168
      %v5348 = vunpack.c.0.s8 %v5347
      %v5349 = vlaneseq
      %v5350 = vshrl.u32 %v5349, 7
      %v5351 = vsub.s32 %v5348, %v5350
      %v5352 = vrot.slane %v5342, %v5351
      %v5354 = vunpack.c.l.s4 1966171168
      %v5355 = vunpack.c.0.s8 %v5354
      %v5356 = vlaneseq
      %v5357 = vshrl.u32 %v5356, 7
      %v5358 = vsub.s32 %v5355, %v5357
      %v5359 = vrot.slane %v5343, %v5358
      %v5361 = vunpack.c.l.s4 1966171168
      %v5362 = vunpack.c.0.s8 %v5361
      %v5363 = vlaneseq
      %v5364 = vshrl.u32 %v5363, 7
      %v5365 = vsub.s32 %v5362, %v5364
      %v5366 = vrot.slane %v5344, %v5365
      %v5368 = vunpack.c.l.s4 1966171168
      %v5369 = vunpack.c.0.s8 %v5368
      %v5370 = vlaneseq
      %v5371 = vshrl.u32 %v5370, 7
      %v5372 = vsub.s32 %v5369, %v5371
      %v5373 = vrot.slane %v5345, %v5372
      %v5374 = vcombine.low %v5352, %v5359
      %v5375 = vcombine.low %v5366, %v5373
      %v5377 = vunpack.c.l.s4 1966171168
      %v5378 = vunpack.c.0.s8 %v5377
      %v5379 = vlaneseq
      %v5380 = vshrl.u32 %v5379, 7
      %v5381 = vsub.s32 %v5378, %v5380
      %v5382 = vrot.slane %v5374, %v5381
      %v5384 = vunpack.c.l.s4 1966171168
      %v5385 = vunpack.c.0.s8 %v5384
      %v5386 = vlaneseq
      %v5387 = vshrl.u32 %v5386, 7
      %v5388 = vsub.s32 %v5385, %v5387
      %v5389 = vrot.slane %v5375, %v5388
      %v5390 = vcombine.low %v5382, %v5389
      %v5392 = vunpack.c.l.s4 1966171168
      %v5393 = vunpack.c.0.s8 %v5392
      %v5394 = vlaneseq
      %v5395 = vshrl.u32 %v5394, 7
      %v5396 = vsub.s32 %v5393, %v5395
      %v5397 = vrot.slane %v5234, %v5396
      %v5399 = vunpack.c.l.s4 1966171168
      %v5400 = vunpack.c.0.s8 %v5399
      %v5401 = vlaneseq
      %v5402 = vshrl.u32 %v5401, 7
      %v5403 = vsub.s32 %v5400, %v5402
      %v5404 = vrot.slane %v5397, %v5403
      %v5409 = vpack.c.bf16 %v5341, %v5292
      %v5410 = vpack.c.bf16 %v5404, %v5390
      %v5411 = vsel %vm433, %v5410, 0
      %5414 = vrot.lane.b32.xlu0 %v5409, 40
      %v5415 = vpop.permute.xlu0 %5414
      %5416 = vrot.lane.b32.xlu0 %v5411, 40
      %v5417 = vpop.permute.xlu0 %5416
      %5420 = vst.msk [vmem:[#allocation2 + $0x10] sm:$0xff] %vm2357, %v5415
      %5421 = vst.msk [vmem:[#allocation2 + $0x18] sm:$0xff] %vm2357, %v5417
      %s5422 = scalar_lea.vmem [#allocation3], 88
      %v5423 = vld [vmem:[%s5422] sm:$0x1f]
      %v5424 = vld [vmem:[%s5422 + $0x8] sm:$0x1f]
      %v5425 = vld [vmem:[%s5422 + $0x10] sm:$0x1f]
      %v5426 = vld [vmem:[%s5422 + $0x18] sm:$0x1f]
      %v5427 = vld [vmem:[%s5422 + $0x20] sm:$0x1f]
      %v5433 = vcombine.high %v5423, %v5423
      %v5435 = vunpack.c.l.s4 1966171168
      %v5436 = vunpack.c.0.s8 %v5435
      %v5437 = vlaneseq
      %v5438 = vshrl.u32 %v5437, 7
      %v5439 = vsub.s32 %v5436, %v5438
      %v5440 = vrot.slane %v5423, %v5439
      %v5442 = vunpack.c.l.s4 1966171168
      %v5443 = vunpack.c.0.s8 %v5442
      %v5444 = vlaneseq
      %v5445 = vshrl.u32 %v5444, 7
      %v5446 = vsub.s32 %v5443, %v5445
      %v5447 = vrot.slane %v5433, %v5446
      %v5448 = vcombine.high %v5440, %v5440
      %v5450 = vunpack.c.l.s4 1966171168
      %v5451 = vunpack.c.0.s8 %v5450
      %v5452 = vlaneseq
      %v5453 = vshrl.u32 %v5452, 7
      %v5454 = vsub.s32 %v5451, %v5453
      %v5455 = vrot.slane %v5440, %v5454
      %v5457 = vunpack.c.l.s4 1966171168
      %v5458 = vunpack.c.0.s8 %v5457
      %v5459 = vlaneseq
      %v5460 = vshrl.u32 %v5459, 7
      %v5461 = vsub.s32 %v5458, %v5460
      %v5462 = vrot.slane %v5447, %v5461
      %v5464 = vunpack.c.l.s4 1966171168
      %v5465 = vunpack.c.0.s8 %v5464
      %v5466 = vlaneseq
      %v5467 = vshrl.u32 %v5466, 7
      %v5468 = vsub.s32 %v5465, %v5467
      %v5469 = vrot.slane %v5448, %v5468
      %v5470 = vcombine.high %v5455, %v5455
      %v5471 = vcombine.high %v5469, %v5469
      %v5472 = vcombine.high %v5424, %v5424
      %v5474 = vunpack.c.l.s4 1966171168
      %v5475 = vunpack.c.0.s8 %v5474
      %v5476 = vlaneseq
      %v5477 = vshrl.u32 %v5476, 7
      %v5478 = vsub.s32 %v5475, %v5477
      %v5479 = vrot.slane %v5424, %v5478
      %v5481 = vunpack.c.l.s4 1966171168
      %v5482 = vunpack.c.0.s8 %v5481
      %v5483 = vlaneseq
      %v5484 = vshrl.u32 %v5483, 7
      %v5485 = vsub.s32 %v5482, %v5484
      %v5486 = vrot.slane %v5472, %v5485
      %v5487 = vcombine.high %v5479, %v5479
      %v5489 = vunpack.c.l.s4 1966171168
      %v5490 = vunpack.c.0.s8 %v5489
      %v5491 = vlaneseq
      %v5492 = vshrl.u32 %v5491, 7
      %v5493 = vsub.s32 %v5490, %v5492
      %v5494 = vrot.slane %v5479, %v5493
      %v5496 = vunpack.c.l.s4 1966171168
      %v5497 = vunpack.c.0.s8 %v5496
      %v5498 = vlaneseq
      %v5499 = vshrl.u32 %v5498, 7
      %v5500 = vsub.s32 %v5497, %v5499
      %v5501 = vrot.slane %v5486, %v5500
      %v5503 = vunpack.c.l.s4 1966171168
      %v5504 = vunpack.c.0.s8 %v5503
      %v5505 = vlaneseq
      %v5506 = vshrl.u32 %v5505, 7
      %v5507 = vsub.s32 %v5504, %v5506
      %v5508 = vrot.slane %v5487, %v5507
      %v5509 = vcombine.high %v5494, %v5494
      %v5510 = vcombine.high %v5508, %v5508
      %v5511 = vcombine.high %v5425, %v5425
      %v5513 = vunpack.c.l.s4 1966171168
      %v5514 = vunpack.c.0.s8 %v5513
      %v5515 = vlaneseq
      %v5516 = vshrl.u32 %v5515, 7
      %v5517 = vsub.s32 %v5514, %v5516
      %v5518 = vrot.slane %v5425, %v5517
      %v5520 = vunpack.c.l.s4 1966171168
      %v5521 = vunpack.c.0.s8 %v5520
      %v5522 = vlaneseq
      %v5523 = vshrl.u32 %v5522, 7
      %v5524 = vsub.s32 %v5521, %v5523
      %v5525 = vrot.slane %v5511, %v5524
      %v5526 = vcombine.high %v5518, %v5518
      %v5528 = vunpack.c.l.s4 1966171168
      %v5529 = vunpack.c.0.s8 %v5528
      %v5530 = vlaneseq
      %v5531 = vshrl.u32 %v5530, 7
      %v5532 = vsub.s32 %v5529, %v5531
      %v5533 = vrot.slane %v5518, %v5532
      %v5535 = vunpack.c.l.s4 1966171168
      %v5536 = vunpack.c.0.s8 %v5535
      %v5537 = vlaneseq
      %v5538 = vshrl.u32 %v5537, 7
      %v5539 = vsub.s32 %v5536, %v5538
      %v5540 = vrot.slane %v5525, %v5539
      %v5542 = vunpack.c.l.s4 1966171168
      %v5543 = vunpack.c.0.s8 %v5542
      %v5544 = vlaneseq
      %v5545 = vshrl.u32 %v5544, 7
      %v5546 = vsub.s32 %v5543, %v5545
      %v5547 = vrot.slane %v5526, %v5546
      %v5548 = vcombine.high %v5533, %v5533
      %v5549 = vcombine.high %v5547, %v5547
      %v5550 = vcombine.high %v5426, %v5426
      %v5552 = vunpack.c.l.s4 1966171168
      %v5553 = vunpack.c.0.s8 %v5552
      %v5554 = vlaneseq
      %v5555 = vshrl.u32 %v5554, 7
      %v5556 = vsub.s32 %v5553, %v5555
      %v5557 = vrot.slane %v5426, %v5556
      %v5559 = vunpack.c.l.s4 1966171168
      %v5560 = vunpack.c.0.s8 %v5559
      %v5561 = vlaneseq
      %v5562 = vshrl.u32 %v5561, 7
      %v5563 = vsub.s32 %v5560, %v5562
      %v5564 = vrot.slane %v5550, %v5563
      %v5565 = vcombine.high %v5557, %v5557
      %v5567 = vunpack.c.l.s4 1966171168
      %v5568 = vunpack.c.0.s8 %v5567
      %v5569 = vlaneseq
      %v5570 = vshrl.u32 %v5569, 7
      %v5571 = vsub.s32 %v5568, %v5570
      %v5572 = vrot.slane %v5557, %v5571
      %v5574 = vunpack.c.l.s4 1966171168
      %v5575 = vunpack.c.0.s8 %v5574
      %v5576 = vlaneseq
      %v5577 = vshrl.u32 %v5576, 7
      %v5578 = vsub.s32 %v5575, %v5577
      %v5579 = vrot.slane %v5564, %v5578
      %v5581 = vunpack.c.l.s4 1966171168
      %v5582 = vunpack.c.0.s8 %v5581
      %v5583 = vlaneseq
      %v5584 = vshrl.u32 %v5583, 7
      %v5585 = vsub.s32 %v5582, %v5584
      %v5586 = vrot.slane %v5565, %v5585
      %v5587 = vcombine.high %v5572, %v5572
      %v5588 = vcombine.high %v5586, %v5586
      %v5589 = vcombine.high %v5427, %v5427
      %v5591 = vunpack.c.l.s4 1966171168
      %v5592 = vunpack.c.0.s8 %v5591
      %v5593 = vlaneseq
      %v5594 = vshrl.u32 %v5593, 7
      %v5595 = vsub.s32 %v5592, %v5594
      %v5596 = vrot.slane %v5427, %v5595
      %v5598 = vunpack.c.l.s4 1966171168
      %v5599 = vunpack.c.0.s8 %v5598
      %v5600 = vlaneseq
      %v5601 = vshrl.u32 %v5600, 7
      %v5602 = vsub.s32 %v5599, %v5601
      %v5603 = vrot.slane %v5589, %v5602
      %v5604 = vcombine.high %v5596, %v5596
      %v5606 = vunpack.c.l.s4 1966171168
      %v5607 = vunpack.c.0.s8 %v5606
      %v5608 = vlaneseq
      %v5609 = vshrl.u32 %v5608, 7
      %v5610 = vsub.s32 %v5607, %v5609
      %v5611 = vrot.slane %v5596, %v5610
      %v5613 = vunpack.c.l.s4 1966171168
      %v5614 = vunpack.c.0.s8 %v5613
      %v5615 = vlaneseq
      %v5616 = vshrl.u32 %v5615, 7
      %v5617 = vsub.s32 %v5614, %v5616
      %v5618 = vrot.slane %v5603, %v5617
      %v5620 = vunpack.c.l.s4 1966171168
      %v5621 = vunpack.c.0.s8 %v5620
      %v5622 = vlaneseq
      %v5623 = vshrl.u32 %v5622, 7
      %v5624 = vsub.s32 %v5621, %v5623
      %v5625 = vrot.slane %v5604, %v5624
      %v5626 = vcombine.high %v5611, %v5611
      %v5627 = vcombine.high %v5625, %v5625
      %v5628 = vcombine.low %v5455, %v5469
      %v5629 = vcombine.low %v5470, %v5471
      %v5630 = vcombine.low %v5462, %v5494
      %v5631 = vcombine.low %v5508, %v5509
      %v5633 = vunpack.c.l.s4 1966171168
      %v5634 = vunpack.c.0.s8 %v5633
      %v5635 = vlaneseq
      %v5636 = vshrl.u32 %v5635, 7
      %v5637 = vsub.s32 %v5634, %v5636
      %v5638 = vrot.slane %v5628, %v5637
      %v5640 = vunpack.c.l.s4 1966171168
      %v5641 = vunpack.c.0.s8 %v5640
      %v5642 = vlaneseq
      %v5643 = vshrl.u32 %v5642, 7
      %v5644 = vsub.s32 %v5641, %v5643
      %v5645 = vrot.slane %v5629, %v5644
      %v5647 = vunpack.c.l.s4 1966171168
      %v5648 = vunpack.c.0.s8 %v5647
      %v5649 = vlaneseq
      %v5650 = vshrl.u32 %v5649, 7
      %v5651 = vsub.s32 %v5648, %v5650
      %v5652 = vrot.slane %v5630, %v5651
      %v5654 = vunpack.c.l.s4 1966171168
      %v5655 = vunpack.c.0.s8 %v5654
      %v5656 = vlaneseq
      %v5657 = vshrl.u32 %v5656, 7
      %v5658 = vsub.s32 %v5655, %v5657
      %v5659 = vrot.slane %v5631, %v5658
      %v5660 = vcombine.low %v5638, %v5645
      %v5661 = vcombine.low %v5652, %v5659
      %v5663 = vunpack.c.l.s4 1966171168
      %v5664 = vunpack.c.0.s8 %v5663
      %v5665 = vlaneseq
      %v5666 = vshrl.u32 %v5665, 7
      %v5667 = vsub.s32 %v5664, %v5666
      %v5668 = vrot.slane %v5660, %v5667
      %v5670 = vunpack.c.l.s4 1966171168
      %v5671 = vunpack.c.0.s8 %v5670
      %v5672 = vlaneseq
      %v5673 = vshrl.u32 %v5672, 7
      %v5674 = vsub.s32 %v5671, %v5673
      %v5675 = vrot.slane %v5661, %v5674
      %v5676 = vcombine.low %v5668, %v5675
      %v5677 = vcombine.low %v5510, %v5501
      %v5678 = vcombine.low %v5533, %v5547
      %v5679 = vcombine.low %v5548, %v5549
      %v5680 = vcombine.low %v5540, %v5572
      %v5682 = vunpack.c.l.s4 1966171168
      %v5683 = vunpack.c.0.s8 %v5682
      %v5684 = vlaneseq
      %v5685 = vshrl.u32 %v5684, 7
      %v5686 = vsub.s32 %v5683, %v5685
      %v5687 = vrot.slane %v5677, %v5686
      %v5689 = vunpack.c.l.s4 1966171168
      %v5690 = vunpack.c.0.s8 %v5689
      %v5691 = vlaneseq
      %v5692 = vshrl.u32 %v5691, 7
      %v5693 = vsub.s32 %v5690, %v5692
      %v5694 = vrot.slane %v5678, %v5693
      %v5696 = vunpack.c.l.s4 1966171168
      %v5697 = vunpack.c.0.s8 %v5696
      %v5698 = vlaneseq
      %v5699 = vshrl.u32 %v5698, 7
      %v5700 = vsub.s32 %v5697, %v5699
      %v5701 = vrot.slane %v5679, %v5700
      %v5703 = vunpack.c.l.s4 1966171168
      %v5704 = vunpack.c.0.s8 %v5703
      %v5705 = vlaneseq
      %v5706 = vshrl.u32 %v5705, 7
      %v5707 = vsub.s32 %v5704, %v5706
      %v5708 = vrot.slane %v5680, %v5707
      %v5709 = vcombine.low %v5687, %v5694
      %v5710 = vcombine.low %v5701, %v5708
      %v5712 = vunpack.c.l.s4 1966171168
      %v5713 = vunpack.c.0.s8 %v5712
      %v5714 = vlaneseq
      %v5715 = vshrl.u32 %v5714, 7
      %v5716 = vsub.s32 %v5713, %v5715
      %v5717 = vrot.slane %v5709, %v5716
      %v5719 = vunpack.c.l.s4 1966171168
      %v5720 = vunpack.c.0.s8 %v5719
      %v5721 = vlaneseq
      %v5722 = vshrl.u32 %v5721, 7
      %v5723 = vsub.s32 %v5720, %v5722
      %v5724 = vrot.slane %v5710, %v5723
      %v5725 = vcombine.low %v5717, %v5724
      %v5726 = vcombine.low %v5586, %v5587
      %v5727 = vcombine.low %v5588, %v5579
      %v5728 = vcombine.low %v5611, %v5625
      %v5729 = vcombine.low %v5626, %v5627
      %v5731 = vunpack.c.l.s4 1966171168
      %v5732 = vunpack.c.0.s8 %v5731
      %v5733 = vlaneseq
      %v5734 = vshrl.u32 %v5733, 7
      %v5735 = vsub.s32 %v5732, %v5734
      %v5736 = vrot.slane %v5726, %v5735
      %v5738 = vunpack.c.l.s4 1966171168
      %v5739 = vunpack.c.0.s8 %v5738
      %v5740 = vlaneseq
      %v5741 = vshrl.u32 %v5740, 7
      %v5742 = vsub.s32 %v5739, %v5741
      %v5743 = vrot.slane %v5727, %v5742
      %v5745 = vunpack.c.l.s4 1966171168
      %v5746 = vunpack.c.0.s8 %v5745
      %v5747 = vlaneseq
      %v5748 = vshrl.u32 %v5747, 7
      %v5749 = vsub.s32 %v5746, %v5748
      %v5750 = vrot.slane %v5728, %v5749
      %v5752 = vunpack.c.l.s4 1966171168
      %v5753 = vunpack.c.0.s8 %v5752
      %v5754 = vlaneseq
      %v5755 = vshrl.u32 %v5754, 7
      %v5756 = vsub.s32 %v5753, %v5755
      %v5757 = vrot.slane %v5729, %v5756
      %v5758 = vcombine.low %v5736, %v5743
      %v5759 = vcombine.low %v5750, %v5757
      %v5761 = vunpack.c.l.s4 1966171168
      %v5762 = vunpack.c.0.s8 %v5761
      %v5763 = vlaneseq
      %v5764 = vshrl.u32 %v5763, 7
      %v5765 = vsub.s32 %v5762, %v5764
      %v5766 = vrot.slane %v5758, %v5765
      %v5768 = vunpack.c.l.s4 1966171168
      %v5769 = vunpack.c.0.s8 %v5768
      %v5770 = vlaneseq
      %v5771 = vshrl.u32 %v5770, 7
      %v5772 = vsub.s32 %v5769, %v5771
      %v5773 = vrot.slane %v5759, %v5772
      %v5774 = vcombine.low %v5766, %v5773
      %v5776 = vunpack.c.l.s4 1966171168
      %v5777 = vunpack.c.0.s8 %v5776
      %v5778 = vlaneseq
      %v5779 = vshrl.u32 %v5778, 7
      %v5780 = vsub.s32 %v5777, %v5779
      %v5781 = vrot.slane %v5618, %v5780
      %v5783 = vunpack.c.l.s4 1966171168
      %v5784 = vunpack.c.0.s8 %v5783
      %v5785 = vlaneseq
      %v5786 = vshrl.u32 %v5785, 7
      %v5787 = vsub.s32 %v5784, %v5786
      %v5788 = vrot.slane %v5781, %v5787
      %v5793 = vpack.c.bf16 %v5725, %v5676
      %v5794 = vpack.c.bf16 %v5788, %v5774
      %v5795 = vsel %vm433, %v5794, 0
      %5798 = vrot.lane.b32.xlu0 %v5793, 48
      %v5799 = vpop.permute.xlu0 %5798
      %5800 = vrot.lane.b32.xlu0 %v5795, 48
      %v5801 = vpop.permute.xlu0 %5800
      %5804 = vst.msk [vmem:[#allocation2 + $0x10] sm:$0xff] %vm2742, %v5799
      %5805 = vst.msk [vmem:[#allocation2 + $0x18] sm:$0xff] %vm2742, %v5801
      %v5806 = vld [vmem:[%s5422 + $0x1] sm:$0x1f]
      %v5807 = vld [vmem:[%s5422 + $0x9] sm:$0x1f]
      %v5808 = vld [vmem:[%s5422 + $0x11] sm:$0x1f]
      %v5809 = vld [vmem:[%s5422 + $0x19] sm:$0x1f]
      %v5810 = vld [vmem:[%s5422 + $0x21] sm:$0x1f]
      %v5816 = vcombine.high %v5806, %v5806
      %v5818 = vunpack.c.l.s4 1966171168
      %v5819 = vunpack.c.0.s8 %v5818
      %v5820 = vlaneseq
      %v5821 = vshrl.u32 %v5820, 7
      %v5822 = vsub.s32 %v5819, %v5821
      %v5823 = vrot.slane %v5806, %v5822
      %v5825 = vunpack.c.l.s4 1966171168
      %v5826 = vunpack.c.0.s8 %v5825
      %v5827 = vlaneseq
      %v5828 = vshrl.u32 %v5827, 7
      %v5829 = vsub.s32 %v5826, %v5828
      %v5830 = vrot.slane %v5816, %v5829
      %v5831 = vcombine.high %v5823, %v5823
      %v5833 = vunpack.c.l.s4 1966171168
      %v5834 = vunpack.c.0.s8 %v5833
      %v5835 = vlaneseq
      %v5836 = vshrl.u32 %v5835, 7
      %v5837 = vsub.s32 %v5834, %v5836
      %v5838 = vrot.slane %v5823, %v5837
      %v5840 = vunpack.c.l.s4 1966171168
      %v5841 = vunpack.c.0.s8 %v5840
      %v5842 = vlaneseq
      %v5843 = vshrl.u32 %v5842, 7
      %v5844 = vsub.s32 %v5841, %v5843
      %v5845 = vrot.slane %v5830, %v5844
      %v5847 = vunpack.c.l.s4 1966171168
      %v5848 = vunpack.c.0.s8 %v5847
      %v5849 = vlaneseq
      %v5850 = vshrl.u32 %v5849, 7
      %v5851 = vsub.s32 %v5848, %v5850
      %v5852 = vrot.slane %v5831, %v5851
      %v5853 = vcombine.high %v5838, %v5838
      %v5854 = vcombine.high %v5852, %v5852
      %v5855 = vcombine.high %v5807, %v5807
      %v5857 = vunpack.c.l.s4 1966171168
      %v5858 = vunpack.c.0.s8 %v5857
      %v5859 = vlaneseq
      %v5860 = vshrl.u32 %v5859, 7
      %v5861 = vsub.s32 %v5858, %v5860
      %v5862 = vrot.slane %v5807, %v5861
      %v5864 = vunpack.c.l.s4 1966171168
      %v5865 = vunpack.c.0.s8 %v5864
      %v5866 = vlaneseq
      %v5867 = vshrl.u32 %v5866, 7
      %v5868 = vsub.s32 %v5865, %v5867
      %v5869 = vrot.slane %v5855, %v5868
      %v5870 = vcombine.high %v5862, %v5862
      %v5872 = vunpack.c.l.s4 1966171168
      %v5873 = vunpack.c.0.s8 %v5872
      %v5874 = vlaneseq
      %v5875 = vshrl.u32 %v5874, 7
      %v5876 = vsub.s32 %v5873, %v5875
      %v5877 = vrot.slane %v5862, %v5876
      %v5879 = vunpack.c.l.s4 1966171168
      %v5880 = vunpack.c.0.s8 %v5879
      %v5881 = vlaneseq
      %v5882 = vshrl.u32 %v5881, 7
      %v5883 = vsub.s32 %v5880, %v5882
      %v5884 = vrot.slane %v5869, %v5883
      %v5886 = vunpack.c.l.s4 1966171168
      %v5887 = vunpack.c.0.s8 %v5886
      %v5888 = vlaneseq
      %v5889 = vshrl.u32 %v5888, 7
      %v5890 = vsub.s32 %v5887, %v5889
      %v5891 = vrot.slane %v5870, %v5890
      %v5892 = vcombine.high %v5877, %v5877
      %v5893 = vcombine.high %v5891, %v5891
      %v5894 = vcombine.high %v5808, %v5808
      %v5896 = vunpack.c.l.s4 1966171168
      %v5897 = vunpack.c.0.s8 %v5896
      %v5898 = vlaneseq
      %v5899 = vshrl.u32 %v5898, 7
      %v5900 = vsub.s32 %v5897, %v5899
      %v5901 = vrot.slane %v5808, %v5900
      %v5903 = vunpack.c.l.s4 1966171168
      %v5904 = vunpack.c.0.s8 %v5903
      %v5905 = vlaneseq
      %v5906 = vshrl.u32 %v5905, 7
      %v5907 = vsub.s32 %v5904, %v5906
      %v5908 = vrot.slane %v5894, %v5907
      %v5909 = vcombine.high %v5901, %v5901
      %v5911 = vunpack.c.l.s4 1966171168
      %v5912 = vunpack.c.0.s8 %v5911
      %v5913 = vlaneseq
      %v5914 = vshrl.u32 %v5913, 7
      %v5915 = vsub.s32 %v5912, %v5914
      %v5916 = vrot.slane %v5901, %v5915
      %v5918 = vunpack.c.l.s4 1966171168
      %v5919 = vunpack.c.0.s8 %v5918
      %v5920 = vlaneseq
      %v5921 = vshrl.u32 %v5920, 7
      %v5922 = vsub.s32 %v5919, %v5921
      %v5923 = vrot.slane %v5908, %v5922
      %v5925 = vunpack.c.l.s4 1966171168
      %v5926 = vunpack.c.0.s8 %v5925
      %v5927 = vlaneseq
      %v5928 = vshrl.u32 %v5927, 7
      %v5929 = vsub.s32 %v5926, %v5928
      %v5930 = vrot.slane %v5909, %v5929
      %v5931 = vcombine.high %v5916, %v5916
      %v5932 = vcombine.high %v5930, %v5930
      %v5933 = vcombine.high %v5809, %v5809
      %v5935 = vunpack.c.l.s4 1966171168
      %v5936 = vunpack.c.0.s8 %v5935
      %v5937 = vlaneseq
      %v5938 = vshrl.u32 %v5937, 7
      %v5939 = vsub.s32 %v5936, %v5938
      %v5940 = vrot.slane %v5809, %v5939
      %v5942 = vunpack.c.l.s4 1966171168
      %v5943 = vunpack.c.0.s8 %v5942
      %v5944 = vlaneseq
      %v5945 = vshrl.u32 %v5944, 7
      %v5946 = vsub.s32 %v5943, %v5945
      %v5947 = vrot.slane %v5933, %v5946
      %v5948 = vcombine.high %v5940, %v5940
      %v5950 = vunpack.c.l.s4 1966171168
      %v5951 = vunpack.c.0.s8 %v5950
      %v5952 = vlaneseq
      %v5953 = vshrl.u32 %v5952, 7
      %v5954 = vsub.s32 %v5951, %v5953
      %v5955 = vrot.slane %v5940, %v5954
      %v5957 = vunpack.c.l.s4 1966171168
      %v5958 = vunpack.c.0.s8 %v5957
      %v5959 = vlaneseq
      %v5960 = vshrl.u32 %v5959, 7
      %v5961 = vsub.s32 %v5958, %v5960
      %v5962 = vrot.slane %v5947, %v5961
      %v5964 = vunpack.c.l.s4 1966171168
      %v5965 = vunpack.c.0.s8 %v5964
      %v5966 = vlaneseq
      %v5967 = vshrl.u32 %v5966, 7
      %v5968 = vsub.s32 %v5965, %v5967
      %v5969 = vrot.slane %v5948, %v5968
      %v5970 = vcombine.high %v5955, %v5955
      %v5971 = vcombine.high %v5969, %v5969
      %v5972 = vcombine.high %v5810, %v5810
      %v5974 = vunpack.c.l.s4 1966171168
      %v5975 = vunpack.c.0.s8 %v5974
      %v5976 = vlaneseq
      %v5977 = vshrl.u32 %v5976, 7
      %v5978 = vsub.s32 %v5975, %v5977
      %v5979 = vrot.slane %v5810, %v5978
      %v5981 = vunpack.c.l.s4 1966171168
      %v5982 = vunpack.c.0.s8 %v5981
      %v5983 = vlaneseq
      %v5984 = vshrl.u32 %v5983, 7
      %v5985 = vsub.s32 %v5982, %v5984
      %v5986 = vrot.slane %v5972, %v5985
      %v5987 = vcombine.high %v5979, %v5979
      %v5989 = vunpack.c.l.s4 1966171168
      %v5990 = vunpack.c.0.s8 %v5989
      %v5991 = vlaneseq
      %v5992 = vshrl.u32 %v5991, 7
      %v5993 = vsub.s32 %v5990, %v5992
      %v5994 = vrot.slane %v5979, %v5993
      %v5996 = vunpack.c.l.s4 1966171168
      %v5997 = vunpack.c.0.s8 %v5996
      %v5998 = vlaneseq
      %v5999 = vshrl.u32 %v5998, 7
      %v6000 = vsub.s32 %v5997, %v5999
      %v6001 = vrot.slane %v5986, %v6000
      %v6003 = vunpack.c.l.s4 1966171168
      %v6004 = vunpack.c.0.s8 %v6003
      %v6005 = vlaneseq
      %v6006 = vshrl.u32 %v6005, 7
      %v6007 = vsub.s32 %v6004, %v6006
      %v6008 = vrot.slane %v5987, %v6007
      %v6009 = vcombine.high %v5994, %v5994
      %v6010 = vcombine.high %v6008, %v6008
      %v6011 = vcombine.low %v5838, %v5852
      %v6012 = vcombine.low %v5853, %v5854
      %v6013 = vcombine.low %v5845, %v5877
      %v6014 = vcombine.low %v5891, %v5892
      %v6016 = vunpack.c.l.s4 1966171168
      %v6017 = vunpack.c.0.s8 %v6016
      %v6018 = vlaneseq
      %v6019 = vshrl.u32 %v6018, 7
      %v6020 = vsub.s32 %v6017, %v6019
      %v6021 = vrot.slane %v6011, %v6020
      %v6023 = vunpack.c.l.s4 1966171168
      %v6024 = vunpack.c.0.s8 %v6023
      %v6025 = vlaneseq
      %v6026 = vshrl.u32 %v6025, 7
      %v6027 = vsub.s32 %v6024, %v6026
      %v6028 = vrot.slane %v6012, %v6027
      %v6030 = vunpack.c.l.s4 1966171168
      %v6031 = vunpack.c.0.s8 %v6030
      %v6032 = vlaneseq
      %v6033 = vshrl.u32 %v6032, 7
      %v6034 = vsub.s32 %v6031, %v6033
      %v6035 = vrot.slane %v6013, %v6034
      %v6037 = vunpack.c.l.s4 1966171168
      %v6038 = vunpack.c.0.s8 %v6037
      %v6039 = vlaneseq
      %v6040 = vshrl.u32 %v6039, 7
      %v6041 = vsub.s32 %v6038, %v6040
      %v6042 = vrot.slane %v6014, %v6041
      %v6043 = vcombine.low %v6021, %v6028
      %v6044 = vcombine.low %v6035, %v6042
      %v6046 = vunpack.c.l.s4 1966171168
      %v6047 = vunpack.c.0.s8 %v6046
      %v6048 = vlaneseq
      %v6049 = vshrl.u32 %v6048, 7
      %v6050 = vsub.s32 %v6047, %v6049
      %v6051 = vrot.slane %v6043, %v6050
      %v6053 = vunpack.c.l.s4 1966171168
      %v6054 = vunpack.c.0.s8 %v6053
      %v6055 = vlaneseq
      %v6056 = vshrl.u32 %v6055, 7
      %v6057 = vsub.s32 %v6054, %v6056
      %v6058 = vrot.slane %v6044, %v6057
      %v6059 = vcombine.low %v6051, %v6058
      %v6060 = vcombine.low %v5893, %v5884
      %v6061 = vcombine.low %v5916, %v5930
      %v6062 = vcombine.low %v5931, %v5932
      %v6063 = vcombine.low %v5923, %v5955
      %v6065 = vunpack.c.l.s4 1966171168
      %v6066 = vunpack.c.0.s8 %v6065
      %v6067 = vlaneseq
      %v6068 = vshrl.u32 %v6067, 7
      %v6069 = vsub.s32 %v6066, %v6068
      %v6070 = vrot.slane %v6060, %v6069
      %v6072 = vunpack.c.l.s4 1966171168
      %v6073 = vunpack.c.0.s8 %v6072
      %v6074 = vlaneseq
      %v6075 = vshrl.u32 %v6074, 7
      %v6076 = vsub.s32 %v6073, %v6075
      %v6077 = vrot.slane %v6061, %v6076
      %v6079 = vunpack.c.l.s4 1966171168
      %v6080 = vunpack.c.0.s8 %v6079
      %v6081 = vlaneseq
      %v6082 = vshrl.u32 %v6081, 7
      %v6083 = vsub.s32 %v6080, %v6082
      %v6084 = vrot.slane %v6062, %v6083
      %v6086 = vunpack.c.l.s4 1966171168
      %v6087 = vunpack.c.0.s8 %v6086
      %v6088 = vlaneseq
      %v6089 = vshrl.u32 %v6088, 7
      %v6090 = vsub.s32 %v6087, %v6089
      %v6091 = vrot.slane %v6063, %v6090
      %v6092 = vcombine.low %v6070, %v6077
      %v6093 = vcombine.low %v6084, %v6091
      %v6095 = vunpack.c.l.s4 1966171168
      %v6096 = vunpack.c.0.s8 %v6095
      %v6097 = vlaneseq
      %v6098 = vshrl.u32 %v6097, 7
      %v6099 = vsub.s32 %v6096, %v6098
      %v6100 = vrot.slane %v6092, %v6099
      %v6102 = vunpack.c.l.s4 1966171168
      %v6103 = vunpack.c.0.s8 %v6102
      %v6104 = vlaneseq
      %v6105 = vshrl.u32 %v6104, 7
      %v6106 = vsub.s32 %v6103, %v6105
      %v6107 = vrot.slane %v6093, %v6106
      %v6108 = vcombine.low %v6100, %v6107
      %v6109 = vcombine.low %v5969, %v5970
      %v6110 = vcombine.low %v5971, %v5962
      %v6111 = vcombine.low %v5994, %v6008
      %v6112 = vcombine.low %v6009, %v6010
      %v6114 = vunpack.c.l.s4 1966171168
      %v6115 = vunpack.c.0.s8 %v6114
      %v6116 = vlaneseq
      %v6117 = vshrl.u32 %v6116, 7
      %v6118 = vsub.s32 %v6115, %v6117
      %v6119 = vrot.slane %v6109, %v6118
      %v6121 = vunpack.c.l.s4 1966171168
      %v6122 = vunpack.c.0.s8 %v6121
      %v6123 = vlaneseq
      %v6124 = vshrl.u32 %v6123, 7
      %v6125 = vsub.s32 %v6122, %v6124
      %v6126 = vrot.slane %v6110, %v6125
      %v6128 = vunpack.c.l.s4 1966171168
      %v6129 = vunpack.c.0.s8 %v6128
      %v6130 = vlaneseq
      %v6131 = vshrl.u32 %v6130, 7
      %v6132 = vsub.s32 %v6129, %v6131
      %v6133 = vrot.slane %v6111, %v6132
      %v6135 = vunpack.c.l.s4 1966171168
      %v6136 = vunpack.c.0.s8 %v6135
      %v6137 = vlaneseq
      %v6138 = vshrl.u32 %v6137, 7
      %v6139 = vsub.s32 %v6136, %v6138
      %v6140 = vrot.slane %v6112, %v6139
      %v6141 = vcombine.low %v6119, %v6126
      %v6142 = vcombine.low %v6133, %v6140
      %v6144 = vunpack.c.l.s4 1966171168
      %v6145 = vunpack.c.0.s8 %v6144
      %v6146 = vlaneseq
      %v6147 = vshrl.u32 %v6146, 7
      %v6148 = vsub.s32 %v6145, %v6147
      %v6149 = vrot.slane %v6141, %v6148
      %v6151 = vunpack.c.l.s4 1966171168
      %v6152 = vunpack.c.0.s8 %v6151
      %v6153 = vlaneseq
      %v6154 = vshrl.u32 %v6153, 7
      %v6155 = vsub.s32 %v6152, %v6154
      %v6156 = vrot.slane %v6142, %v6155
      %v6157 = vcombine.low %v6149, %v6156
      %v6159 = vunpack.c.l.s4 1966171168
      %v6160 = vunpack.c.0.s8 %v6159
      %v6161 = vlaneseq
      %v6162 = vshrl.u32 %v6161, 7
      %v6163 = vsub.s32 %v6160, %v6162
      %v6164 = vrot.slane %v6001, %v6163
      %v6166 = vunpack.c.l.s4 1966171168
      %v6167 = vunpack.c.0.s8 %v6166
      %v6168 = vlaneseq
      %v6169 = vshrl.u32 %v6168, 7
      %v6170 = vsub.s32 %v6167, %v6169
      %v6171 = vrot.slane %v6164, %v6170
      %v6176 = vpack.c.bf16 %v6108, %v6059
      %v6177 = vpack.c.bf16 %v6171, %v6157
      %v6178 = vsel %vm433, %v6177, 0
      %6181 = vrot.lane.b32.xlu0 %v6176, 56
      %v6182 = vpop.permute.xlu0 %6181
      %6183 = vrot.lane.b32.xlu0 %v6178, 56
      %v6184 = vpop.permute.xlu0 %6183
      %6187 = vst.msk [vmem:[#allocation2 + $0x10] sm:$0xff] %vm3126, %v6182
      %6188 = vst.msk [vmem:[#allocation2 + $0x18] sm:$0xff] %vm3126, %v6184
    $region29: #{tpu_custom_call.1} parent=1 // pred_fallthru
      _
    %v6189 = vld [vmem:[#allocation2] sm:$0xff]
    %v6190 = vld [vmem:[#allocation2 + $0x8] sm:$0xff]
    %v6191 = vld [vmem:[#allocation2 + $0x10] sm:$0xff]
    %v6192 = vld [vmem:[#allocation2 + $0x18] sm:$0xff]
    %v6193 = vld [vmem:[#allocation6] sm:$0xf]
    %v6194 = vld [vmem:[#allocation6 + $0x4] sm:$0xf]
    %v6195 = vld [vmem:[#allocation6 + $0x8] sm:$0xf]
    %v6196 = vld [vmem:[#allocation6 + $0xc] sm:$0xf]
    %v6197 = vld [vmem:[#allocation6 + $0x10] sm:$0xf]
    %v6198 = vld [vmem:[#allocation6 + $0x14] sm:$0xf]
    %v6199 = vld [vmem:[#allocation6 + $0x18] sm:$0xf]
    %v6200 = vld [vmem:[#allocation6 + $0x1c] sm:$0xf]
    %v6209 = vunpack.c.l.b16 %v6193
    %v6210 = vunpack.c.l.b16 %v6194
    %v6211 = vunpack.c.l.b16 %v6195
    %v6212 = vunpack.c.l.b16 %v6196
    %v6213 = vunpack.c.l.b16 %v6197
    %v6214 = vunpack.c.l.b16 %v6198
    %v6215 = vunpack.c.l.b16 %v6199
    %v6216 = vunpack.c.l.b16 %v6200
    %v6217 = vpack.c.b16 %v6210, %v6209
    %v6218 = vpack.c.b16 %v6212, %v6211
    %v6219 = vpack.c.b16 %v6214, %v6213
    %v6220 = vpack.c.b16 %v6216, %v6215
    %vm6225 = vcmask 523264
    %v6227 = vsel %vm6225, %v6189, 0
    %v6230 = vsel %vm6225, %v6190, 0
    %v6233 = vsel %vm6225, %v6191, 0
    %v6236 = vsel %vm6225, %v6192, 0
    %6238 = vmatprep.subr.bf16.mxu0 0
    %6239 = vmatpush1.bf16.msra.mxu0 %v6217
    %6240 = vmatprep.subr.bf16.mxu0 0
    %6241 = vmatpush1.bf16.msra.mxu0 %v6218
    %6242 = vmatprep.subr.bf16.mxu0 0
    %6243 = vmatpush1.bf16.msra.mxu0 %v6219
    %6244 = vmatprep.subr.bf16.mxu0 0
    %6245 = vmatpush1.bf16.msra.mxu0 %v6220
    %6246 = vmatprep.subr.bf16.mxu0 0
    %6247 = vmatpush1.bf16.msra.mxu0 0
    %6248 = vmatprep.subr.bf16.mxu0 0
    %6249 = vmatpush1.bf16.msra.mxu0 0
    %6250 = vmatprep.subr.bf16.mxu0 0
    %6251 = vmatpush1.bf16.msra.mxu0 0
    %6252 = vmatprep.subr.bf16.mxu0 0
    %6253 = vmatpush1.bf16.msra.mxu0 0
    %6254 = vmatprep.subr.bf16.mxu0 0
    %6255 = vmatpush1.bf16.msra.mxu0 0
    %6256 = vmatprep.subr.bf16.mxu0 0
    %6257 = vmatpush1.bf16.msra.mxu0 0
    %6258 = vmatprep.subr.bf16.mxu0 0
    %6259 = vmatpush1.bf16.msra.mxu0 0
    %6260 = vmatprep.subr.bf16.mxu0 0
    %6261 = vmatpush1.bf16.msra.mxu0 0
    %6262 = vmatprep.subr.bf16.mxu0 0
    %6263 = vmatpush1.bf16.msra.mxu0 0
    %6264 = vmatprep.subr.bf16.mxu0 0
    %6265 = vmatpush1.bf16.msra.mxu0 0
    %6266 = vmatprep.subr.bf16.mxu0 0
    %6267 = vmatpush1.bf16.msra.mxu0 0
    %6268 = vmatprep.subr.bf16.mxu0 0
    %6269 = vmatpush1.bf16.msra.mxu0 0
    %6270 = vmatprep.mubr.bf16.mxu0 0
    %6271 = vmatmul.mubr.bf16.gmra.mrb[0].mxu0 %v6227
    %v6272 = vpop.f32.mrb[0].mxu0
    %v6273 = vadd.f32 0.0, %v6272
    %v6274 = vpop.f32.mrb[0].mxu0
    %v6275 = vpop.f32.mrb[0].mxu0
    %v6276 = vadd.f32 0.0, %v6275
    %v6277 = vpop.f32.mrb[0].mxu0
    %6278 = vmatprep.mubr.bf16.mxu0 0
    %6279 = vmatmul.mubr.bf16.gmra.mrb[0].mxu0 %v6230
    %v6280 = vpop.f32.mrb[0].mxu0
    %v6281 = vadd.f32 0.0, %v6280
    %v6282 = vpop.f32.mrb[0].mxu0
    %v6283 = vpop.f32.mrb[0].mxu0
    %v6284 = vadd.f32 0.0, %v6283
    %v6285 = vpop.f32.mrb[0].mxu0
    %6286 = vmatprep.mubr.bf16.mxu0 0
    %6287 = vmatmul.mubr.bf16.gmra.mrb[0].mxu0 %v6233
    %v6288 = vpop.f32.mrb[0].mxu0
    %v6289 = vadd.f32 0.0, %v6288
    %v6290 = vpop.f32.mrb[0].mxu0
    %v6291 = vpop.f32.mrb[0].mxu0
    %v6292 = vadd.f32 0.0, %v6291
    %v6293 = vpop.f32.mrb[0].mxu0
    %6294 = vmatprep.mubr.bf16.mxu0 0
    %6295 = vmatmul.mubr.bf16.gmra.mrb[0].mxu0 %v6236
    %v6296 = vpop.f32.mrb[0].mxu0
    %v6297 = vadd.f32 0.0, %v6296
    %v6298 = vpop.f32.mrb[0].mxu0
    %v6299 = vpop.f32.mrb[0].mxu0
    %v6300 = vadd.f32 0.0, %v6299
    %v6301 = vpop.f32.mrb[0].mxu0
    %6302 = vdwg.mxu0
    %v6303 = vld [vmem:[#allocation8] sm:$0x1]
    %v6304 = vlaneseq
    %v6305 = vshrl.u32 %v6304, 7
    %v6306 = vsub.s32 0, %v6305
    %v6307 = vrot.slane %v6303, %v6306
    %v6308 = vmul.f32 %v6273, %v6307
    %v6309 = vmul.f32 %v6276, %v6307
    %v6310 = vmul.f32 %v6281, %v6307
    %v6311 = vmul.f32 %v6284, %v6307
    %v6312 = vmul.f32 %v6289, %v6307
    %v6313 = vmul.f32 %v6292, %v6307
    %v6314 = vmul.f32 %v6297, %v6307
    %v6315 = vmul.f32 %v6300, %v6307
    %v6316 = vld [vmem:[#allocation8 + $0x1] sm:$0x1]
    %v6317 = vlaneseq
    %v6318 = vshrl.u32 %v6317, 7
    %v6319 = vsub.s32 0, %v6318
    %v6320 = vrot.slane %v6316, %v6319
    %v6321 = vadd.f32 %v6308, %v6320
    %v6322 = vadd.f32 %v6309, %v6320
    %v6323 = vadd.f32 %v6310, %v6320
    %v6324 = vadd.f32 %v6311, %v6320
    %v6325 = vadd.f32 %v6312, %v6320
    %v6326 = vadd.f32 %v6313, %v6320
    %v6327 = vadd.f32 %v6314, %v6320
    %v6328 = vadd.f32 %v6315, %v6320
    %v6329 = vpack.c.bf16 %v6322, %v6321
    %v6330 = vpack.c.bf16 %v6324, %v6323
    %v6333 = vunpack.c.l.b16 %v6329
    %v6334 = vunpack.c.h.b16 %v6329
    %v6335 = vunpack.c.l.b16 %v6330
    %v6336 = vunpack.c.h.b16 %v6330
    %v6337 = vpack.c.b16 %v6333, %v6333
    %v6338 = vpack.c.b16 %v6334, %v6334
    %v6339 = vpack.c.b16 %v6335, %v6335
    %v6340 = vpack.c.b16 %v6336, %v6336
    %vm6345 = vcmask 125952
    %6346 = vst.msk [vmem:[#allocation9] sm:$0xf] %vm6345, %v6337
    %6347 = vst.msk [vmem:[#allocation9 + $0x4] sm:$0xf] %vm6345, %v6338
    %6348 = vst.msk [vmem:[#allocation9 + $0x8] sm:$0xf] %vm6345, %v6339
    %vm6349 = vcmask 122880
    %vm6350 = vsmask.f32 256
    %vm6351 = vmand %vm6349, %vm6350
    %v6352 = vld [vmem:[#allocation9 + $0xc] sm:$0x1]
    %v6353 = vsel %vm6351, %v6340, %v6352
    %6354 = vst [vmem:[#allocation9 + $0xc] sm:$0x1] %v6353
    %v6355 = vpack.c.bf16 %v6326, %v6325
    %v6356 = vpack.c.bf16 %v6328, %v6327
    %v6359 = vunpack.c.l.b16 %v6355
    %v6360 = vunpack.c.h.b16 %v6355
    %v6361 = vunpack.c.l.b16 %v6356
    %v6362 = vunpack.c.h.b16 %v6356
    %v6363 = vpack.c.b16 %v6359, %v6359
    %v6364 = vpack.c.b16 %v6360, %v6360
    %v6365 = vpack.c.b16 %v6361, %v6361
    %v6366 = vpack.c.b16 %v6362, %v6362
    %s6371 = scalar_lea.vmem [#allocation9], 16
    %6372 = vst.msk [vmem:[%s6371] sm:$0xf] %vm6345, %v6363
    %6373 = vst.msk [vmem:[%s6371 + $0x4] sm:$0xf] %vm6345, %v6364
    %6374 = vst.msk [vmem:[%s6371 + $0x8] sm:$0xf] %vm6345, %v6365
    %v6375 = vld [vmem:[%s6371 + $0xc] sm:$0x1]
    %v6376 = vsel %vm6351, %v6366, %v6375
    %6377 = vst [vmem:[%s6371 + $0xc] sm:$0x1] %v6376
    // Predicated region
    $region30: #{tpu_custom_call.1} parent=1 // pred_check
      _
    $region31: #{tpu_custom_call.1} parent=1 // pred_check_branch
      %6379 = sbr.rel (0) target = $region33
    $region32: #{tpu_custom_call.1} parent=1 // pred_region
      %s6381 = ssub.s32 512, 512
      %6382 = vsyncadd [#allocation5], %s6381
      %s6383 = sshll.u32 [#allocation9], 4
      %s6384 = int_to_ptr.vmem [resolvable:$true] %s6383
      %6389 = dma.vmem_to_hbm [thread:$0]  %s6384, 512, %s3, [#allocation5], 64, 64, 4
    $region33: #{tpu_custom_call.1} parent=1 // pred_fallthru
      _
    // Predicated region
    $region34: #{tpu_custom_call.1} parent=1 // pred_check
      _
    $region35: #{tpu_custom_call.1} parent=1 // pred_check_branch
      %6391 = sbr.rel (0) target = $region37
    $region36: #{tpu_custom_call.1} parent=1 // pred_region
      %6392 = dma.done [#allocation5], 512
    $region37: #{tpu_custom_call.1} parent=1 // pred_fallthru
      _
    %6393 = vsyncpa [#allocation4], 1
    %6394 = vsyncpa [#allocation7], 1
    %6395 = vsyncpa [#allocation5], 1

</llo_original>
